<compile_context>
chip_gen: v7x
topology: tpu7x:2x2x1
jax: 0.10.0
libtpu: 0.0.40
codegen_flags: <defaults>
</compile_context>

<pallas_src>
import functools

import jax
import jax.numpy as jnp
from jax.experimental import pallas as pl
from jax.experimental.pallas import tpu as pltpu


# ----------------------------------------------------------------------------
# helpers
# ----------------------------------------------------------------------------
def _pick_row_tile(M, max_tile=256):
    """Largest tile (multiple of 8, <=max_tile) dividing M; else full M."""
    for t in (max_tile, 128, 64, 32, 16, 8):
        if t <= M and M % t == 0:
            return t
    return M


def _const_spec(shape):
    """Full-array block that is identical for every grid step (stays resident)."""
    n = len(shape)
    return pl.BlockSpec(shape, lambda i, n=n: (0,) * n)


# ----------------------------------------------------------------------------
# dense kernel (patch embedding / final classifier)
# ----------------------------------------------------------------------------
def _dense_kernel(x_ref, w_ref, b_ref, o_ref, *, relu):
    y = jnp.dot(x_ref[...].astype(jnp.bfloat16),
                w_ref[...].astype(jnp.bfloat16),
                preferred_element_type=jnp.float32)
    y = y + b_ref[...]
    if relu:
        y = jnp.maximum(y, 0.0)
    o_ref[...] = y


def pallas_dense(x, w, b, relu=False):
    """y = x @ w + b (+ optional ReLU). x:(M,K) f32, w:(K,N) bf16, b:(1,N) f32."""
    M, K = x.shape
    K2, N = w.shape
    assert K == K2 and b.shape == (1, N)
    tm = _pick_row_tile(M)
    return pl.pallas_call(
        functools.partial(_dense_kernel, relu=relu),
        out_shape=jax.ShapeDtypeStruct((M, N), jnp.float32),
        grid=(M // tm,),
        in_specs=[pl.BlockSpec((tm, K), lambda i: (i, 0)),
                  _const_spec((K, N)),
                  _const_spec((1, N))],
        out_specs=pl.BlockSpec((tm, N), lambda i: (i, 0)),
        compiler_params=pltpu.CompilerParams(
            dimension_semantics=("parallel",)),
    )(x, w, b)


# ----------------------------------------------------------------------------
# fused transformer encoder layer kernel
#   block: (tn, L, D) where n = sequence position (attention "batch"),
#   L = batch (attention length, batch_first=False semantics).
# ----------------------------------------------------------------------------
def _encoder_layer_kernel(x_ref, wq_ref, bq_ref, wk_ref, bk_ref, wv_ref, bv_ref,
                          wo_ref, bo_ref, g1_ref, be1_ref,
                          w1_ref, fb1_ref, w2_ref, fb2_ref, g2_ref, be2_ref,
                          o_ref, *, heads, eps):
    tn, L, D = x_ref.shape
    Dh = D // heads
    scale = 1.0 / (Dh ** 0.5)

    x = x_ref[...]                              # (tn, L, D) f32
    x2 = x.reshape(tn * L, D)
    xb = x2.astype(jnp.bfloat16)

    # ---- multi-head self-attention; heads unrolled, out_proj folded per head ----
    attn = jnp.zeros((tn * L, D), jnp.float32)
    for h in range(heads):
        q = (jnp.dot(xb, wq_ref[h], preferred_element_type=jnp.float32)
             + bq_ref[h]).reshape(tn, L, Dh)
        k = (jnp.dot(xb, wk_ref[h], preferred_element_type=jnp.float32)
             + bk_ref[h]).reshape(tn, L, Dh)
        v = (jnp.dot(xb, wv_ref[h], preferred_element_type=jnp.float32)
             + bv_ref[h]).reshape(tn, L, Dh)

        s = jnp.einsum('nld,nmd->nlm',
                       q.astype(jnp.bfloat16), k.astype(jnp.bfloat16),
                       preferred_element_type=jnp.float32) * scale
        s = s - jnp.max(s, axis=-1, keepdims=True)
        p = jnp.exp(s)
        p = p * pl.reciprocal(jnp.sum(p, axis=-1, keepdims=True), approx=True)

        ctx = jnp.einsum('nlm,nmd->nld',
                         p.astype(jnp.bfloat16), v.astype(jnp.bfloat16),
                         preferred_element_type=jnp.float32)
        attn = attn + jnp.dot(ctx.reshape(tn * L, Dh).astype(jnp.bfloat16),
                              wo_ref[h], preferred_element_type=jnp.float32)
    attn = attn + bo_ref[...]

    # ---- residual + LayerNorm 1 (post-norm, f32 stats, eps=1e-5 biased var) ----
    y = x2 + attn
    mu = jnp.mean(y, axis=-1, keepdims=True)
    var = jnp.mean((y - mu) ** 2, axis=-1, keepdims=True)
    x1 = (y - mu) * jax.lax.rsqrt(var + eps) * g1_ref[...] + be1_ref[...]

    # ---- feed-forward (ReLU) ----
    h1 = jnp.dot(x1.astype(jnp.bfloat16), w1_ref[...],
                 preferred_element_type=jnp.float32) + fb1_ref[...]
    h1 = jnp.maximum(h1, 0.0)
    ff = jnp.dot(h1.astype(jnp.bfloat16), w2_ref[...],
                 preferred_element_type=jnp.float32) + fb2_ref[...]

    # ---- residual + LayerNorm 2 ----
    y2 = x1 + ff
    mu2 = jnp.mean(y2, axis=-1, keepdims=True)
    var2 = jnp.mean((y2 - mu2) ** 2, axis=-1, keepdims=True)
    out = (y2 - mu2) * jax.lax.rsqrt(var2 + eps) * g2_ref[...] + be2_ref[...]

    o_ref[...] = out.reshape(tn, L, D)


def pallas_encoder_layer(x, lp, *, heads, eps=1e-5):
    """One fused transformer encoder layer. x: (N, L, D) f32 -> (N, L, D) f32."""
    N, L, D = x.shape
    tn = _pick_row_tile(N)
    inputs = (x, lp['wq'], lp['bq'], lp['wk'], lp['bk'], lp['wv'], lp['bv'],
              lp['wo'], lp['bo'], lp['ln1_g'], lp['ln1_b'],
              lp['ff_w1'], lp['ff_b1'], lp['ff_w2'], lp['ff_b2'],
              lp['ln2_g'], lp['ln2_b'])
    in_specs = [pl.BlockSpec((tn, L, D), lambda i: (i, 0, 0))]
    in_specs += [_const_spec(a.shape) for a in inputs[1:]]
    return pl.pallas_call(
        functools.partial(_encoder_layer_kernel, heads=heads, eps=eps),
        out_shape=jax.ShapeDtypeStruct((N, L, D), jnp.float32),
        grid=(N // tn,),
        in_specs=in_specs,
        out_specs=pl.BlockSpec((tn, L, D), lambda i: (i, 0, 0)),
        compiler_params=pltpu.CompilerParams(
            dimension_semantics=("parallel",)),
    )(*inputs)


# ----------------------------------------------------------------------------
# parameters (deterministic, in-script); weights stored bf16, biases/LN in f32
# ----------------------------------------------------------------------------
def init_params(key, cfg):
    D, H, F = cfg['dim'], cfg['heads'], cfg['mlp_dim']
    PD, P, C = cfg['patch_dim'], cfg['num_patches'], cfg['num_classes']
    Dh = D // H

    def nrm(k, shape, scale=0.02, dtype=jnp.bfloat16):
        return (scale * jax.random.normal(k, shape, jnp.float32)).astype(dtype)

    keys = jax.random.split(key, 4 + cfg['depth'])
    params = {
        'patch_w': nrm(keys[0], (PD, D)),                    # Linear(patch_dim, dim)
        'patch_b': jnp.zeros((1, D), jnp.float32),
        'cls_token': nrm(keys[1], (1, 1, D), dtype=jnp.float32),
        'pos_emb': nrm(keys[2], (1, P + 1, D), dtype=jnp.float32),
        'fc_w': nrm(keys[3], (D, C)),                        # Linear(dim, classes)
        'fc_b': jnp.zeros((1, C), jnp.float32),
        'layers': [],
    }
    for l in range(cfg['depth']):
        lk = jax.random.split(keys[4 + l], 6)
        params['layers'].append({
            # per-head q/k/v weights: (H, D, Dh); out_proj per head: (H, Dh, D)
            'wq': nrm(lk[0], (H, D, Dh)),
            'bq': jnp.zeros((H, 1, Dh), jnp.float32),
            'wk': nrm(lk[1], (H, D, Dh)),
            'bk': jnp.zeros((H, 1, Dh), jnp.float32),
            'wv': nrm(lk[2], (H, D, Dh)),
            'bv': jnp.zeros((H, 1, Dh), jnp.float32),
            'wo': nrm(lk[3], (H, Dh, D)),
            'bo': jnp.zeros((1, D), jnp.float32),
            'ln1_g': jnp.ones((1, D), jnp.float32),
            'ln1_b': jnp.zeros((1, D), jnp.float32),
            'ff_w1': nrm(lk[4], (D, F)),
            'ff_b1': jnp.zeros((1, F), jnp.float32),
            'ff_w2': nrm(lk[5], (F, D)),
            'ff_b2': jnp.zeros((1, D), jnp.float32),
            'ln2_g': jnp.ones((1, D), jnp.float32),
            'ln2_b': jnp.zeros((1, D), jnp.float32),
        })
    return params


# ----------------------------------------------------------------------------
# forward pass
# ----------------------------------------------------------------------------
def vit_forward(x, params, cfg):
    B = x.shape[0]
    P, D, H = cfg['num_patches'], cfg['dim'], cfg['heads']

    # x.view(B, num_patches, -1) -- raw row-major reshape, like torch .view
    x = x.reshape(B, P, -1)
    emb = pallas_dense(x.reshape(B * P, -1), params['patch_w'], params['patch_b'])
    emb = emb.reshape(B, P, D)

    cls = jnp.broadcast_to(params['cls_token'], (B, 1, D))
    h = jnp.concatenate([cls, emb], axis=1) + params['pos_emb']   # (B, S, D)

    # batch_first=False: the encoder reads (B, S, D) as (L=B, N=S, E).
    # Single cheap transpose to (N=S, L=B, D); no per-layer transposes after this.
    h = jnp.transpose(h, (1, 0, 2))                               # (S, B, D)

    for lp in params['layers']:
        h = pallas_encoder_layer(h, lp, heads=H)

    cls_final = h[0]                                              # (B, D)
    return pallas_dense(cls_final, params['fc_w'], params['fc_b'])


# ----------------------------------------------------------------------------
if __name__ == "__main__":
    # Small but structurally-consistent config:
    cfg = dict(img_size=16, patch_size=8, channels=4, num_classes=10,
               dim=32, depth=2, heads=4, mlp_dim=64)
    cfg['num_patches'] = (cfg['img_size'] // cfg['patch_size']) ** 2   # 4
    cfg['patch_dim'] = cfg['channels'] * cfg['patch_size'] ** 2        # 256

    key = jax.random.PRNGKey(0)
    kp, kx = jax.random.split(key)
    params = init_params(kp, cfg)

    # NCHW input, like the PyTorch module.
    x = jax.random.normal(
        kx, (2, cfg['channels'], cfg['img_size'], cfg['img_size']), jnp.float32)

    fwd = jax.jit(functools.partial(vit_forward, cfg=cfg))
    out = jax.block_until_ready(fwd(x, params))
    assert out.shape == (2, cfg['num_classes'])
    assert bool(jnp.all(jnp.isfinite(out)))
    print("KERNEL_OK")
</pallas_src>

<mosaic_0001>
module attributes {stable_mosaic.version = 11 : i64} {
  func.func @_dense_kernel(%arg0: i32, %arg1: memref<8x256xf32, #tpu.memory_space<vmem>>, %arg2: memref<256x32xbf16, #tpu.memory_space<vmem>>, %arg3: memref<1x32xf32, #tpu.memory_space<vmem>>, %arg4: memref<8x32xf32, #tpu.memory_space<vmem>>) attributes {dimension_semantics = [#tpu.dimension_semantics<parallel>], iteration_bounds = array<i64: 1>, scalar_prefetch = 0 : i64, scratch_operands = 0 : i64, tpu.core_type = #tpu.core_type<tc>, window_params = [{transform_indices = @transform_0, window_bounds = array<i64: 8, 256>}, {pipeline_mode = #tpu.pipeline_mode<synchronous>, transform_indices = @transform_1, window_bounds = array<i64: 256, 32>}, {pipeline_mode = #tpu.pipeline_mode<synchronous>, transform_indices = @transform_2, window_bounds = array<i64: 1, 32>}, {transform_indices = @transform_3, window_bounds = array<i64: 8, 32>}]} {
    %c0 = arith.constant 0 : index
    %c0_0 = arith.constant 0 : index
    %0 = vector.load %arg1[%c0, %c0_0] : memref<8x256xf32, #tpu.memory_space<vmem>>, vector<8x256xf32>
    %1 = arith.truncf %0 : vector<8x256xf32> to vector<8x256xbf16>
    %c0_1 = arith.constant 0 : index
    %c0_2 = arith.constant 0 : index
    %2 = vector.load %arg2[%c0_1, %c0_2] : memref<256x32xbf16, #tpu.memory_space<vmem>>, vector<256x32xbf16>
    %cst = arith.constant dense<0.000000e+00> : vector<8x32xf32>
    %3 = tpu.matmul %1, %2, %cst {dimension_numbers = #tpu.dot_dimension_numbers<[1], [0], [0], [1], [0, 0, 1, 1], [], []>} : vector<8x256xbf16>, vector<256x32xbf16>, vector<8x32xf32> -> vector<8x32xf32>
    %c0_3 = arith.constant 0 : index
    %c0_4 = arith.constant 0 : index
    %4 = vector.load %arg3[%c0_3, %c0_4] : memref<1x32xf32, #tpu.memory_space<vmem>>, vector<1x32xf32>
    %5 = vector.broadcast %4 : vector<1x32xf32> to vector<8x32xf32>
    %6 = arith.addf %3, %5 : vector<8x32xf32>
    %c0_5 = arith.constant 0 : index
    %c0_6 = arith.constant 0 : index
    %7 = vector.load %arg4[%c0_5, %c0_6] : memref<8x32xf32, #tpu.memory_space<vmem>>, vector<8x32xf32>
    tpu.vector_store %arg4[%c0_5, %c0_6], %6 {strides = array<i32>} : memref<8x32xf32, #tpu.memory_space<vmem>>, vector<8x32xf32>,
    return
  }
  func.func @transform_0(%arg0: i32) -> (i32, i32) {
    %c0_i32 = arith.constant 0 : i32
    %c0_i32_0 = arith.constant 0 : i32
    return %arg0, %c0_i32 : i32, i32
  }
  func.func @transform_1(%arg0: i32) -> (i32, i32) {
    %c0_i32 = arith.constant 0 : i32
    %c0_i32_0 = arith.constant 0 : i32
    %c0_i32_1 = arith.constant 0 : i32
    return %c0_i32, %c0_i32_0 : i32, i32
  }
  func.func @transform_2(%arg0: i32) -> (i32, i32) {
    %c0_i32 = arith.constant 0 : i32
    %c0_i32_0 = arith.constant 0 : i32
    %c0_i32_1 = arith.constant 0 : i32
    return %c0_i32, %c0_i32_0 : i32, i32
  }
  func.func @transform_3(%arg0: i32) -> (i32, i32) {
    %c0_i32 = arith.constant 0 : i32
    %c0_i32_0 = arith.constant 0 : i32
    return %arg0, %c0_i32 : i32, i32
  }
}

module attributes {stable_mosaic.version = 11 : i64} {
  func.func @_dense_kernel(%arg0: i32, %arg1: memref<2x32xf32, #tpu.memory_space<vmem>>, %arg2: memref<32x10xbf16, #tpu.memory_space<vmem>>, %arg3: memref<1x10xf32, #tpu.memory_space<vmem>>, %arg4: memref<2x10xf32, #tpu.memory_space<vmem>>) attributes {dimension_semantics = [#tpu.dimension_semantics<parallel>], iteration_bounds = array<i64: 1>, scalar_prefetch = 0 : i64, scratch_operands = 0 : i64, tpu.core_type = #tpu.core_type<tc>, window_params = [{transform_indices = @transform_0, window_bounds = array<i64: 2, 32>}, {pipeline_mode = #tpu.pipeline_mode<synchronous>, transform_indices = @transform_1, window_bounds = array<i64: 32, 10>}, {pipeline_mode = #tpu.pipeline_mode<synchronous>, transform_indices = @transform_2, window_bounds = array<i64: 1, 10>}, {transform_indices = @transform_3, window_bounds = array<i64: 2, 10>}]} {
    %c0 = arith.constant 0 : index
    %c0_0 = arith.constant 0 : index
    %0 = vector.load %arg1[%c0, %c0_0] : memref<2x32xf32, #tpu.memory_space<vmem>>, vector<2x32xf32>
    %1 = arith.truncf %0 : vector<2x32xf32> to vector<2x32xbf16>
    %c0_1 = arith.constant 0 : index
    %c0_2 = arith.constant 0 : index
    %2 = vector.load %arg2[%c0_1, %c0_2] : memref<32x10xbf16, #tpu.memory_space<vmem>>, vector<32x10xbf16>
    %cst = arith.constant dense<0.000000e+00> : vector<2x10xf32>
    %3 = tpu.matmul %1, %2, %cst {dimension_numbers = #tpu.dot_dimension_numbers<[1], [0], [0], [1], [0, 0, 1, 1], [], []>} : vector<2x32xbf16>, vector<32x10xbf16>, vector<2x10xf32> -> vector<2x10xf32>
    %c0_3 = arith.constant 0 : index
    %c0_4 = arith.constant 0 : index
    %4 = vector.load %arg3[%c0_3, %c0_4] : memref<1x10xf32, #tpu.memory_space<vmem>>, vector<1x10xf32>
    %5 = vector.broadcast %4 : vector<1x10xf32> to vector<2x10xf32>
    %6 = arith.addf %3, %5 : vector<2x10xf32>
    %c0_5 = arith.constant 0 : index
    %c0_6 = arith.constant 0 : index
    %7 = vector.load %arg4[%c0_5, %c0_6] : memref<2x10xf32, #tpu.memory_space<vmem>>, vector<2x10xf32>
    tpu.vector_store %arg4[%c0_5, %c0_6], %6 {strides = array<i32>} : memref<2x10xf32, #tpu.memory_space<vmem>>, vector<2x10xf32>,
    return
  }
  func.func @transform_0(%arg0: i32) -> (i32, i32) {
    %c0_i32 = arith.constant 0 : i32
    %c0_i32_0 = arith.constant 0 : i32
    return %arg0, %c0_i32 : i32, i32
  }
  func.func @transform_1(%arg0: i32) -> (i32, i32) {
    %c0_i32 = arith.constant 0 : i32
    %c0_i32_0 = arith.constant 0 : i32
    %c0_i32_1 = arith.constant 0 : i32
    return %c0_i32, %c0_i32_0 : i32, i32
  }
  func.func @transform_2(%arg0: i32) -> (i32, i32) {
    %c0_i32 = arith.constant 0 : i32
    %c0_i32_0 = arith.constant 0 : i32
    %c0_i32_1 = arith.constant 0 : i32
    return %c0_i32, %c0_i32_0 : i32, i32
  }
  func.func @transform_3(%arg0: i32) -> (i32, i32) {
    %c0_i32 = arith.constant 0 : i32
    %c0_i32_0 = arith.constant 0 : i32
    return %arg0, %c0_i32 : i32, i32
  }
}

module attributes {stable_mosaic.version = 11 : i64} {
  func.func @_encoder_layer_kernel(%arg0: i32, %arg1: memref<5x2x32xf32, #tpu.memory_space<vmem>>, %arg2: memref<4x32x8xbf16, #tpu.memory_space<vmem>>, %arg3: memref<4x1x8xf32, #tpu.memory_space<vmem>>, %arg4: memref<4x32x8xbf16, #tpu.memory_space<vmem>>, %arg5: memref<4x1x8xf32, #tpu.memory_space<vmem>>, %arg6: memref<4x32x8xbf16, #tpu.memory_space<vmem>>, %arg7: memref<4x1x8xf32, #tpu.memory_space<vmem>>, %arg8: memref<4x8x32xbf16, #tpu.memory_space<vmem>>, %arg9: memref<1x32xf32, #tpu.memory_space<vmem>>, %arg10: memref<1x32xf32, #tpu.memory_space<vmem>>, %arg11: memref<1x32xf32, #tpu.memory_space<vmem>>, %arg12: memref<32x64xbf16, #tpu.memory_space<vmem>>, %arg13: memref<1x64xf32, #tpu.memory_space<vmem>>, %arg14: memref<64x32xbf16, #tpu.memory_space<vmem>>, %arg15: memref<1x32xf32, #tpu.memory_space<vmem>>, %arg16: memref<1x32xf32, #tpu.memory_space<vmem>>, %arg17: memref<1x32xf32, #tpu.memory_space<vmem>>, %arg18: memref<5x2x32xf32, #tpu.memory_space<vmem>>) attributes {dimension_semantics = [#tpu.dimension_semantics<parallel>], iteration_bounds = array<i64: 1>, scalar_prefetch = 0 : i64, scratch_operands = 0 : i64, tpu.core_type = #tpu.core_type<tc>, window_params = [{transform_indices = @transform_0, window_bounds = array<i64: 5, 2, 32>}, {pipeline_mode = #tpu.pipeline_mode<synchronous>, transform_indices = @transform_1, window_bounds = array<i64: 4, 32, 8>}, {pipeline_mode = #tpu.pipeline_mode<synchronous>, transform_indices = @transform_2, window_bounds = array<i64: 4, 1, 8>}, {pipeline_mode = #tpu.pipeline_mode<synchronous>, transform_indices = @transform_3, window_bounds = array<i64: 4, 32, 8>}, {pipeline_mode = #tpu.pipeline_mode<synchronous>, transform_indices = @transform_4, window_bounds = array<i64: 4, 1, 8>}, {pipeline_mode = #tpu.pipeline_mode<synchronous>, transform_indices = @transform_5, window_bounds = array<i64: 4, 32, 8>}, {pipeline_mode = #tpu.pipeline_mode<synchronous>, transform_indices = @transform_6, window_bounds = array<i64: 4, 1, 8>}, {pipeline_mode = #tpu.pipeline_mode<synchronous>, transform_indices = @transform_7, window_bounds = array<i64: 4, 8, 32>}, {pipeline_mode = #tpu.pipeline_mode<synchronous>, transform_indices = @transform_8, window_bounds = array<i64: 1, 32>}, {pipeline_mode = #tpu.pipeline_mode<synchronous>, transform_indices = @transform_9, window_bounds = array<i64: 1, 32>}, {pipeline_mode = #tpu.pipeline_mode<synchronous>, transform_indices = @transform_10, window_bounds = array<i64: 1, 32>}, {pipeline_mode = #tpu.pipeline_mode<synchronous>, transform_indices = @transform_11, window_bounds = array<i64: 32, 64>}, {pipeline_mode = #tpu.pipeline_mode<synchronous>, transform_indices = @transform_12, window_bounds = array<i64: 1, 64>}, {pipeline_mode = #tpu.pipeline_mode<synchronous>, transform_indices = @transform_13, window_bounds = array<i64: 64, 32>}, {pipeline_mode = #tpu.pipeline_mode<synchronous>, transform_indices = @transform_14, window_bounds = array<i64: 1, 32>}, {pipeline_mode = #tpu.pipeline_mode<synchronous>, transform_indices = @transform_15, window_bounds = array<i64: 1, 32>}, {pipeline_mode = #tpu.pipeline_mode<synchronous>, transform_indices = @transform_16, window_bounds = array<i64: 1, 32>}, {transform_indices = @transform_17, window_bounds = array<i64: 5, 2, 32>}]} {
    %c0 = arith.constant 0 : index
    %c0_0 = arith.constant 0 : index
    %c0_1 = arith.constant 0 : index
    %0 = vector.load %arg1[%c0, %c0_0, %c0_1] : memref<5x2x32xf32, #tpu.memory_space<vmem>>, vector<5x2x32xf32>
    %1 = vector.shape_cast %0 : vector<5x2x32xf32> to vector<10x32xf32>
    %2 = arith.truncf %1 : vector<10x32xf32> to vector<10x32xbf16>
    %cst = arith.constant 0.000000e+00 : f32
    %3 = vector.broadcast %cst : f32 to vector<10x32xf32>
    %c0_2 = arith.constant 0 : index
    %c0_3 = arith.constant 0 : index
    %c0_4 = arith.constant 0 : index
    %4 = vector.load %arg2[%c0_2, %c0_3, %c0_4] : memref<4x32x8xbf16, #tpu.memory_space<vmem>>, vector<1x32x8xbf16>
    %5 = vector.shape_cast %4 : vector<1x32x8xbf16> to vector<32x8xbf16>
    %cst_5 = arith.constant dense<0.000000e+00> : vector<10x8xf32>
    %6 = tpu.matmul %2, %5, %cst_5 {dimension_numbers = #tpu.dot_dimension_numbers<[1], [0], [0], [1], [0, 0, 1, 1], [], []>} : vector<10x32xbf16>, vector<32x8xbf16>, vector<10x8xf32> -> vector<10x8xf32>
    %c0_6 = arith.constant 0 : index
    %c0_7 = arith.constant 0 : index
    %c0_8 = arith.constant 0 : index
    %7 = vector.load %arg3[%c0_6, %c0_7, %c0_8] : memref<4x1x8xf32, #tpu.memory_space<vmem>>, vector<1x1x8xf32>
    %8 = vector.shape_cast %7 : vector<1x1x8xf32> to vector<1x8xf32>
    %9 = vector.broadcast %8 : vector<1x8xf32> to vector<10x8xf32>
    %10 = arith.addf %6, %9 : vector<10x8xf32>
    %11 = vector.shape_cast %10 : vector<10x8xf32> to vector<5x2x8xf32>
    %c0_9 = arith.constant 0 : index
    %c0_10 = arith.constant 0 : index
    %c0_11 = arith.constant 0 : index
    %12 = vector.load %arg4[%c0_9, %c0_10, %c0_11] : memref<4x32x8xbf16, #tpu.memory_space<vmem>>, vector<1x32x8xbf16>
    %13 = vector.shape_cast %12 : vector<1x32x8xbf16> to vector<32x8xbf16>
    %cst_12 = arith.constant dense<0.000000e+00> : vector<10x8xf32>
    %14 = tpu.matmul %2, %13, %cst_12 {dimension_numbers = #tpu.dot_dimension_numbers<[1], [0], [0], [1], [0, 0, 1, 1], [], []>} : vector<10x32xbf16>, vector<32x8xbf16>, vector<10x8xf32> -> vector<10x8xf32>
    %c0_13 = arith.constant 0 : index
    %c0_14 = arith.constant 0 : index
    %c0_15 = arith.constant 0 : index
    %15 = vector.load %arg5[%c0_13, %c0_14, %c0_15] : memref<4x1x8xf32, #tpu.memory_space<vmem>>, vector<1x1x8xf32>
    %16 = vector.shape_cast %15 : vector<1x1x8xf32> to vector<1x8xf32>
    %17 = vector.broadcast %16 : vector<1x8xf32> to vector<10x8xf32>
    %18 = arith.addf %14, %17 : vector<10x8xf32>
    %19 = vector.shape_cast %18 : vector<10x8xf32> to vector<5x2x8xf32>
    %c0_16 = arith.constant 0 : index
    %c0_17 = arith.constant 0 : index
    %c0_18 = arith.constant 0 : index
    %20 = vector.load %arg6[%c0_16, %c0_17, %c0_18] : memref<4x32x8xbf16, #tpu.memory_space<vmem>>, vector<1x32x8xbf16>
    %21 = vector.shape_cast %20 : vector<1x32x8xbf16> to vector<32x8xbf16>
    %cst_19 = arith.constant dense<0.000000e+00> : vector<10x8xf32>
    %22 = tpu.matmul %2, %21, %cst_19 {dimension_numbers = #tpu.dot_dimension_numbers<[1], [0], [0], [1], [0, 0, 1, 1], [], []>} : vector<10x32xbf16>, vector<32x8xbf16>, vector<10x8xf32> -> vector<10x8xf32>
    %c0_20 = arith.constant 0 : index
    %c0_21 = arith.constant 0 : index
    %c0_22 = arith.constant 0 : index
    %23 = vector.load %arg7[%c0_20, %c0_21, %c0_22] : memref<4x1x8xf32, #tpu.memory_space<vmem>>, vector<1x1x8xf32>
    %24 = vector.shape_cast %23 : vector<1x1x8xf32> to vector<1x8xf32>
    %25 = vector.broadcast %24 : vector<1x8xf32> to vector<10x8xf32>
    %26 = arith.addf %22, %25 : vector<10x8xf32>
    %27 = vector.shape_cast %26 : vector<10x8xf32> to vector<5x2x8xf32>
    %28 = arith.truncf %11 : vector<5x2x8xf32> to vector<5x2x8xbf16>
    %29 = arith.truncf %19 : vector<5x2x8xf32> to vector<5x2x8xbf16>
    "tpu.trace_start"() <{level = 10 : i32, message = "nld,nmd->nlm"}> : () -> ()
    %cst_23 = arith.constant dense<0.000000e+00> : vector<5x2x2xf32>
    %30 = tpu.matmul %28, %29, %cst_23 {dimension_numbers = #tpu.dot_dimension_numbers<[2], [2], [1], [1], [0, 0, 0, 1, 1, 1], [0], [0]>} : vector<5x2x8xbf16>, vector<5x2x8xbf16>, vector<5x2x2xf32> -> vector<5x2x2xf32>
    "tpu.trace_stop"() : () -> ()
    %cst_24 = arith.constant 0.353553385 : f32
    %31 = vector.broadcast %cst_24 : f32 to vector<5x2x2xf32>
    %32 = arith.mulf %30, %31 : vector<5x2x2xf32>
    %cst_25 = arith.constant dense<0xFF800000> : vector<5x2xf32>
    %33 = vector.multi_reduction <maximumf>, %32, %cst_25 [2] : vector<5x2x2xf32> to vector<5x2xf32>
    %34 = vector.shape_cast %33 : vector<5x2xf32> to vector<5x2x1xf32>
    %35 = vector.broadcast %34 : vector<5x2x1xf32> to vector<5x2x2xf32>
    %36 = arith.subf %32, %35 : vector<5x2x2xf32>
    %37 = math.exp %36 : vector<5x2x2xf32>
    %cst_26 = arith.constant dense<0.000000e+00> : vector<5x2xf32>
    %38 = vector.multi_reduction <add>, %37, %cst_26 [2] : vector<5x2x2xf32> to vector<5x2xf32>
    %39 = vector.shape_cast %38 : vector<5x2xf32> to vector<5x2x1xf32>
    %40 = tpu.reciprocal %39 {approx = true} : vector<5x2x1xf32> -> vector<5x2x1xf32>
    %41 = vector.broadcast %40 : vector<5x2x1xf32> to vector<5x2x2xf32>
    %42 = arith.mulf %37, %41 : vector<5x2x2xf32>
    %43 = arith.truncf %42 : vector<5x2x2xf32> to vector<5x2x2xbf16>
    %44 = arith.truncf %27 : vector<5x2x8xf32> to vector<5x2x8xbf16>
    "tpu.trace_start"() <{level = 10 : i32, message = "nlm,nmd->nld"}> : () -> ()
    %cst_27 = arith.constant dense<0.000000e+00> : vector<5x2x8xf32>
    %45 = tpu.matmul %43, %44, %cst_27 {dimension_numbers = #tpu.dot_dimension_numbers<[2], [1], [1], [2], [0, 0, 0, 1, 1, 2], [0], [0]>} : vector<5x2x2xbf16>, vector<5x2x8xbf16>, vector<5x2x8xf32> -> vector<5x2x8xf32>
    "tpu.trace_stop"() : () -> ()
    %46 = vector.shape_cast %45 : vector<5x2x8xf32> to vector<10x8xf32>
    %47 = arith.truncf %46 : vector<10x8xf32> to vector<10x8xbf16>
    %c0_28 = arith.constant 0 : index
    %c0_29 = arith.constant 0 : index
    %c0_30 = arith.constant 0 : index
    %48 = vector.load %arg8[%c0_28, %c0_29, %c0_30] : memref<4x8x32xbf16, #tpu.memory_space<vmem>>, vector<1x8x32xbf16>
    %49 = vector.shape_cast %48 : vector<1x8x32xbf16> to vector<8x32xbf16>
    %cst_31 = arith.constant dense<0.000000e+00> : vector<10x32xf32>
    %50 = tpu.matmul %47, %49, %cst_31 {dimension_numbers = #tpu.dot_dimension_numbers<[1], [0], [0], [1], [0, 0, 1, 1], [], []>} : vector<10x8xbf16>, vector<8x32xbf16>, vector<10x32xf32> -> vector<10x32xf32>
    %51 = arith.addf %3, %50 : vector<10x32xf32>
    %c1 = arith.constant 1 : index
    %c0_32 = arith.constant 0 : index
    %c0_33 = arith.constant 0 : index
    %52 = vector.load %arg2[%c1, %c0_32, %c0_33] : memref<4x32x8xbf16, #tpu.memory_space<vmem>>, vector<1x32x8xbf16>
    %53 = vector.shape_cast %52 : vector<1x32x8xbf16> to vector<32x8xbf16>
    %cst_34 = arith.constant dense<0.000000e+00> : vector<10x8xf32>
    %54 = tpu.matmul %2, %53, %cst_34 {dimension_numbers = #tpu.dot_dimension_numbers<[1], [0], [0], [1], [0, 0, 1, 1], [], []>} : vector<10x32xbf16>, vector<32x8xbf16>, vector<10x8xf32> -> vector<10x8xf32>
    %c1_35 = arith.constant 1 : index
    %c0_36 = arith.constant 0 : index
    %c0_37 = arith.constant 0 : index
    %55 = vector.load %arg3[%c1_35, %c0_36, %c0_37] : memref<4x1x8xf32, #tpu.memory_space<vmem>>, vector<1x1x8xf32>
    %56 = vector.shape_cast %55 : vector<1x1x8xf32> to vector<1x8xf32>
    %57 = vector.broadcast %56 : vector<1x8xf32> to vector<10x8xf32>
    %58 = arith.addf %54, %57 : vector<10x8xf32>
    %59 = vector.shape_cast %58 : vector<10x8xf32> to vector<5x2x8xf32>
    %c1_38 = arith.constant 1 : index
    %c0_39 = arith.constant 0 : index
    %c0_40 = arith.constant 0 : index
    %60 = vector.load %arg4[%c1_38, %c0_39, %c0_40] : memref<4x32x8xbf16, #tpu.memory_space<vmem>>, vector<1x32x8xbf16>
    %61 = vector.shape_cast %60 : vector<1x32x8xbf16> to vector<32x8xbf16>
    %cst_41 = arith.constant dense<0.000000e+00> : vector<10x8xf32>
    %62 = tpu.matmul %2, %61, %cst_41 {dimension_numbers = #tpu.dot_dimension_numbers<[1], [0], [0], [1], [0, 0, 1, 1], [], []>} : vector<10x32xbf16>, vector<32x8xbf16>, vector<10x8xf32> -> vector<10x8xf32>
    %c1_42 = arith.constant 1 : index
    %c0_43 = arith.constant 0 : index
    %c0_44 = arith.constant 0 : index
    %63 = vector.load %arg5[%c1_42, %c0_43, %c0_44] : memref<4x1x8xf32, #tpu.memory_space<vmem>>, vector<1x1x8xf32>
    %64 = vector.shape_cast %63 : vector<1x1x8xf32> to vector<1x8xf32>
    %65 = vector.broadcast %64 : vector<1x8xf32> to vector<10x8xf32>
    %66 = arith.addf %62, %65 : vector<10x8xf32>
    %67 = vector.shape_cast %66 : vector<10x8xf32> to vector<5x2x8xf32>
    %c1_45 = arith.constant 1 : index
    %c0_46 = arith.constant 0 : index
    %c0_47 = arith.constant 0 : index
    %68 = vector.load %arg6[%c1_45, %c0_46, %c0_47] : memref<4x32x8xbf16, #tpu.memory_space<vmem>>, vector<1x32x8xbf16>
    %69 = vector.shape_cast %68 : vector<1x32x8xbf16> to vector<32x8xbf16>
    %cst_48 = arith.constant dense<0.000000e+00> : vector<10x8xf32>
    %70 = tpu.matmul %2, %69, %cst_48 {dimension_numbers = #tpu.dot_dimension_numbers<[1], [0], [0], [1], [0, 0, 1, 1], [], []>} : vector<10x32xbf16>, vector<32x8xbf16>, vector<10x8xf32> -> vector<10x8xf32>
    %c1_49 = arith.constant 1 : index
    %c0_50 = arith.constant 0 : index
    %c0_51 = arith.constant 0 : index
    %71 = vector.load %arg7[%c1_49, %c0_50, %c0_51] : memref<4x1x8xf32, #tpu.memory_space<vmem>>, vector<1x1x8xf32>
    %72 = vector.shape_cast %71 : vector<1x1x8xf32> to vector<1x8xf32>
    %73 = vector.broadcast %72 : vector<1x8xf32> to vector<10x8xf32>
    %74 = arith.addf %70, %73 : vector<10x8xf32>
    %75 = vector.shape_cast %74 : vector<10x8xf32> to vector<5x2x8xf32>
    %76 = arith.truncf %59 : vector<5x2x8xf32> to vector<5x2x8xbf16>
    %77 = arith.truncf %67 : vector<5x2x8xf32> to vector<5x2x8xbf16>
    "tpu.trace_start"() <{level = 10 : i32, message = "nld,nmd->nlm"}> : () -> ()
    %cst_52 = arith.constant dense<0.000000e+00> : vector<5x2x2xf32>
    %78 = tpu.matmul %76, %77, %cst_52 {dimension_numbers = #tpu.dot_dimension_numbers<[2], [2], [1], [1], [0, 0, 0, 1, 1, 1], [0], [0]>} : vector<5x2x8xbf16>, vector<5x2x8xbf16>, vector<5x2x2xf32> -> vector<5x2x2xf32>
    "tpu.trace_stop"() : () -> ()
    %cst_53 = arith.constant 0.353553385 : f32
    %79 = vector.broadcast %cst_53 : f32 to vector<5x2x2xf32>
    %80 = arith.mulf %78, %79 : vector<5x2x2xf32>
    %cst_54 = arith.constant dense<0xFF800000> : vector<5x2xf32>
    %81 = vector.multi_reduction <maximumf>, %80, %cst_54 [2] : vector<5x2x2xf32> to vector<5x2xf32>
    %82 = vector.shape_cast %81 : vector<5x2xf32> to vector<5x2x1xf32>
    %83 = vector.broadcast %82 : vector<5x2x1xf32> to vector<5x2x2xf32>
    %84 = arith.subf %80, %83 : vector<5x2x2xf32>
    %85 = math.exp %84 : vector<5x2x2xf32>
    %cst_55 = arith.constant dense<0.000000e+00> : vector<5x2xf32>
    %86 = vector.multi_reduction <add>, %85, %cst_55 [2] : vector<5x2x2xf32> to vector<5x2xf32>
    %87 = vector.shape_cast %86 : vector<5x2xf32> to vector<5x2x1xf32>
    %88 = tpu.reciprocal %87 {approx = true} : vector<5x2x1xf32> -> vector<5x2x1xf32>
    %89 = vector.broadcast %88 : vector<5x2x1xf32> to vector<5x2x2xf32>
    %90 = arith.mulf %85, %89 : vector<5x2x2xf32>
    %91 = arith.truncf %90 : vector<5x2x2xf32> to vector<5x2x2xbf16>
    %92 = arith.truncf %75 : vector<5x2x8xf32> to vector<5x2x8xbf16>
    "tpu.trace_start"() <{level = 10 : i32, message = "nlm,nmd->nld"}> : () -> ()
    %cst_56 = arith.constant dense<0.000000e+00> : vector<5x2x8xf32>
    %93 = tpu.matmul %91, %92, %cst_56 {dimension_numbers = #tpu.dot_dimension_numbers<[2], [1], [1], [2], [0, 0, 0, 1, 1, 2], [0], [0]>} : vector<5x2x2xbf16>, vector<5x2x8xbf16>, vector<5x2x8xf32> -> vector<5x2x8xf32>
    "tpu.trace_stop"() : () -> ()
    %94 = vector.shape_cast %93 : vector<5x2x8xf32> to vector<10x8xf32>
    %95 = arith.truncf %94 : vector<10x8xf32> to vector<10x8xbf16>
    %c1_57 = arith.constant 1 : index
    %c0_58 = arith.constant 0 : index
    %c0_59 = arith.constant 0 : index
    %96 = vector.load %arg8[%c1_57, %c0_58, %c0_59] : memref<4x8x32xbf16, #tpu.memory_space<vmem>>, vector<1x8x32xbf16>
    %97 = vector.shape_cast %96 : vector<1x8x32xbf16> to vector<8x32xbf16>
    %cst_60 = arith.constant dense<0.000000e+00> : vector<10x32xf32>
    %98 = tpu.matmul %95, %97, %cst_60 {dimension_numbers = #tpu.dot_dimension_numbers<[1], [0], [0], [1], [0, 0, 1, 1], [], []>} : vector<10x8xbf16>, vector<8x32xbf16>, vector<10x32xf32> -> vector<10x32xf32>
    %99 = arith.addf %51, %98 : vector<10x32xf32>
    %c2 = arith.constant 2 : index
    %c0_61 = arith.constant 0 : index
    %c0_62 = arith.constant 0 : index
    %100 = vector.load %arg2[%c2, %c0_61, %c0_62] : memref<4x32x8xbf16, #tpu.memory_space<vmem>>, vector<1x32x8xbf16>
    %101 = vector.shape_cast %100 : vector<1x32x8xbf16> to vector<32x8xbf16>
    %cst_63 = arith.constant dense<0.000000e+00> : vector<10x8xf32>
    %102 = tpu.matmul %2, %101, %cst_63 {dimension_numbers = #tpu.dot_dimension_numbers<[1], [0], [0], [1], [0, 0, 1, 1], [], []>} : vector<10x32xbf16>, vector<32x8xbf16>, vector<10x8xf32> -> vector<10x8xf32>
    %c2_64 = arith.constant 2 : index
    %c0_65 = arith.constant 0 : index
    %c0_66 = arith.constant 0 : index
    %103 = vector.load %arg3[%c2_64, %c0_65, %c0_66] : memref<4x1x8xf32, #tpu.memory_space<vmem>>, vector<1x1x8xf32>
    %104 = vector.shape_cast %103 : vector<1x1x8xf32> to vector<1x8xf32>
    %105 = vector.broadcast %104 : vector<1x8xf32> to vector<10x8xf32>
    %106 = arith.addf %102, %105 : vector<10x8xf32>
    %107 = vector.shape_cast %106 : vector<10x8xf32> to vector<5x2x8xf32>
    %c2_67 = arith.constant 2 : index
    %c0_68 = arith.constant 0 : index
    %c0_69 = arith.constant 0 : index
    %108 = vector.load %arg4[%c2_67, %c0_68, %c0_69] : memref<4x32x8xbf16, #tpu.memory_space<vmem>>, vector<1x32x8xbf16>
    %109 = vector.shape_cast %108 : vector<1x32x8xbf16> to vector<32x8xbf16>
    %cst_70 = arith.constant dense<0.000000e+00> : vector<10x8xf32>
    %110 = tpu.matmul %2, %109, %cst_70 {dimension_numbers = #tpu.dot_dimension_numbers<[1], [0], [0], [1], [0, 0, 1, 1], [], []>} : vector<10x32xbf16>, vector<32x8xbf16>, vector<10x8xf32> -> vector<10x8xf32>
    %c2_71 = arith.constant 2 : index
    %c0_72 = arith.constant 0 : index
    %c0_73 = arith.constant 0 : index
    %111 = vector.load %arg5[%c2_71, %c0_72, %c0_73] : memref<4x1x8xf32, #tpu.memory_space<vmem>>, vector<1x1x8xf32>
    %112 = vector.shape_cast %111 : vector<1x1x8xf32> to vector<1x8xf32>
    %113 = vector.broadcast %112 : vector<1x8xf32> to vector<10x8xf32>
    %114 = arith.addf %110, %113 : vector<10x8xf32>
    %115 = vector.shape_cast %114 : vector<10x8xf32> to vector<5x2x8xf32>
    %c2_74 = arith.constant 2 : index
    %c0_75 = arith.constant 0 : index
    %c0_76 = arith.constant 0 : index
    %116 = vector.load %arg6[%c2_74, %c0_75, %c0_76] : memref<4x32x8xbf16, #tpu.memory_space<vmem>>, vector<1x32x8xbf16>
    %117 = vector.shape_cast %116 : vector<1x32x8xbf16> to vector<32x8xbf16>
    %cst_77 = arith.constant dense<0.000000e+00> : vector<10x8xf32>
    %118 = tpu.matmul %2, %117, %cst_77 {dimension_numbers = #tpu.dot_dimension_numbers<[1], [0], [0], [1], [0, 0, 1, 1], [], []>} : vector<10x32xbf16>, vector<32x8xbf16>, vector<10x8xf32> -> vector<10x8xf32>
    %c2_78 = arith.constant 2 : index
    %c0_79 = arith.constant 0 : index
    %c0_80 = arith.constant 0 : index
    %119 = vector.load %arg7[%c2_78, %c0_79, %c0_80] : memref<4x1x8xf32, #tpu.memory_space<vmem>>, vector<1x1x8xf32>
    %120 = vector.shape_cast %119 : vector<1x1x8xf32> to vector<1x8xf32>
    %121 = vector.broadcast %120 : vector<1x8xf32> to vector<10x8xf32>
    %122 = arith.addf %118, %121 : vector<10x8xf32>
    %123 = vector.shape_cast %122 : vector<10x8xf32> to vector<5x2x8xf32>
    %124 = arith.truncf %107 : vector<5x2x8xf32> to vector<5x2x8xbf16>
    %125 = arith.truncf %115 : vector<5x2x8xf32> to vector<5x2x8xbf16>
    "tpu.trace_start"() <{level = 10 : i32, message = "nld,nmd->nlm"}> : () -> ()
    %cst_81 = arith.constant dense<0.000000e+00> : vector<5x2x2xf32>
    %126 = tpu.matmul %124, %125, %cst_81 {dimension_numbers = #tpu.dot_dimension_numbers<[2], [2], [1], [1], [0, 0, 0, 1, 1, 1], [0], [0]>} : vector<5x2x8xbf16>, vector<5x2x8xbf16>, vector<5x2x2xf32> -> vector<5x2x2xf32>
    "tpu.trace_stop"() : () -> ()
    %cst_82 = arith.constant 0.353553385 : f32
    %127 = vector.broadcast %cst_82 : f32 to vector<5x2x2xf32>
    %128 = arith.mulf %126, %127 : vector<5x2x2xf32>
    %cst_83 = arith.constant dense<0xFF800000> : vector<5x2xf32>
    %129 = vector.multi_reduction <maximumf>, %128, %cst_83 [2] : vector<5x2x2xf32> to vector<5x2xf32>
    %130 = vector.shape_cast %129 : vector<5x2xf32> to vector<5x2x1xf32>
    %131 = vector.broadcast %130 : vector<5x2x1xf32> to vector<5x2x2xf32>
    %132 = arith.subf %128, %131 : vector<5x2x2xf32>
    %133 = math.exp %132 : vector<5x2x2xf32>
    %cst_84 = arith.constant dense<0.000000e+00> : vector<5x2xf32>
    %134 = vector.multi_reduction <add>, %133, %cst_84 [2] : vector<5x2x2xf32> to vector<5x2xf32>
    %135 = vector.shape_cast %134 : vector<5x2xf32> to vector<5x2x1xf32>
    %136 = tpu.reciprocal %135 {approx = true} : vector<5x2x1xf32> -> vector<5x2x1xf32>
    %137 = vector.broadcast %136 : vector<5x2x1xf32> to vector<5x2x2xf32>
    %138 = arith.mulf %133, %137 : vector<5x2x2xf32>
    %139 = arith.truncf %138 : vector<5x2x2xf32> to vector<5x2x2xbf16>
    %140 = arith.truncf %123 : vector<5x2x8xf32> to vector<5x2x8xbf16>
    "tpu.trace_start"() <{level = 10 : i32, message = "nlm,nmd->nld"}> : () -> ()
    %cst_85 = arith.constant dense<0.000000e+00> : vector<5x2x8xf32>
    %141 = tpu.matmul %139, %140, %cst_85 {dimension_numbers = #tpu.dot_dimension_numbers<[2], [1], [1], [2], [0, 0, 0, 1, 1, 2], [0], [0]>} : vector<5x2x2xbf16>, vector<5x2x8xbf16>, vector<5x2x8xf32> -> vector<5x2x8xf32>
    "tpu.trace_stop"() : () -> ()
    %142 = vector.shape_cast %141 : vector<5x2x8xf32> to vector<10x8xf32>
    %143 = arith.truncf %142 : vector<10x8xf32> to vector<10x8xbf16>
    %c2_86 = arith.constant 2 : index
    %c0_87 = arith.constant 0 : index
    %c0_88 = arith.constant 0 : index
    %144 = vector.load %arg8[%c2_86, %c0_87, %c0_88] : memref<4x8x32xbf16, #tpu.memory_space<vmem>>, vector<1x8x32xbf16>
    %145 = vector.shape_cast %144 : vector<1x8x32xbf16> to vector<8x32xbf16>
    %cst_89 = arith.constant dense<0.000000e+00> : vector<10x32xf32>
    %146 = tpu.matmul %143, %145, %cst_89 {dimension_numbers = #tpu.dot_dimension_numbers<[1], [0], [0], [1], [0, 0, 1, 1], [], []>} : vector<10x8xbf16>, vector<8x32xbf16>, vector<10x32xf32> -> vector<10x32xf32>
    %147 = arith.addf %99, %146 : vector<10x32xf32>
    %c3 = arith.constant 3 : index
    %c0_90 = arith.constant 0 : index
    %c0_91 = arith.constant 0 : index
    %148 = vector.load %arg2[%c3, %c0_90, %c0_91] : memref<4x32x8xbf16, #tpu.memory_space<vmem>>, vector<1x32x8xbf16>
    %149 = vector.shape_cast %148 : vector<1x32x8xbf16> to vector<32x8xbf16>
    %cst_92 = arith.constant dense<0.000000e+00> : vector<10x8xf32>
    %150 = tpu.matmul %2, %149, %cst_92 {dimension_numbers = #tpu.dot_dimension_numbers<[1], [0], [0], [1], [0, 0, 1, 1], [], []>} : vector<10x32xbf16>, vector<32x8xbf16>, vector<10x8xf32> -> vector<10x8xf32>
    %c3_93 = arith.constant 3 : index
    %c0_94 = arith.constant 0 : index
    %c0_95 = arith.constant 0 : index
    %151 = vector.load %arg3[%c3_93, %c0_94, %c0_95] : memref<4x1x8xf32, #tpu.memory_space<vmem>>, vector<1x1x8xf32>
    %152 = vector.shape_cast %151 : vector<1x1x8xf32> to vector<1x8xf32>
    %153 = vector.broadcast %152 : vector<1x8xf32> to vector<10x8xf32>
    %154 = arith.addf %150, %153 : vector<10x8xf32>
    %155 = vector.shape_cast %154 : vector<10x8xf32> to vector<5x2x8xf32>
    %c3_96 = arith.constant 3 : index
    %c0_97 = arith.constant 0 : index
    %c0_98 = arith.constant 0 : index
    %156 = vector.load %arg4[%c3_96, %c0_97, %c0_98] : memref<4x32x8xbf16, #tpu.memory_space<vmem>>, vector<1x32x8xbf16>
    %157 = vector.shape_cast %156 : vector<1x32x8xbf16> to vector<32x8xbf16>
    %cst_99 = arith.constant dense<0.000000e+00> : vector<10x8xf32>
    %158 = tpu.matmul %2, %157, %cst_99 {dimension_numbers = #tpu.dot_dimension_numbers<[1], [0], [0], [1], [0, 0, 1, 1], [], []>} : vector<10x32xbf16>, vector<32x8xbf16>, vector<10x8xf32> -> vector<10x8xf32>
    %c3_100 = arith.constant 3 : index
    %c0_101 = arith.constant 0 : index
    %c0_102 = arith.constant 0 : index
    %159 = vector.load %arg5[%c3_100, %c0_101, %c0_102] : memref<4x1x8xf32, #tpu.memory_space<vmem>>, vector<1x1x8xf32>
    %160 = vector.shape_cast %159 : vector<1x1x8xf32> to vector<1x8xf32>
    %161 = vector.broadcast %160 : vector<1x8xf32> to vector<10x8xf32>
    %162 = arith.addf %158, %161 : vector<10x8xf32>
    %163 = vector.shape_cast %162 : vector<10x8xf32> to vector<5x2x8xf32>
    %c3_103 = arith.constant 3 : index
    %c0_104 = arith.constant 0 : index
    %c0_105 = arith.constant 0 : index
    %164 = vector.load %arg6[%c3_103, %c0_104, %c0_105] : memref<4x32x8xbf16, #tpu.memory_space<vmem>>, vector<1x32x8xbf16>
    %165 = vector.shape_cast %164 : vector<1x32x8xbf16> to vector<32x8xbf16>
    %cst_106 = arith.constant dense<0.000000e+00> : vector<10x8xf32>
    %166 = tpu.matmul %2, %165, %cst_106 {dimension_numbers = #tpu.dot_dimension_numbers<[1], [0], [0], [1], [0, 0, 1, 1], [], []>} : vector<10x32xbf16>, vector<32x8xbf16>, vector<10x8xf32> -> vector<10x8xf32>
    %c3_107 = arith.constant 3 : index
    %c0_108 = arith.constant 0 : index
    %c0_109 = arith.constant 0 : index
    %167 = vector.load %arg7[%c3_107, %c0_108, %c0_109] : memref<4x1x8xf32, #tpu.memory_space<vmem>>, vector<1x1x8xf32>
    %168 = vector.shape_cast %167 : vector<1x1x8xf32> to vector<1x8xf32>
    %169 = vector.broadcast %168 : vector<1x8xf32> to vector<10x8xf32>
    %170 = arith.addf %166, %169 : vector<10x8xf32>
    %171 = vector.shape_cast %170 : vector<10x8xf32> to vector<5x2x8xf32>
    %172 = arith.truncf %155 : vector<5x2x8xf32> to vector<5x2x8xbf16>
    %173 = arith.truncf %163 : vector<5x2x8xf32> to vector<5x2x8xbf16>
    "tpu.trace_start"() <{level = 10 : i32, message = "nld,nmd->nlm"}> : () -> ()
    %cst_110 = arith.constant dense<0.000000e+00> : vector<5x2x2xf32>
    %174 = tpu.matmul %172, %173, %cst_110 {dimension_numbers = #tpu.dot_dimension_numbers<[2], [2], [1], [1], [0, 0, 0, 1, 1, 1], [0], [0]>} : vector<5x2x8xbf16>, vector<5x2x8xbf16>, vector<5x2x2xf32> -> vector<5x2x2xf32>
    "tpu.trace_stop"() : () -> ()
    %cst_111 = arith.constant 0.353553385 : f32
    %175 = vector.broadcast %cst_111 : f32 to vector<5x2x2xf32>
    %176 = arith.mulf %174, %175 : vector<5x2x2xf32>
    %cst_112 = arith.constant dense<0xFF800000> : vector<5x2xf32>
    %177 = vector.multi_reduction <maximumf>, %176, %cst_112 [2] : vector<5x2x2xf32> to vector<5x2xf32>
    %178 = vector.shape_cast %177 : vector<5x2xf32> to vector<5x2x1xf32>
    %179 = vector.broadcast %178 : vector<5x2x1xf32> to vector<5x2x2xf32>
    %180 = arith.subf %176, %179 : vector<5x2x2xf32>
    %181 = math.exp %180 : vector<5x2x2xf32>
    %cst_113 = arith.constant dense<0.000000e+00> : vector<5x2xf32>
    %182 = vector.multi_reduction <add>, %181, %cst_113 [2] : vector<5x2x2xf32> to vector<5x2xf32>
    %183 = vector.shape_cast %182 : vector<5x2xf32> to vector<5x2x1xf32>
    %184 = tpu.reciprocal %183 {approx = true} : vector<5x2x1xf32> -> vector<5x2x1xf32>
    %185 = vector.broadcast %184 : vector<5x2x1xf32> to vector<5x2x2xf32>
    %186 = arith.mulf %181, %185 : vector<5x2x2xf32>
    %187 = arith.truncf %186 : vector<5x2x2xf32> to vector<5x2x2xbf16>
    %188 = arith.truncf %171 : vector<5x2x8xf32> to vector<5x2x8xbf16>
    "tpu.trace_start"() <{level = 10 : i32, message = "nlm,nmd->nld"}> : () -> ()
    %cst_114 = arith.constant dense<0.000000e+00> : vector<5x2x8xf32>
    %189 = tpu.matmul %187, %188, %cst_114 {dimension_numbers = #tpu.dot_dimension_numbers<[2], [1], [1], [2], [0, 0, 0, 1, 1, 2], [0], [0]>} : vector<5x2x2xbf16>, vector<5x2x8xbf16>, vector<5x2x8xf32> -> vector<5x2x8xf32>
    "tpu.trace_stop"() : () -> ()
    %190 = vector.shape_cast %189 : vector<5x2x8xf32> to vector<10x8xf32>
    %191 = arith.truncf %190 : vector<10x8xf32> to vector<10x8xbf16>
    %c3_115 = arith.constant 3 : index
    %c0_116 = arith.constant 0 : index
    %c0_117 = arith.constant 0 : index
    %192 = vector.load %arg8[%c3_115, %c0_116, %c0_117] : memref<4x8x32xbf16, #tpu.memory_space<vmem>>, vector<1x8x32xbf16>
    %193 = vector.shape_cast %192 : vector<1x8x32xbf16> to vector<8x32xbf16>
    %cst_118 = arith.constant dense<0.000000e+00> : vector<10x32xf32>
    %194 = tpu.matmul %191, %193, %cst_118 {dimension_numbers = #tpu.dot_dimension_numbers<[1], [0], [0], [1], [0, 0, 1, 1], [], []>} : vector<10x8xbf16>, vector<8x32xbf16>, vector<10x32xf32> -> vector<10x32xf32>
    %195 = arith.addf %147, %194 : vector<10x32xf32>
    %c0_119 = arith.constant 0 : index
    %c0_120 = arith.constant 0 : index
    %196 = vector.load %arg9[%c0_119, %c0_120] : memref<1x32xf32, #tpu.memory_space<vmem>>, vector<1x32xf32>
    %197 = vector.broadcast %196 : vector<1x32xf32> to vector<10x32xf32>
    %198 = arith.addf %195, %197 : vector<10x32xf32>
    %199 = arith.addf %1, %198 : vector<10x32xf32>
    %cst_121 = arith.constant dense<0.000000e+00> : vector<10xf32>
    %200 = vector.multi_reduction <add>, %199, %cst_121 [1] : vector<10x32xf32> to vector<10xf32>
    %201 = vector.shape_cast %200 : vector<10xf32> to vector<10x1xf32>
    %cst_122 = arith.constant 3.200000e+01 : f32
    %202 = vector.broadcast %cst_122 : f32 to vector<10x1xf32>
    %203 = arith.divf %201, %202 : vector<10x1xf32>
    %204 = vector.broadcast %203 : vector<10x1xf32> to vector<10x32xf32>
    %205 = arith.subf %199, %204 : vector<10x32xf32>
    %206 = arith.mulf %205, %205 : vector<10x32xf32>
    %cst_123 = arith.constant dense<0.000000e+00> : vector<10xf32>
    %207 = vector.multi_reduction <add>, %206, %cst_123 [1] : vector<10x32xf32> to vector<10xf32>
    %208 = vector.shape_cast %207 : vector<10xf32> to vector<10x1xf32>
    %cst_124 = arith.constant 3.200000e+01 : f32
    %209 = vector.broadcast %cst_124 : f32 to vector<10x1xf32>
    %210 = arith.divf %208, %209 : vector<10x1xf32>
    %211 = vector.broadcast %203 : vector<10x1xf32> to vector<10x32xf32>
    %212 = arith.subf %199, %211 : vector<10x32xf32>
    %cst_125 = arith.constant 9.99999974E-6 : f32
    %213 = vector.broadcast %cst_125 : f32 to vector<10x1xf32>
    %214 = arith.addf %210, %213 : vector<10x1xf32>
    %215 = math.rsqrt %214 : vector<10x1xf32>
    %216 = vector.broadcast %215 : vector<10x1xf32> to vector<10x32xf32>
    %217 = arith.mulf %212, %216 : vector<10x32xf32>
    %c0_126 = arith.constant 0 : index
    %c0_127 = arith.constant 0 : index
    %218 = vector.load %arg10[%c0_126, %c0_127] : memref<1x32xf32, #tpu.memory_space<vmem>>, vector<1x32xf32>
    %219 = vector.broadcast %218 : vector<1x32xf32> to vector<10x32xf32>
    %220 = arith.mulf %217, %219 : vector<10x32xf32>
    %c0_128 = arith.constant 0 : index
    %c0_129 = arith.constant 0 : index
    %221 = vector.load %arg11[%c0_128, %c0_129] : memref<1x32xf32, #tpu.memory_space<vmem>>, vector<1x32xf32>
    %222 = vector.broadcast %221 : vector<1x32xf32> to vector<10x32xf32>
    %223 = arith.addf %220, %222 : vector<10x32xf32>
    %224 = arith.truncf %223 : vector<10x32xf32> to vector<10x32xbf16>
    %c0_130 = arith.constant 0 : index
    %c0_131 = arith.constant 0 : index
    %225 = vector.load %arg12[%c0_130, %c0_131] : memref<32x64xbf16, #tpu.memory_space<vmem>>, vector<32x64xbf16>
    %cst_132 = arith.constant dense<0.000000e+00> : vector<10x64xf32>
    %226 = tpu.matmul %224, %225, %cst_132 {dimension_numbers = #tpu.dot_dimension_numbers<[1], [0], [0], [1], [0, 0, 1, 1], [], []>} : vector<10x32xbf16>, vector<32x64xbf16>, vector<10x64xf32> -> vector<10x64xf32>
    %c0_133 = arith.constant 0 : index
    %c0_134 = arith.constant 0 : index
    %227 = vector.load %arg13[%c0_133, %c0_134] : memref<1x64xf32, #tpu.memory_space<vmem>>, vector<1x64xf32>
    %228 = vector.broadcast %227 : vector<1x64xf32> to vector<10x64xf32>
    %229 = arith.addf %226, %228 : vector<10x64xf32>
    %cst_135 = arith.constant 0.000000e+00 : f32
    %230 = vector.broadcast %cst_135 : f32 to vector<10x64xf32>
    %231 = arith.maximumf %229, %230 : vector<10x64xf32>
    %232 = arith.truncf %231 : vector<10x64xf32> to vector<10x64xbf16>
    %c0_136 = arith.constant 0 : index
    %c0_137 = arith.constant 0 : index
    %233 = vector.load %arg14[%c0_136, %c0_137] : memref<64x32xbf16, #tpu.memory_space<vmem>>, vector<64x32xbf16>
    %cst_138 = arith.constant dense<0.000000e+00> : vector<10x32xf32>
    %234 = tpu.matmul %232, %233, %cst_138 {dimension_numbers = #tpu.dot_dimension_numbers<[1], [0], [0], [1], [0, 0, 1, 1], [], []>} : vector<10x64xbf16>, vector<64x32xbf16>, vector<10x32xf32> -> vector<10x32xf32>
    %c0_139 = arith.constant 0 : index
    %c0_140 = arith.constant 0 : index
    %235 = vector.load %arg15[%c0_139, %c0_140] : memref<1x32xf32, #tpu.memory_space<vmem>>, vector<1x32xf32>
    %236 = vector.broadcast %235 : vector<1x32xf32> to vector<10x32xf32>
    %237 = arith.addf %234, %236 : vector<10x32xf32>
    %238 = arith.addf %223, %237 : vector<10x32xf32>
    %cst_141 = arith.constant dense<0.000000e+00> : vector<10xf32>
    %239 = vector.multi_reduction <add>, %238, %cst_141 [1] : vector<10x32xf32> to vector<10xf32>
    %240 = vector.shape_cast %239 : vector<10xf32> to vector<10x1xf32>
    %cst_142 = arith.constant 3.200000e+01 : f32
    %241 = vector.broadcast %cst_142 : f32 to vector<10x1xf32>
    %242 = arith.divf %240, %241 : vector<10x1xf32>
    %243 = vector.broadcast %242 : vector<10x1xf32> to vector<10x32xf32>
    %244 = arith.subf %238, %243 : vector<10x32xf32>
    %245 = arith.mulf %244, %244 : vector<10x32xf32>
    %cst_143 = arith.constant dense<0.000000e+00> : vector<10xf32>
    %246 = vector.multi_reduction <add>, %245, %cst_143 [1] : vector<10x32xf32> to vector<10xf32>
    %247 = vector.shape_cast %246 : vector<10xf32> to vector<10x1xf32>
    %cst_144 = arith.constant 3.200000e+01 : f32
    %248 = vector.broadcast %cst_144 : f32 to vector<10x1xf32>
    %249 = arith.divf %247, %248 : vector<10x1xf32>
    %250 = vector.broadcast %242 : vector<10x1xf32> to vector<10x32xf32>
    %251 = arith.subf %238, %250 : vector<10x32xf32>
    %cst_145 = arith.constant 9.99999974E-6 : f32
    %252 = vector.broadcast %cst_145 : f32 to vector<10x1xf32>
    %253 = arith.addf %249, %252 : vector<10x1xf32>
    %254 = math.rsqrt %253 : vector<10x1xf32>
    %255 = vector.broadcast %254 : vector<10x1xf32> to vector<10x32xf32>
    %256 = arith.mulf %251, %255 : vector<10x32xf32>
    %c0_146 = arith.constant 0 : index
    %c0_147 = arith.constant 0 : index
    %257 = vector.load %arg16[%c0_146, %c0_147] : memref<1x32xf32, #tpu.memory_space<vmem>>, vector<1x32xf32>
    %258 = vector.broadcast %257 : vector<1x32xf32> to vector<10x32xf32>
    %259 = arith.mulf %256, %258 : vector<10x32xf32>
    %c0_148 = arith.constant 0 : index
    %c0_149 = arith.constant 0 : index
    %260 = vector.load %arg17[%c0_148, %c0_149] : memref<1x32xf32, #tpu.memory_space<vmem>>, vector<1x32xf32>
    %261 = vector.broadcast %260 : vector<1x32xf32> to vector<10x32xf32>
    %262 = arith.addf %259, %261 : vector<10x32xf32>
    %263 = vector.shape_cast %262 : vector<10x32xf32> to vector<5x2x32xf32>
    %c0_150 = arith.constant 0 : index
    %c0_151 = arith.constant 0 : index
    %c0_152 = arith.constant 0 : index
    %264 = vector.load %arg18[%c0_150, %c0_151, %c0_152] : memref<5x2x32xf32, #tpu.memory_space<vmem>>, vector<5x2x32xf32>
    tpu.vector_store %arg18[%c0_150, %c0_151, %c0_152], %263 {strides = array<i32>} : memref<5x2x32xf32, #tpu.memory_space<vmem>>, vector<5x2x32xf32>,
    return
  }
  func.func @transform_0(%arg0: i32) -> (i32, i32, i32) {
    %c0_i32 = arith.constant 0 : i32
    %c0_i32_0 = arith.constant 0 : i32
    %c0_i32_1 = arith.constant 0 : i32
    return %arg0, %c0_i32, %c0_i32_0 : i32, i32, i32
  }
  func.func @transform_1(%arg0: i32) -> (i32, i32, i32) {
    %c0_i32 = arith.constant 0 : i32
    %c0_i32_0 = arith.constant 0 : i32
    %c0_i32_1 = arith.constant 0 : i32
    %c0_i32_2 = arith.constant 0 : i32
    return %c0_i32, %c0_i32_0, %c0_i32_1 : i32, i32, i32
  }
  func.func @transform_2(%arg0: i32) -> (i32, i32, i32) {
    %c0_i32 = arith.constant 0 : i32
    %c0_i32_0 = arith.constant 0 : i32
    %c0_i32_1 = arith.constant 0 : i32
    %c0_i32_2 = arith.constant 0 : i32
    return %c0_i32, %c0_i32_0, %c0_i32_1 : i32, i32, i32
  }
  func.func @transform_3(%arg0: i32) -> (i32, i32, i32) {
    %c0_i32 = arith.constant 0 : i32
    %c0_i32_0 = arith.constant 0 : i32
    %c0_i32_1 = arith.constant 0 : i32
    %c0_i32_2 = arith.constant 0 : i32
    return %c0_i32, %c0_i32_0, %c0_i32_1 : i32, i32, i32
  }
  func.func @transform_4(%arg0: i32) -> (i32, i32, i32) {
    %c0_i32 = arith.constant 0 : i32
    %c0_i32_0 = arith.constant 0 : i32
    %c0_i32_1 = arith.constant 0 : i32
    %c0_i32_2 = arith.constant 0 : i32
    return %c0_i32, %c0_i32_0, %c0_i32_1 : i32, i32, i32
  }
  func.func @transform_5(%arg0: i32) -> (i32, i32, i32) {
    %c0_i32 = arith.constant 0 : i32
    %c0_i32_0 = arith.constant 0 : i32
    %c0_i32_1 = arith.constant 0 : i32
    %c0_i32_2 = arith.constant 0 : i32
    return %c0_i32, %c0_i32_0, %c0_i32_1 : i32, i32, i32
  }
  func.func @transform_6(%arg0: i32) -> (i32, i32, i32) {
    %c0_i32 = arith.constant 0 : i32
    %c0_i32_0 = arith.constant 0 : i32
    %c0_i32_1 = arith.constant 0 : i32
    %c0_i32_2 = arith.constant 0 : i32
    return %c0_i32, %c0_i32_0, %c0_i32_1 : i32, i32, i32
  }
  func.func @transform_7(%arg0: i32) -> (i32, i32, i32) {
    %c0_i32 = arith.constant 0 : i32
    %c0_i32_0 = arith.constant 0 : i32
    %c0_i32_1 = arith.constant 0 : i32
    %c0_i32_2 = arith.constant 0 : i32
    return %c0_i32, %c0_i32_0, %c0_i32_1 : i32, i32, i32
  }
  func.func @transform_8(%arg0: i32) -> (i32, i32) {
    %c0_i32 = arith.constant 0 : i32
    %c0_i32_0 = arith.constant 0 : i32
    %c0_i32_1 = arith.constant 0 : i32
    return %c0_i32, %c0_i32_0 : i32, i32
  }
  func.func @transform_9(%arg0: i32) -> (i32, i32) {
    %c0_i32 = arith.constant 0 : i32
    %c0_i32_0 = arith.constant 0 : i32
    %c0_i32_1 = arith.constant 0 : i32
    return %c0_i32, %c0_i32_0 : i32, i32
  }
  func.func @transform_10(%arg0: i32) -> (i32, i32) {
    %c0_i32 = arith.constant 0 : i32
    %c0_i32_0 = arith.constant 0 : i32
    %c0_i32_1 = arith.constant 0 : i32
    return %c0_i32, %c0_i32_0 : i32, i32
  }
  func.func @transform_11(%arg0: i32) -> (i32, i32) {
    %c0_i32 = arith.constant 0 : i32
    %c0_i32_0 = arith.constant 0 : i32
    %c0_i32_1 = arith.constant 0 : i32
    return %c0_i32, %c0_i32_0 : i32, i32
  }
  func.func @transform_12(%arg0: i32) -> (i32, i32) {
    %c0_i32 = arith.constant 0 : i32
    %c0_i32_0 = arith.constant 0 : i32
    %c0_i32_1 = arith.constant 0 : i32
    return %c0_i32, %c0_i32_0 : i32, i32
  }
  func.func @transform_13(%arg0: i32) -> (i32, i32) {
    %c0_i32 = arith.constant 0 : i32
    %c0_i32_0 = arith.constant 0 : i32
    %c0_i32_1 = arith.constant 0 : i32
    return %c0_i32, %c0_i32_0 : i32, i32
  }
  func.func @transform_14(%arg0: i32) -> (i32, i32) {
    %c0_i32 = arith.constant 0 : i32
    %c0_i32_0 = arith.constant 0 : i32
    %c0_i32_1 = arith.constant 0 : i32
    return %c0_i32, %c0_i32_0 : i32, i32
  }
  func.func @transform_15(%arg0: i32) -> (i32, i32) {
    %c0_i32 = arith.constant 0 : i32
    %c0_i32_0 = arith.constant 0 : i32
    %c0_i32_1 = arith.constant 0 : i32
    return %c0_i32, %c0_i32_0 : i32, i32
  }
  func.func @transform_16(%arg0: i32) -> (i32, i32) {
    %c0_i32 = arith.constant 0 : i32
    %c0_i32_0 = arith.constant 0 : i32
    %c0_i32_1 = arith.constant 0 : i32
    return %c0_i32, %c0_i32_0 : i32, i32
  }
  func.func @transform_17(%arg0: i32) -> (i32, i32, i32) {
    %c0_i32 = arith.constant 0 : i32
    %c0_i32_0 = arith.constant 0 : i32
    %c0_i32_1 = arith.constant 0 : i32
    return %arg0, %c0_i32, %c0_i32_0 : i32, i32, i32
  }
}

</mosaic_0001>

<llo_original>
// kernel: vit_forward.4
$region0: #{vit_forward.4}
  #allocation0 [shape = 'u32[]', space=smem, size = 0x4, offset = 0x4, fixed_abs, tag = 'smem constant byte address 0x4 - core index']
  #allocation1 [shape = 'u32[144,128]{1,0:T(1,128)}', space=vmem, size = 0x12000, scoped, tag = 'internal scratch']
  %s0 = inlined_call_operand.vmem [shape: f32[8,256], index: 0, kind: input, shape index: {}]
  %s1 = inlined_call_operand.vmem [shape: bf16[256,32], index: 1, kind: input, shape index: {}]
  %s2 = inlined_call_operand.vmem [shape: f32[1,32], index: 2, kind: input, shape index: {}]
  %s3 = inlined_call_operand.vmem [shape: f32[8,32], index: 3, kind: output, shape index: {}]
  %s4 = sld [smem:[#allocation0]]
  $region22: #{vit_forward.4} parent=0
    _
  %s6 = ssub.s32 1, %s4
  %s7 = scalar_select 0, %s6, %s4
  // Predicated region
  $region2: #{vit_forward.4} parent=0 // pred_check
    _
  $region3: #{vit_forward.4} parent=0 // pred_check_branch
    %9 = sbr.rel (0) target = $region5
  $region4: #{vit_forward.4} parent=0 // pred_region
    _
  $region5: #{vit_forward.4} parent=0 // pred_fallthru
    _
  // Predicated region
  $region6: #{vit_forward.4} parent=0 // pred_check
    _
  $region7: #{vit_forward.4} parent=0 // pred_check_branch
    %11 = sbr.rel (0) target = $region9
  $region8: #{vit_forward.4} parent=0 // pred_region
    _
  $region9: #{vit_forward.4} parent=0 // pred_fallthru
    _
  // Predicated region
  $region10: #{vit_forward.4} parent=0 // pred_check
    _
  $region11: #{vit_forward.4} parent=0 // pred_check_branch
    %13 = sbr.rel (0) target = $region13
  $region12: #{vit_forward.4} parent=0 // pred_region
    _
  $region13: #{vit_forward.4} parent=0 // pred_fallthru
    _
  %v15 = vld [vmem:[%s0] sm:$0xff]
  %v16 = vld [vmem:[%s0 + $0x8] sm:$0xff]
  %v17 = vpack.c.bf16 %v15, %v15
  %v18 = vpack.c.bf16 %v16, %v16
  %v19 = vld [vmem:[%s1] sm:$0xf]
  %v20 = vld [vmem:[%s1 + $0x4] sm:$0xf]
  %v21 = vld [vmem:[%s1 + $0x8] sm:$0xf]
  %v22 = vld [vmem:[%s1 + $0xc] sm:$0xf]
  %v23 = vld [vmem:[%s1 + $0x10] sm:$0xf]
  %v24 = vld [vmem:[%s1 + $0x14] sm:$0xf]
  %v25 = vld [vmem:[%s1 + $0x18] sm:$0xf]
  %v26 = vld [vmem:[%s1 + $0x1c] sm:$0xf]
  %v27 = vld [vmem:[%s1 + $0x20] sm:$0xf]
  %v28 = vld [vmem:[%s1 + $0x24] sm:$0xf]
  %v29 = vld [vmem:[%s1 + $0x28] sm:$0xf]
  %v30 = vld [vmem:[%s1 + $0x2c] sm:$0xf]
  %v31 = vld [vmem:[%s1 + $0x30] sm:$0xf]
  %v32 = vld [vmem:[%s1 + $0x34] sm:$0xf]
  %v33 = vld [vmem:[%s1 + $0x38] sm:$0xf]
  %v34 = vld [vmem:[%s1 + $0x3c] sm:$0xf]
  %v35 = vld [vmem:[%s1 + $0x40] sm:$0xf]
  %v36 = vld [vmem:[%s1 + $0x44] sm:$0xf]
  %v37 = vld [vmem:[%s1 + $0x48] sm:$0xf]
  %v38 = vld [vmem:[%s1 + $0x4c] sm:$0xf]
  %v39 = vld [vmem:[%s1 + $0x50] sm:$0xf]
  %v40 = vld [vmem:[%s1 + $0x54] sm:$0xf]
  %v41 = vld [vmem:[%s1 + $0x58] sm:$0xf]
  %v42 = vld [vmem:[%s1 + $0x5c] sm:$0xf]
  %v43 = vld [vmem:[%s1 + $0x60] sm:$0xf]
  %v44 = vld [vmem:[%s1 + $0x64] sm:$0xf]
  %v45 = vld [vmem:[%s1 + $0x68] sm:$0xf]
  %v46 = vld [vmem:[%s1 + $0x6c] sm:$0xf]
  %v47 = vld [vmem:[%s1 + $0x70] sm:$0xf]
  %v48 = vld [vmem:[%s1 + $0x74] sm:$0xf]
  %v49 = vld [vmem:[%s1 + $0x78] sm:$0xf]
  %v50 = vld [vmem:[%s1 + $0x7c] sm:$0xf]
  %v51 = vld [vmem:[%s2] sm:$0x1]
  %v53 = vlaneseq
  %v54 = vshrl.u32 %v53, 7
  %v55 = vsub.s32 0, %v54
  %v56 = vrot.slane %v51, %v55
  %v90 = vunpack.c.l.b16 %v19
  %v91 = vunpack.c.l.b16 %v20
  %v92 = vunpack.c.l.b16 %v21
  %v93 = vunpack.c.l.b16 %v22
  %v94 = vunpack.c.l.b16 %v23
  %v95 = vunpack.c.l.b16 %v24
  %v96 = vunpack.c.l.b16 %v25
  %v97 = vunpack.c.l.b16 %v26
  %v98 = vunpack.c.l.b16 %v27
  %v99 = vunpack.c.l.b16 %v28
  %v100 = vunpack.c.l.b16 %v29
  %v101 = vunpack.c.l.b16 %v30
  %v102 = vunpack.c.l.b16 %v31
  %v103 = vunpack.c.l.b16 %v32
  %v104 = vunpack.c.l.b16 %v33
  %v105 = vunpack.c.l.b16 %v34
  %v106 = vunpack.c.l.b16 %v35
  %v107 = vunpack.c.l.b16 %v36
  %v108 = vunpack.c.l.b16 %v37
  %v109 = vunpack.c.l.b16 %v38
  %v110 = vunpack.c.l.b16 %v39
  %v111 = vunpack.c.l.b16 %v40
  %v112 = vunpack.c.l.b16 %v41
  %v113 = vunpack.c.l.b16 %v42
  %v114 = vunpack.c.l.b16 %v43
  %v115 = vunpack.c.l.b16 %v44
  %v116 = vunpack.c.l.b16 %v45
  %v117 = vunpack.c.l.b16 %v46
  %v118 = vunpack.c.l.b16 %v47
  %v119 = vunpack.c.l.b16 %v48
  %v120 = vunpack.c.l.b16 %v49
  %v121 = vunpack.c.l.b16 %v50
  %v122 = vpack.c.b16 %v91, %v90
  %v123 = vpack.c.b16 %v93, %v92
  %v124 = vpack.c.b16 %v95, %v94
  %v125 = vpack.c.b16 %v97, %v96
  %v126 = vpack.c.b16 %v99, %v98
  %v127 = vpack.c.b16 %v101, %v100
  %v128 = vpack.c.b16 %v103, %v102
  %v129 = vpack.c.b16 %v105, %v104
  %v130 = vpack.c.b16 %v107, %v106
  %v131 = vpack.c.b16 %v109, %v108
  %v132 = vpack.c.b16 %v111, %v110
  %v133 = vpack.c.b16 %v113, %v112
  %v134 = vpack.c.b16 %v115, %v114
  %v135 = vpack.c.b16 %v117, %v116
  %v136 = vpack.c.b16 %v119, %v118
  %v137 = vpack.c.b16 %v121, %v120
  %154 = vmatprep.subr.bf16.mxu0 0
  %155 = vmatpush1.bf16.msra.mxu0 %v122
  %156 = vmatprep.subr.bf16.mxu0 0
  %157 = vmatpush1.bf16.msra.mxu0 %v123
  %158 = vmatprep.subr.bf16.mxu0 0
  %159 = vmatpush1.bf16.msra.mxu0 %v124
  %160 = vmatprep.subr.bf16.mxu0 0
  %161 = vmatpush1.bf16.msra.mxu0 %v125
  %162 = vmatprep.subr.bf16.mxu0 0
  %163 = vmatpush1.bf16.msra.mxu0 %v126
  %164 = vmatprep.subr.bf16.mxu0 0
  %165 = vmatpush1.bf16.msra.mxu0 %v127
  %166 = vmatprep.subr.bf16.mxu0 0
  %167 = vmatpush1.bf16.msra.mxu0 %v128
  %168 = vmatprep.subr.bf16.mxu0 0
  %169 = vmatpush1.bf16.msra.mxu0 %v129
  %170 = vmatprep.subr.bf16.mxu0 0
  %171 = vmatpush1.bf16.msra.mxu0 %v130
  %172 = vmatprep.subr.bf16.mxu0 0
  %173 = vmatpush1.bf16.msra.mxu0 %v131
  %174 = vmatprep.subr.bf16.mxu0 0
  %175 = vmatpush1.bf16.msra.mxu0 %v132
  %176 = vmatprep.subr.bf16.mxu0 0
  %177 = vmatpush1.bf16.msra.mxu0 %v133
  %178 = vmatprep.subr.bf16.mxu0 0
  %179 = vmatpush1.bf16.msra.mxu0 %v134
  %180 = vmatprep.subr.bf16.mxu0 0
  %181 = vmatpush1.bf16.msra.mxu0 %v135
  %182 = vmatprep.subr.bf16.mxu0 0
  %183 = vmatpush1.bf16.msra.mxu0 %v136
  %184 = vmatprep.subr.bf16.mxu0 0
  %185 = vmatpush1.bf16.msra.mxu0 %v137
  %186 = vmatprep.mubr.bf16.mxu0 %v18
  %187 = vmatmul.mubr.bf16.gmra.mrb[0].mxu0 %v17
  %v188 = vpop.f32.mrb[0].mxu0
  %v189 = vadd.f32 %v56, %v188
  %v190 = vpop.f32.mrb[0].mxu0
  %v191 = vpop.f32.mrb[0].mxu0
  %v192 = vpop.f32.mrb[0].mxu0
  %193 = vdwg.mxu0
  %vm194 = vcmask 261120
  %195 = vst.msk [vmem:[%s3] sm:$0xff] %vm194, %v189
  // Predicated region
  $region14: #{vit_forward.4} parent=0 // pred_check
    _
  $region15: #{vit_forward.4} parent=0 // pred_check_branch
    %197 = sbr.rel (0) target = $region17
  $region16: #{vit_forward.4} parent=0 // pred_region
    _
  $region17: #{vit_forward.4} parent=0 // pred_fallthru
    _
  // Predicated region
  $region18: #{vit_forward.4} parent=0 // pred_check
    _
  $region19: #{vit_forward.4} parent=0 // pred_check_branch
    %199 = sbr.rel (0) target = $region21
  $region20: #{vit_forward.4} parent=0 // pred_region
    _
  $region21: #{vit_forward.4} parent=0 // pred_fallthru
    _

// kernel: vit_forward.7
$region0: #{vit_forward.7}
  #allocation0 [shape = 'u32[]', space=smem, size = 0x4, offset = 0x4, fixed_abs, tag = 'smem constant byte address 0x4 - core index']
  #allocation1 [shape = 'u32[144,128]{1,0:T(1,128)}', space=vmem, size = 0x12000, scoped, tag = 'internal scratch']
  %s0 = inlined_call_operand.vmem [shape: f32[2,32], index: 0, kind: input, shape index: {}]
  %s1 = inlined_call_operand.vmem [shape: bf16[32,10], index: 1, kind: input, shape index: {}]
  %s2 = inlined_call_operand.vmem [shape: f32[1,10], index: 2, kind: input, shape index: {}]
  %s3 = inlined_call_operand.hbm [shape: f32[2,10], index: 3, kind: output, shape index: {}]
  %s4 = sld [smem:[#allocation0]]
  $region22: #{vit_forward.7} parent=0
    _
  %s6 = ssub.s32 1, %s4
  %s7 = scalar_select 0, %s6, %s4
  $region1: #{vit_forward.7} parent=0
    #allocation2 [shape = 'u8[1024]{0}', space=vmem, size = 0x400, scoped, tag = 'output window, operand 0, single buffered']
    #allocation3 [shape = 's32[1]{0}', space=sflag, size = 0x4, scoped, tag = 'scoped memory for vit_forward.7']
    %8 = vsyncpa [#allocation3], 0
    // Predicated region
    $region2: #{vit_forward.7} parent=1 // pred_check
      _
    $region3: #{vit_forward.7} parent=1 // pred_check_branch
      %10 = sbr.rel (0) target = $region5
    $region4: #{vit_forward.7} parent=1 // pred_region
      _
    $region5: #{vit_forward.7} parent=1 // pred_fallthru
      _
    // Predicated region
    $region6: #{vit_forward.7} parent=1 // pred_check
      _
    $region7: #{vit_forward.7} parent=1 // pred_check_branch
      %12 = sbr.rel (0) target = $region9
    $region8: #{vit_forward.7} parent=1 // pred_region
      _
    $region9: #{vit_forward.7} parent=1 // pred_fallthru
      _
    // Predicated region
    $region10: #{vit_forward.7} parent=1 // pred_check
      _
    $region11: #{vit_forward.7} parent=1 // pred_check_branch
      %14 = sbr.rel (0) target = $region13
    $region12: #{vit_forward.7} parent=1 // pred_region
      _
    $region13: #{vit_forward.7} parent=1 // pred_fallthru
      _
    %v16 = vld [vmem:[%s0] sm:$0x3]
    %v17 = vpack.c.bf16 %v16, %v16
    %v18 = vld [vmem:[%s1] sm:$0xf]
    %v19 = vld [vmem:[%s1 + $0x4] sm:$0xf]
    %v20 = vld [vmem:[%s1 + $0x8] sm:$0xf]
    %v21 = vld [vmem:[%s1 + $0xc] sm:$0xf]
    %v22 = vld [vmem:[%s2] sm:$0x1]
    %v24 = vlaneseq
    %v25 = vshrl.u32 %v24, 7
    %v26 = vsub.s32 0, %v25
    %v27 = vrot.slane %v22, %v26
    %v33 = vunpack.c.l.b16 %v18
    %v34 = vunpack.c.l.b16 %v19
    %v35 = vunpack.c.l.b16 %v20
    %v36 = vunpack.c.l.b16 %v21
    %v37 = vpack.c.b16 %v34, %v33
    %v38 = vpack.c.b16 %v36, %v35
    %vm41 = vcmask 261120
    %v43 = vsel %vm41, %v17, 0
    %45 = vmatprep.subr.bf16.mxu0 0
    %46 = vmatpush1.bf16.msra.mxu0 %v37
    %47 = vmatprep.subr.bf16.mxu0 0
    %48 = vmatpush1.bf16.msra.mxu0 %v38
    %49 = vmatprep.subr.bf16.mxu0 0
    %50 = vmatpush1.bf16.msra.mxu0 0
    %51 = vmatprep.subr.bf16.mxu0 0
    %52 = vmatpush1.bf16.msra.mxu0 0
    %53 = vmatprep.subr.bf16.mxu0 0
    %54 = vmatpush1.bf16.msra.mxu0 0
    %55 = vmatprep.subr.bf16.mxu0 0
    %56 = vmatpush1.bf16.msra.mxu0 0
    %57 = vmatprep.subr.bf16.mxu0 0
    %58 = vmatpush1.bf16.msra.mxu0 0
    %59 = vmatprep.subr.bf16.mxu0 0
    %60 = vmatpush1.bf16.msra.mxu0 0
    %61 = vmatprep.subr.bf16.mxu0 0
    %62 = vmatpush1.bf16.msra.mxu0 0
    %63 = vmatprep.subr.bf16.mxu0 0
    %64 = vmatpush1.bf16.msra.mxu0 0
    %65 = vmatprep.subr.bf16.mxu0 0
    %66 = vmatpush1.bf16.msra.mxu0 0
    %67 = vmatprep.subr.bf16.mxu0 0
    %68 = vmatpush1.bf16.msra.mxu0 0
    %69 = vmatprep.subr.bf16.mxu0 0
    %70 = vmatpush1.bf16.msra.mxu0 0
    %71 = vmatprep.subr.bf16.mxu0 0
    %72 = vmatpush1.bf16.msra.mxu0 0
    %73 = vmatprep.subr.bf16.mxu0 0
    %74 = vmatpush1.bf16.msra.mxu0 0
    %75 = vmatprep.subr.bf16.mxu0 0
    %76 = vmatpush1.bf16.msra.mxu0 0
    %77 = vmatprep.mubr.bf16.mxu0 0
    %78 = vmatmul.mubr.bf16.gmra.mrb[0].mxu0 %v43
    %v79 = vpop.f32.mrb[0].mxu0
    %v80 = vadd.f32 %v27, %v79
    %v81 = vpop.f32.mrb[0].mxu0
    %v82 = vpop.f32.mrb[0].mxu0
    %v83 = vpop.f32.mrb[0].mxu0
    %84 = vdwg.mxu0
    %vm85 = vcmask 74752
    %86 = vst.msk [vmem:[#allocation2] sm:$0x3] %vm85, %v80
    // Predicated region
    $region14: #{vit_forward.7} parent=1 // pred_check
      _
    $region15: #{vit_forward.7} parent=1 // pred_check_branch
      %88 = sbr.rel (0) target = $region17
    $region16: #{vit_forward.7} parent=1 // pred_region
      %s90 = ssub.s32 32, 32
      %91 = vsyncadd [#allocation3], %s90
      %s93 = sshll.u32 [#allocation2], 4
      %s94 = int_to_ptr.vmem [resolvable:$true] %s93
      %96 = dma.vmem_to_hbm [thread:$0]  %s94, 32, %s3, [#allocation3]
    $region17: #{vit_forward.7} parent=1 // pred_fallthru
      _
    // Predicated region
    $region18: #{vit_forward.7} parent=1 // pred_check
      _
    $region19: #{vit_forward.7} parent=1 // pred_check_branch
      %98 = sbr.rel (0) target = $region21
    $region20: #{vit_forward.7} parent=1 // pred_region
      %99 = dma.done [#allocation3], 32
    $region21: #{vit_forward.7} parent=1 // pred_fallthru
      _
    %100 = vsyncpa [#allocation3], 1

// kernel: vit_forward.5
$region0: #{vit_forward.5}
  #allocation0 [shape = 'u32[]', space=smem, size = 0x4, offset = 0x4, fixed_abs, tag = 'smem constant byte address 0x4 - core index']
  #allocation1 [shape = 'u32[144,128]{1,0:T(1,128)}', space=vmem, size = 0x12000, scoped, tag = 'internal scratch']
  %s0 = inlined_call_operand.vmem [shape: f32[5,2,32], index: 0, kind: input, shape index: {}]
  %s1 = inlined_call_operand.vmem [shape: bf16[4,32,8], index: 1, kind: input, shape index: {}]
  %s2 = inlined_call_operand.vmem [shape: f32[4,1,8], index: 2, kind: input, shape index: {}]
  %s3 = inlined_call_operand.vmem [shape: bf16[4,32,8], index: 3, kind: input, shape index: {}]
  %s4 = inlined_call_operand.vmem [shape: f32[4,1,8], index: 4, kind: input, shape index: {}]
  %s5 = inlined_call_operand.vmem [shape: bf16[4,32,8], index: 5, kind: input, shape index: {}]
  %s6 = inlined_call_operand.vmem [shape: f32[4,1,8], index: 6, kind: input, shape index: {}]
  %s7 = inlined_call_operand.vmem [shape: bf16[4,8,32], index: 7, kind: input, shape index: {}]
  %s8 = inlined_call_operand.vmem [shape: f32[1,32], index: 8, kind: input, shape index: {}]
  %s9 = inlined_call_operand.vmem [shape: f32[1,32], index: 9, kind: input, shape index: {}]
  %s10 = inlined_call_operand.vmem [shape: f32[1,32], index: 10, kind: input, shape index: {}]
  %s11 = inlined_call_operand.vmem [shape: bf16[32,64], index: 11, kind: input, shape index: {}]
  %s12 = inlined_call_operand.vmem [shape: f32[1,64], index: 12, kind: input, shape index: {}]
  %s13 = inlined_call_operand.vmem [shape: bf16[64,32], index: 13, kind: input, shape index: {}]
  %s14 = inlined_call_operand.vmem [shape: f32[1,32], index: 14, kind: input, shape index: {}]
  %s15 = inlined_call_operand.vmem [shape: f32[1,32], index: 15, kind: input, shape index: {}]
  %s16 = inlined_call_operand.vmem [shape: f32[1,32], index: 16, kind: input, shape index: {}]
  %s17 = inlined_call_operand.vmem [shape: f32[5,2,32], index: 17, kind: output, shape index: {}]
  %s18 = sld [smem:[#allocation0]]
  $region78: #{vit_forward.5} parent=0
    _
  %s20 = ssub.s32 1, %s18
  %s21 = scalar_select 0, %s20, %s18
  // Predicated region
  $region2: #{vit_forward.5} parent=0 // pred_check
    _
  $region3: #{vit_forward.5} parent=0 // pred_check_branch
    %23 = sbr.rel (0) target = $region5
  $region4: #{vit_forward.5} parent=0 // pred_region
    _
  $region5: #{vit_forward.5} parent=0 // pred_fallthru
    _
  // Predicated region
  $region6: #{vit_forward.5} parent=0 // pred_check
    _
  $region7: #{vit_forward.5} parent=0 // pred_check_branch
    %25 = sbr.rel (0) target = $region9
  $region8: #{vit_forward.5} parent=0 // pred_region
    _
  $region9: #{vit_forward.5} parent=0 // pred_fallthru
    _
  // Predicated region
  $region10: #{vit_forward.5} parent=0 // pred_check
    _
  $region11: #{vit_forward.5} parent=0 // pred_check_branch
    %27 = sbr.rel (0) target = $region13
  $region12: #{vit_forward.5} parent=0 // pred_region
    _
  $region13: #{vit_forward.5} parent=0 // pred_fallthru
    _
  // Predicated region
  $region14: #{vit_forward.5} parent=0 // pred_check
    _
  $region15: #{vit_forward.5} parent=0 // pred_check_branch
    %29 = sbr.rel (0) target = $region17
  $region16: #{vit_forward.5} parent=0 // pred_region
    _
  $region17: #{vit_forward.5} parent=0 // pred_fallthru
    _
  // Predicated region
  $region18: #{vit_forward.5} parent=0 // pred_check
    _
  $region19: #{vit_forward.5} parent=0 // pred_check_branch
    %31 = sbr.rel (0) target = $region21
  $region20: #{vit_forward.5} parent=0 // pred_region
    _
  $region21: #{vit_forward.5} parent=0 // pred_fallthru
    _
  // Predicated region
  $region22: #{vit_forward.5} parent=0 // pred_check
    _
  $region23: #{vit_forward.5} parent=0 // pred_check_branch
    %33 = sbr.rel (0) target = $region25
  $region24: #{vit_forward.5} parent=0 // pred_region
    _
  $region25: #{vit_forward.5} parent=0 // pred_fallthru
    _
  // Predicated region
  $region26: #{vit_forward.5} parent=0 // pred_check
    _
  $region27: #{vit_forward.5} parent=0 // pred_check_branch
    %35 = sbr.rel (0) target = $region29
  $region28: #{vit_forward.5} parent=0 // pred_region
    _
  $region29: #{vit_forward.5} parent=0 // pred_fallthru
    _
  // Predicated region
  $region30: #{vit_forward.5} parent=0 // pred_check
    _
  $region31: #{vit_forward.5} parent=0 // pred_check_branch
    %37 = sbr.rel (0) target = $region33
  $region32: #{vit_forward.5} parent=0 // pred_region
    _
  $region33: #{vit_forward.5} parent=0 // pred_fallthru
    _
  // Predicated region
  $region34: #{vit_forward.5} parent=0 // pred_check
    _
  $region35: #{vit_forward.5} parent=0 // pred_check_branch
    %39 = sbr.rel (0) target = $region37
  $region36: #{vit_forward.5} parent=0 // pred_region
    _
  $region37: #{vit_forward.5} parent=0 // pred_fallthru
    _
  // Predicated region
  $region38: #{vit_forward.5} parent=0 // pred_check
    _
  $region39: #{vit_forward.5} parent=0 // pred_check_branch
    %41 = sbr.rel (0) target = $region41
  $region40: #{vit_forward.5} parent=0 // pred_region
    _
  $region41: #{vit_forward.5} parent=0 // pred_fallthru
    _
  // Predicated region
  $region42: #{vit_forward.5} parent=0 // pred_check
    _
  $region43: #{vit_forward.5} parent=0 // pred_check_branch
    %43 = sbr.rel (0) target = $region45
  $region44: #{vit_forward.5} parent=0 // pred_region
    _
  $region45: #{vit_forward.5} parent=0 // pred_fallthru
    _
  // Predicated region
  $region46: #{vit_forward.5} parent=0 // pred_check
    _
  $region47: #{vit_forward.5} parent=0 // pred_check_branch
    %45 = sbr.rel (0) target = $region49
  $region48: #{vit_forward.5} parent=0 // pred_region
    _
  $region49: #{vit_forward.5} parent=0 // pred_fallthru
    _
  // Predicated region
  $region50: #{vit_forward.5} parent=0 // pred_check
    _
  $region51: #{vit_forward.5} parent=0 // pred_check_branch
    %47 = sbr.rel (0) target = $region53
  $region52: #{vit_forward.5} parent=0 // pred_region
    _
  $region53: #{vit_forward.5} parent=0 // pred_fallthru
    _
  // Predicated region
  $region54: #{vit_forward.5} parent=0 // pred_check
    _
  $region55: #{vit_forward.5} parent=0 // pred_check_branch
    %49 = sbr.rel (0) target = $region57
  $region56: #{vit_forward.5} parent=0 // pred_region
    _
  $region57: #{vit_forward.5} parent=0 // pred_fallthru
    _
  // Predicated region
  $region58: #{vit_forward.5} parent=0 // pred_check
    _
  $region59: #{vit_forward.5} parent=0 // pred_check_branch
    %51 = sbr.rel (0) target = $region61
  $region60: #{vit_forward.5} parent=0 // pred_region
    _
  $region61: #{vit_forward.5} parent=0 // pred_fallthru
    _
  // Predicated region
  $region62: #{vit_forward.5} parent=0 // pred_check
    _
  $region63: #{vit_forward.5} parent=0 // pred_check_branch
    %53 = sbr.rel (0) target = $region65
  $region64: #{vit_forward.5} parent=0 // pred_region
    _
  $region65: #{vit_forward.5} parent=0 // pred_fallthru
    _
  // Predicated region
  $region66: #{vit_forward.5} parent=0 // pred_check
    _
  $region67: #{vit_forward.5} parent=0 // pred_check_branch
    %55 = sbr.rel (0) target = $region69
  $region68: #{vit_forward.5} parent=0 // pred_region
    _
  $region69: #{vit_forward.5} parent=0 // pred_fallthru
    _
  %v57 = vld [vmem:[%s0] sm:$0x3]
  %v58 = vld [vmem:[%s0 + $0x2] sm:$0x3]
  %v59 = vld [vmem:[%s0 + $0x4] sm:$0x3]
  %v60 = vld [vmem:[%s0 + $0x6] sm:$0x3]
  %v61 = vld [vmem:[%s0 + $0x8] sm:$0x3]
  %v67 = vcombine.low %v57, %v58
  %v68 = vcombine.low %v59, %v60
  %v70 = vunpack.c.l.s4 1983009808
  %v71 = vunpack.c.0.s8 %v70
  %v72 = vlaneseq
  %v73 = vshrl.u32 %v72, 7
  %v74 = vsub.s32 %v71, %v73
  %v75 = vrot.slane %v67, %v74
  %v77 = vunpack.c.l.s4 1983009808
  %v78 = vunpack.c.0.s8 %v77
  %v79 = vlaneseq
  %v80 = vshrl.u32 %v79, 7
  %v81 = vsub.s32 %v78, %v80
  %v82 = vrot.slane %v68, %v81
  %v83 = vcombine.low %v75, %v82
  %v85 = vunpack.c.l.s4 1983009808
  %v86 = vunpack.c.0.s8 %v85
  %v87 = vlaneseq
  %v88 = vshrl.u32 %v87, 7
  %v89 = vsub.s32 %v86, %v88
  %v90 = vrot.slane %v61, %v89
  %v93 = vpack.c.bf16 %v90, %v83
  %v94 = vld [vmem:[%s1] sm:$0xf]
  %v95 = vld [vmem:[%s1 + $0x4] sm:$0xf]
  %v96 = vld [vmem:[%s1 + $0x8] sm:$0xf]
  %v97 = vld [vmem:[%s1 + $0xc] sm:$0xf]
  %v98 = vld [vmem:[%s2] sm:$0x1]
  %v100 = vlaneseq
  %v101 = vshrl.u32 %v100, 7
  %v102 = vsub.s32 0, %v101
  %v103 = vrot.slane %v98, %v102
  %v109 = vunpack.c.l.b16 %v94
  %v110 = vunpack.c.l.b16 %v95
  %v111 = vunpack.c.l.b16 %v96
  %v112 = vunpack.c.l.b16 %v97
  %v113 = vpack.c.b16 %v110, %v109
  %v114 = vpack.c.b16 %v112, %v111
  %vm117 = vcmask 261120
  %v119 = vsel %vm117, %v93, 0
  %121 = vmatprep.subr.bf16.mxu0 0
  %122 = vmatpush1.bf16.msra.mxu0 %v113
  %123 = vmatprep.subr.bf16.mxu0 0
  %124 = vmatpush1.bf16.msra.mxu0 %v114
  %125 = vmatprep.subr.bf16.mxu0 0
  %126 = vmatpush1.bf16.msra.mxu0 0
  %127 = vmatprep.subr.bf16.mxu0 0
  %128 = vmatpush1.bf16.msra.mxu0 0
  %129 = vmatprep.subr.bf16.mxu0 0
  %130 = vmatpush1.bf16.msra.mxu0 0
  %131 = vmatprep.subr.bf16.mxu0 0
  %132 = vmatpush1.bf16.msra.mxu0 0
  %133 = vmatprep.subr.bf16.mxu0 0
  %134 = vmatpush1.bf16.msra.mxu0 0
  %135 = vmatprep.subr.bf16.mxu0 0
  %136 = vmatpush1.bf16.msra.mxu0 0
  %137 = vmatprep.subr.bf16.mxu0 0
  %138 = vmatpush1.bf16.msra.mxu0 0
  %139 = vmatprep.subr.bf16.mxu0 0
  %140 = vmatpush1.bf16.msra.mxu0 0
  %141 = vmatprep.subr.bf16.mxu0 0
  %142 = vmatpush1.bf16.msra.mxu0 0
  %143 = vmatprep.subr.bf16.mxu0 0
  %144 = vmatpush1.bf16.msra.mxu0 0
  %145 = vmatprep.subr.bf16.mxu0 0
  %146 = vmatpush1.bf16.msra.mxu0 0
  %147 = vmatprep.subr.bf16.mxu0 0
  %148 = vmatpush1.bf16.msra.mxu0 0
  %149 = vmatprep.subr.bf16.mxu0 0
  %150 = vmatpush1.bf16.msra.mxu0 0
  %151 = vmatprep.subr.bf16.mxu0 0
  %152 = vmatpush1.bf16.msra.mxu0 0
  %153 = vmatprep.mubr.bf16.mxu0 0
  %154 = vmatmul.mubr.bf16.gmra.mrb[0].mxu0 %v119
  %v155 = vpop.f32.mrb[0].mxu0
  %v156 = vadd.f32 %v103, %v155
  %v157 = vpop.f32.mrb[0].mxu0
  %v158 = vpop.f32.mrb[0].mxu0
  %v159 = vadd.f32 %v103, %v158
  %v160 = vpop.f32.mrb[0].mxu0
  %161 = vdwg.mxu0
  %v164 = vcombine.high %v156, %v156
  %v166 = vunpack.c.l.s4 1983009808
  %v167 = vunpack.c.0.s8 %v166
  %v168 = vlaneseq
  %v169 = vshrl.u32 %v168, 7
  %v170 = vsub.s32 %v167, %v169
  %v171 = vrot.slane %v156, %v170
  %v173 = vunpack.c.l.s4 1983009808
  %v174 = vunpack.c.0.s8 %v173
  %v175 = vlaneseq
  %v176 = vshrl.u32 %v175, 7
  %v177 = vsub.s32 %v174, %v176
  %v178 = vrot.slane %v164, %v177
  %v179 = vcombine.high %v171, %v171
  %v180 = vcombine.high %v178, %v178
  %v182 = vunpack.c.l.s4 1983009808
  %v183 = vunpack.c.0.s8 %v182
  %v184 = vlaneseq
  %v185 = vshrl.u32 %v184, 7
  %v186 = vsub.s32 %v183, %v185
  %v187 = vrot.slane %v159, %v186
  %v193 = vld [vmem:[%s3] sm:$0xf]
  %v194 = vld [vmem:[%s3 + $0x4] sm:$0xf]
  %v195 = vld [vmem:[%s3 + $0x8] sm:$0xf]
  %v196 = vld [vmem:[%s3 + $0xc] sm:$0xf]
  %v197 = vld [vmem:[%s4] sm:$0x1]
  %v199 = vlaneseq
  %v200 = vshrl.u32 %v199, 7
  %v201 = vsub.s32 0, %v200
  %v202 = vrot.slane %v197, %v201
  %v208 = vunpack.c.l.b16 %v193
  %v209 = vunpack.c.l.b16 %v194
  %v210 = vunpack.c.l.b16 %v195
  %v211 = vunpack.c.l.b16 %v196
  %v212 = vpack.c.b16 %v209, %v208
  %v213 = vpack.c.b16 %v211, %v210
  %216 = vmatprep.subr.bf16.mxu0 0
  %217 = vmatpush1.bf16.msra.mxu0 %v212
  %218 = vmatprep.subr.bf16.mxu0 0
  %219 = vmatpush1.bf16.msra.mxu0 %v213
  %220 = vmatprep.subr.bf16.mxu0 0
  %221 = vmatpush1.bf16.msra.mxu0 0
  %222 = vmatprep.subr.bf16.mxu0 0
  %223 = vmatpush1.bf16.msra.mxu0 0
  %224 = vmatprep.subr.bf16.mxu0 0
  %225 = vmatpush1.bf16.msra.mxu0 0
  %226 = vmatprep.subr.bf16.mxu0 0
  %227 = vmatpush1.bf16.msra.mxu0 0
  %228 = vmatprep.subr.bf16.mxu0 0
  %229 = vmatpush1.bf16.msra.mxu0 0
  %230 = vmatprep.subr.bf16.mxu0 0
  %231 = vmatpush1.bf16.msra.mxu0 0
  %232 = vmatprep.subr.bf16.mxu0 0
  %233 = vmatpush1.bf16.msra.mxu0 0
  %234 = vmatprep.subr.bf16.mxu0 0
  %235 = vmatpush1.bf16.msra.mxu0 0
  %236 = vmatprep.subr.bf16.mxu0 0
  %237 = vmatpush1.bf16.msra.mxu0 0
  %238 = vmatprep.subr.bf16.mxu0 0
  %239 = vmatpush1.bf16.msra.mxu0 0
  %240 = vmatprep.subr.bf16.mxu0 0
  %241 = vmatpush1.bf16.msra.mxu0 0
  %242 = vmatprep.subr.bf16.mxu0 0
  %243 = vmatpush1.bf16.msra.mxu0 0
  %244 = vmatprep.subr.bf16.mxu0 0
  %245 = vmatpush1.bf16.msra.mxu0 0
  %246 = vmatprep.subr.bf16.mxu0 0
  %247 = vmatpush1.bf16.msra.mxu0 0
  %248 = vmatprep.mubr.bf16.mxu0 0
  %249 = vmatmul.mubr.bf16.gmra.mrb[0].mxu0 %v119
  %v250 = vpop.f32.mrb[0].mxu0
  %v251 = vadd.f32 %v202, %v250
  %v252 = vpop.f32.mrb[0].mxu0
  %v253 = vpop.f32.mrb[0].mxu0
  %v254 = vadd.f32 %v202, %v253
  %v255 = vpop.f32.mrb[0].mxu0
  %256 = vdwg.mxu0
  %v259 = vcombine.high %v251, %v251
  %v261 = vunpack.c.l.s4 1983009808
  %v262 = vunpack.c.0.s8 %v261
  %v263 = vlaneseq
  %v264 = vshrl.u32 %v263, 7
  %v265 = vsub.s32 %v262, %v264
  %v266 = vrot.slane %v251, %v265
  %v268 = vunpack.c.l.s4 1983009808
  %v269 = vunpack.c.0.s8 %v268
  %v270 = vlaneseq
  %v271 = vshrl.u32 %v270, 7
  %v272 = vsub.s32 %v269, %v271
  %v273 = vrot.slane %v259, %v272
  %v274 = vcombine.high %v266, %v266
  %v275 = vcombine.high %v273, %v273
  %v277 = vunpack.c.l.s4 1983009808
  %v278 = vunpack.c.0.s8 %v277
  %v279 = vlaneseq
  %v280 = vshrl.u32 %v279, 7
  %v281 = vsub.s32 %v278, %v280
  %v282 = vrot.slane %v254, %v281
  %v288 = vld [vmem:[%s5] sm:$0xf]
  %v289 = vld [vmem:[%s5 + $0x4] sm:$0xf]
  %v290 = vld [vmem:[%s5 + $0x8] sm:$0xf]
  %v291 = vld [vmem:[%s5 + $0xc] sm:$0xf]
  %v292 = vld [vmem:[%s6] sm:$0x1]
  %v294 = vlaneseq
  %v295 = vshrl.u32 %v294, 7
  %v296 = vsub.s32 0, %v295
  %v297 = vrot.slane %v292, %v296
  %v303 = vunpack.c.l.b16 %v288
  %v304 = vunpack.c.l.b16 %v289
  %v305 = vunpack.c.l.b16 %v290
  %v306 = vunpack.c.l.b16 %v291
  %v307 = vpack.c.b16 %v304, %v303
  %v308 = vpack.c.b16 %v306, %v305
  %311 = vmatprep.subr.bf16.mxu0 0
  %312 = vmatpush1.bf16.msra.mxu0 %v307
  %313 = vmatprep.subr.bf16.mxu0 0
  %314 = vmatpush1.bf16.msra.mxu0 %v308
  %315 = vmatprep.subr.bf16.mxu0 0
  %316 = vmatpush1.bf16.msra.mxu0 0
  %317 = vmatprep.subr.bf16.mxu0 0
  %318 = vmatpush1.bf16.msra.mxu0 0
  %319 = vmatprep.subr.bf16.mxu0 0
  %320 = vmatpush1.bf16.msra.mxu0 0
  %321 = vmatprep.subr.bf16.mxu0 0
  %322 = vmatpush1.bf16.msra.mxu0 0
  %323 = vmatprep.subr.bf16.mxu0 0
  %324 = vmatpush1.bf16.msra.mxu0 0
  %325 = vmatprep.subr.bf16.mxu0 0
  %326 = vmatpush1.bf16.msra.mxu0 0
  %327 = vmatprep.subr.bf16.mxu0 0
  %328 = vmatpush1.bf16.msra.mxu0 0
  %329 = vmatprep.subr.bf16.mxu0 0
  %330 = vmatpush1.bf16.msra.mxu0 0
  %331 = vmatprep.subr.bf16.mxu0 0
  %332 = vmatpush1.bf16.msra.mxu0 0
  %333 = vmatprep.subr.bf16.mxu0 0
  %334 = vmatpush1.bf16.msra.mxu0 0
  %335 = vmatprep.subr.bf16.mxu0 0
  %336 = vmatpush1.bf16.msra.mxu0 0
  %337 = vmatprep.subr.bf16.mxu0 0
  %338 = vmatpush1.bf16.msra.mxu0 0
  %339 = vmatprep.subr.bf16.mxu0 0
  %340 = vmatpush1.bf16.msra.mxu0 0
  %341 = vmatprep.subr.bf16.mxu0 0
  %342 = vmatpush1.bf16.msra.mxu0 0
  %343 = vmatprep.mubr.bf16.mxu0 0
  %344 = vmatmul.mubr.bf16.gmra.mrb[0].mxu0 %v119
  %v345 = vpop.f32.mrb[0].mxu0
  %v346 = vadd.f32 %v297, %v345
  %v347 = vpop.f32.mrb[0].mxu0
  %v348 = vpop.f32.mrb[0].mxu0
  %v349 = vadd.f32 %v297, %v348
  %v350 = vpop.f32.mrb[0].mxu0
  %351 = vdwg.mxu0
  %v354 = vcombine.high %v346, %v346
  %v356 = vunpack.c.l.s4 1983009808
  %v357 = vunpack.c.0.s8 %v356
  %v358 = vlaneseq
  %v359 = vshrl.u32 %v358, 7
  %v360 = vsub.s32 %v357, %v359
  %v361 = vrot.slane %v346, %v360
  %v363 = vunpack.c.l.s4 1983009808
  %v364 = vunpack.c.0.s8 %v363
  %v365 = vlaneseq
  %v366 = vshrl.u32 %v365, 7
  %v367 = vsub.s32 %v364, %v366
  %v368 = vrot.slane %v354, %v367
  %v369 = vcombine.high %v361, %v361
  %v370 = vcombine.high %v368, %v368
  %v372 = vunpack.c.l.s4 1983009808
  %v373 = vunpack.c.0.s8 %v372
  %v374 = vlaneseq
  %v375 = vshrl.u32 %v374, 7
  %v376 = vsub.s32 %v373, %v375
  %v377 = vrot.slane %v349, %v376
  %v383 = vpack.c.bf16 %v171, %v171
  %v384 = vpack.c.bf16 %v179, %v179
  %v385 = vpack.c.bf16 %v178, %v178
  %v386 = vpack.c.bf16 %v180, %v180
  %v387 = vpack.c.bf16 %v187, %v187
  %v388 = vpack.c.bf16 %v266, %v266
  %v389 = vpack.c.bf16 %v274, %v274
  %v390 = vpack.c.bf16 %v273, %v273
  %v391 = vpack.c.bf16 %v275, %v275
  %v392 = vpack.c.bf16 %v282, %v282
  %vm393 = vcmask 64512
  %v395 = vsel %vm393, %v383, 0
  %v398 = vsel %vm393, %v388, 0
  %400 = vmatprep.subr.bf16.mxu0 0
  %401 = vmatpush1.bf16.xpose.msra.mxu0 %v398
  %402 = vmatprep.subr.bf16.mxu0 0
  %403 = vmatpush1.bf16.xpose.msra.mxu0 0
  %404 = vmatprep.subr.bf16.mxu0 0
  %405 = vmatpush1.bf16.xpose.msra.mxu0 0
  %406 = vmatprep.subr.bf16.mxu0 0
  %407 = vmatpush1.bf16.xpose.msra.mxu0 0
  %408 = vmatprep.subr.bf16.mxu0 0
  %409 = vmatpush1.bf16.xpose.msra.mxu0 0
  %410 = vmatprep.subr.bf16.mxu0 0
  %411 = vmatpush1.bf16.xpose.msra.mxu0 0
  %412 = vmatprep.subr.bf16.mxu0 0
  %413 = vmatpush1.bf16.xpose.msra.mxu0 0
  %414 = vmatprep.subr.bf16.mxu0 0
  %415 = vmatpush1.bf16.xpose.msra.mxu0 0
  %416 = vmatprep.subr.bf16.mxu0 0
  %417 = vmatpush1.bf16.xpose.msra.mxu0 0
  %418 = vmatprep.subr.bf16.mxu0 0
  %419 = vmatpush1.bf16.xpose.msra.mxu0 0
  %420 = vmatprep.subr.bf16.mxu0 0
  %421 = vmatpush1.bf16.xpose.msra.mxu0 0
  %422 = vmatprep.subr.bf16.mxu0 0
  %423 = vmatpush1.bf16.xpose.msra.mxu0 0
  %424 = vmatprep.subr.bf16.mxu0 0
  %425 = vmatpush1.bf16.xpose.msra.mxu0 0
  %426 = vmatprep.subr.bf16.mxu0 0
  %427 = vmatpush1.bf16.xpose.msra.mxu0 0
  %428 = vmatprep.subr.bf16.mxu0 0
  %429 = vmatpush1.bf16.xpose.msra.mxu0 0
  %430 = vmatprep.subr.bf16.mxu0 0
  %431 = vmatpush1.bf16.xpose.msra.mxu0 0
  %432 = vmatprep.mubr.bf16.mxu0 0
  %433 = vmatmul.mubr.bf16.gmra.mrb[0].mxu0 %v395
  %v434 = vpop.f32.mrb[0].mxu0
  %v435 = vadd.f32 0.0, %v434
  %v436 = vpop.f32.mrb[0].mxu0
  %v437 = vpop.f32.mrb[0].mxu0
  %v438 = vpop.f32.mrb[0].mxu0
  %439 = vdwg.mxu0
  %v441 = vsel %vm393, %v384, 0
  %v444 = vsel %vm393, %v389, 0
  %446 = vmatprep.subr.bf16.mxu0 0
  %447 = vmatpush1.bf16.xpose.msra.mxu0 %v444
  %448 = vmatprep.subr.bf16.mxu0 0
  %449 = vmatpush1.bf16.xpose.msra.mxu0 0
  %450 = vmatprep.subr.bf16.mxu0 0
  %451 = vmatpush1.bf16.xpose.msra.mxu0 0
  %452 = vmatprep.subr.bf16.mxu0 0
  %453 = vmatpush1.bf16.xpose.msra.mxu0 0
  %454 = vmatprep.subr.bf16.mxu0 0
  %455 = vmatpush1.bf16.xpose.msra.mxu0 0
  %456 = vmatprep.subr.bf16.mxu0 0
  %457 = vmatpush1.bf16.xpose.msra.mxu0 0
  %458 = vmatprep.subr.bf16.mxu0 0
  %459 = vmatpush1.bf16.xpose.msra.mxu0 0
  %460 = vmatprep.subr.bf16.mxu0 0
  %461 = vmatpush1.bf16.xpose.msra.mxu0 0
  %462 = vmatprep.subr.bf16.mxu0 0
  %463 = vmatpush1.bf16.xpose.msra.mxu0 0
  %464 = vmatprep.subr.bf16.mxu0 0
  %465 = vmatpush1.bf16.xpose.msra.mxu0 0
  %466 = vmatprep.subr.bf16.mxu0 0
  %467 = vmatpush1.bf16.xpose.msra.mxu0 0
  %468 = vmatprep.subr.bf16.mxu0 0
  %469 = vmatpush1.bf16.xpose.msra.mxu0 0
  %470 = vmatprep.subr.bf16.mxu0 0
  %471 = vmatpush1.bf16.xpose.msra.mxu0 0
  %472 = vmatprep.subr.bf16.mxu0 0
  %473 = vmatpush1.bf16.xpose.msra.mxu0 0
  %474 = vmatprep.subr.bf16.mxu0 0
  %475 = vmatpush1.bf16.xpose.msra.mxu0 0
  %476 = vmatprep.subr.bf16.mxu0 0
  %477 = vmatpush1.bf16.xpose.msra.mxu0 0
  %478 = vmatprep.mubr.bf16.mxu0 0
  %479 = vmatmul.mubr.bf16.gmra.mrb[0].mxu0 %v441
  %v480 = vpop.f32.mrb[0].mxu0
  %v481 = vadd.f32 0.0, %v480
  %v482 = vpop.f32.mrb[0].mxu0
  %v483 = vpop.f32.mrb[0].mxu0
  %v484 = vpop.f32.mrb[0].mxu0
  %485 = vdwg.mxu0
  %v487 = vsel %vm393, %v385, 0
  %v490 = vsel %vm393, %v390, 0
  %492 = vmatprep.subr.bf16.mxu0 0
  %493 = vmatpush1.bf16.xpose.msra.mxu0 %v490
  %494 = vmatprep.subr.bf16.mxu0 0
  %495 = vmatpush1.bf16.xpose.msra.mxu0 0
  %496 = vmatprep.subr.bf16.mxu0 0
  %497 = vmatpush1.bf16.xpose.msra.mxu0 0
  %498 = vmatprep.subr.bf16.mxu0 0
  %499 = vmatpush1.bf16.xpose.msra.mxu0 0
  %500 = vmatprep.subr.bf16.mxu0 0
  %501 = vmatpush1.bf16.xpose.msra.mxu0 0
  %502 = vmatprep.subr.bf16.mxu0 0
  %503 = vmatpush1.bf16.xpose.msra.mxu0 0
  %504 = vmatprep.subr.bf16.mxu0 0
  %505 = vmatpush1.bf16.xpose.msra.mxu0 0
  %506 = vmatprep.subr.bf16.mxu0 0
  %507 = vmatpush1.bf16.xpose.msra.mxu0 0
  %508 = vmatprep.subr.bf16.mxu0 0
  %509 = vmatpush1.bf16.xpose.msra.mxu0 0
  %510 = vmatprep.subr.bf16.mxu0 0
  %511 = vmatpush1.bf16.xpose.msra.mxu0 0
  %512 = vmatprep.subr.bf16.mxu0 0
  %513 = vmatpush1.bf16.xpose.msra.mxu0 0
  %514 = vmatprep.subr.bf16.mxu0 0
  %515 = vmatpush1.bf16.xpose.msra.mxu0 0
  %516 = vmatprep.subr.bf16.mxu0 0
  %517 = vmatpush1.bf16.xpose.msra.mxu0 0
  %518 = vmatprep.subr.bf16.mxu0 0
  %519 = vmatpush1.bf16.xpose.msra.mxu0 0
  %520 = vmatprep.subr.bf16.mxu0 0
  %521 = vmatpush1.bf16.xpose.msra.mxu0 0
  %522 = vmatprep.subr.bf16.mxu0 0
  %523 = vmatpush1.bf16.xpose.msra.mxu0 0
  %524 = vmatprep.mubr.bf16.mxu0 0
  %525 = vmatmul.mubr.bf16.gmra.mrb[0].mxu0 %v487
  %v526 = vpop.f32.mrb[0].mxu0
  %v527 = vadd.f32 0.0, %v526
  %v528 = vpop.f32.mrb[0].mxu0
  %v529 = vpop.f32.mrb[0].mxu0
  %v530 = vpop.f32.mrb[0].mxu0
  %531 = vdwg.mxu0
  %v533 = vsel %vm393, %v386, 0
  %v536 = vsel %vm393, %v391, 0
  %538 = vmatprep.subr.bf16.mxu0 0
  %539 = vmatpush1.bf16.xpose.msra.mxu0 %v536
  %540 = vmatprep.subr.bf16.mxu0 0
  %541 = vmatpush1.bf16.xpose.msra.mxu0 0
  %542 = vmatprep.subr.bf16.mxu0 0
  %543 = vmatpush1.bf16.xpose.msra.mxu0 0
  %544 = vmatprep.subr.bf16.mxu0 0
  %545 = vmatpush1.bf16.xpose.msra.mxu0 0
  %546 = vmatprep.subr.bf16.mxu0 0
  %547 = vmatpush1.bf16.xpose.msra.mxu0 0
  %548 = vmatprep.subr.bf16.mxu0 0
  %549 = vmatpush1.bf16.xpose.msra.mxu0 0
  %550 = vmatprep.subr.bf16.mxu0 0
  %551 = vmatpush1.bf16.xpose.msra.mxu0 0
  %552 = vmatprep.subr.bf16.mxu0 0
  %553 = vmatpush1.bf16.xpose.msra.mxu0 0
  %554 = vmatprep.subr.bf16.mxu0 0
  %555 = vmatpush1.bf16.xpose.msra.mxu0 0
  %556 = vmatprep.subr.bf16.mxu0 0
  %557 = vmatpush1.bf16.xpose.msra.mxu0 0
  %558 = vmatprep.subr.bf16.mxu0 0
  %559 = vmatpush1.bf16.xpose.msra.mxu0 0
  %560 = vmatprep.subr.bf16.mxu0 0
  %561 = vmatpush1.bf16.xpose.msra.mxu0 0
  %562 = vmatprep.subr.bf16.mxu0 0
  %563 = vmatpush1.bf16.xpose.msra.mxu0 0
  %564 = vmatprep.subr.bf16.mxu0 0
  %565 = vmatpush1.bf16.xpose.msra.mxu0 0
  %566 = vmatprep.subr.bf16.mxu0 0
  %567 = vmatpush1.bf16.xpose.msra.mxu0 0
  %568 = vmatprep.subr.bf16.mxu0 0
  %569 = vmatpush1.bf16.xpose.msra.mxu0 0
  %570 = vmatprep.mubr.bf16.mxu0 0
  %571 = vmatmul.mubr.bf16.gmra.mrb[0].mxu0 %v533
  %v572 = vpop.f32.mrb[0].mxu0
  %v573 = vadd.f32 0.0, %v572
  %v574 = vpop.f32.mrb[0].mxu0
  %v575 = vpop.f32.mrb[0].mxu0
  %v576 = vpop.f32.mrb[0].mxu0
  %577 = vdwg.mxu0
  %v579 = vsel %vm393, %v387, 0
  %v582 = vsel %vm393, %v392, 0
  %584 = vmatprep.subr.bf16.mxu0 0
  %585 = vmatpush1.bf16.xpose.msra.mxu0 %v582
  %586 = vmatprep.subr.bf16.mxu0 0
  %587 = vmatpush1.bf16.xpose.msra.mxu0 0
  %588 = vmatprep.subr.bf16.mxu0 0
  %589 = vmatpush1.bf16.xpose.msra.mxu0 0
  %590 = vmatprep.subr.bf16.mxu0 0
  %591 = vmatpush1.bf16.xpose.msra.mxu0 0
  %592 = vmatprep.subr.bf16.mxu0 0
  %593 = vmatpush1.bf16.xpose.msra.mxu0 0
  %594 = vmatprep.subr.bf16.mxu0 0
  %595 = vmatpush1.bf16.xpose.msra.mxu0 0
  %596 = vmatprep.subr.bf16.mxu0 0
  %597 = vmatpush1.bf16.xpose.msra.mxu0 0
  %598 = vmatprep.subr.bf16.mxu0 0
  %599 = vmatpush1.bf16.xpose.msra.mxu0 0
  %600 = vmatprep.subr.bf16.mxu0 0
  %601 = vmatpush1.bf16.xpose.msra.mxu0 0
  %602 = vmatprep.subr.bf16.mxu0 0
  %603 = vmatpush1.bf16.xpose.msra.mxu0 0
  %604 = vmatprep.subr.bf16.mxu0 0
  %605 = vmatpush1.bf16.xpose.msra.mxu0 0
  %606 = vmatprep.subr.bf16.mxu0 0
  %607 = vmatpush1.bf16.xpose.msra.mxu0 0
  %608 = vmatprep.subr.bf16.mxu0 0
  %609 = vmatpush1.bf16.xpose.msra.mxu0 0
  %610 = vmatprep.subr.bf16.mxu0 0
  %611 = vmatpush1.bf16.xpose.msra.mxu0 0
  %612 = vmatprep.subr.bf16.mxu0 0
  %613 = vmatpush1.bf16.xpose.msra.mxu0 0
  %614 = vmatprep.subr.bf16.mxu0 0
  %615 = vmatpush1.bf16.xpose.msra.mxu0 0
  %616 = vmatprep.mubr.bf16.mxu0 0
  %617 = vmatmul.mubr.bf16.gmra.mrb[0].mxu0 %v579
  %v618 = vpop.f32.mrb[0].mxu0
  %v619 = vadd.f32 0.0, %v618
  %v620 = vpop.f32.mrb[0].mxu0
  %v621 = vpop.f32.mrb[0].mxu0
  %v622 = vpop.f32.mrb[0].mxu0
  %623 = vdwg.mxu0
  %v624 = vmul.f32 %v435, 0.35355338
  %v625 = vmul.f32 %v481, 0.35355338
  %v626 = vmul.f32 %v527, 0.35355338
  %v627 = vmul.f32 %v573, 0.35355338
  %v628 = vmul.f32 %v619, 0.35355338
  %vm629 = vcmask 9216
  %v630 = vsel %vm629, %v624, -inf
  %631 = vmax.xlane.f32.xlu0 %v630
  %v632 = vpop.xlane.xlu0 %631
  %v633 = vsel %vm629, %v625, -inf
  %634 = vmax.xlane.f32.xlu0 %v633
  %v635 = vpop.xlane.xlu0 %634
  %v636 = vsel %vm629, %v626, -inf
  %637 = vmax.xlane.f32.xlu0 %v636
  %v638 = vpop.xlane.xlu0 %637
  %v639 = vsel %vm629, %v627, -inf
  %640 = vmax.xlane.f32.xlu0 %v639
  %v641 = vpop.xlane.xlu0 %640
  %v642 = vsel %vm629, %v628, -inf
  %643 = vmax.xlane.f32.xlu0 %v642
  %v644 = vpop.xlane.xlu0 %643
  %v645 = vsub.f32 %v624, %v632
  %v646 = vsub.f32 %v625, %v635
  %v647 = vsub.f32 %v626, %v638
  %v648 = vsub.f32 %v627, %v641
  %v649 = vsub.f32 %v628, %v644
  %v650 = vmul.f32 %v645, 1.442695
  %v651 = vpow.pop %v650
  %v652 = vmul.f32 %v646, 1.442695
  %v653 = vpow.pop %v652
  %v654 = vmul.f32 %v647, 1.442695
  %v655 = vpow.pop %v654
  %v656 = vmul.f32 %v648, 1.442695
  %v657 = vpow.pop %v656
  %v658 = vmul.f32 %v649, 1.442695
  %v659 = vpow.pop %v658
  %v660 = vsel %vm629, %v651, 0.0
  %661 = vadd.xlane.f32.xlu0 %v660
  %v662 = vpop.xlane.xlu0 %661
  %v663 = vsel %vm629, %v653, 0.0
  %664 = vadd.xlane.f32.xlu0 %v663
  %v665 = vpop.xlane.xlu0 %664
  %v666 = vsel %vm629, %v655, 0.0
  %667 = vadd.xlane.f32.xlu0 %v666
  %v668 = vpop.xlane.xlu0 %667
  %v669 = vsel %vm629, %v657, 0.0
  %670 = vadd.xlane.f32.xlu0 %v669
  %v671 = vpop.xlane.xlu0 %670
  %v672 = vsel %vm629, %v659, 0.0
  %673 = vadd.xlane.f32.xlu0 %v672
  %v674 = vpop.xlane.xlu0 %673
  %v675 = vrcp.pop %v662
  %v676 = vrcp.pop %v665
  %v677 = vrcp.pop %v668
  %v678 = vrcp.pop %v671
  %v679 = vrcp.pop %v674
  %v680 = vmul.f32 %v651, %v675
  %v681 = vmul.f32 %v653, %v676
  %v682 = vmul.f32 %v655, %v677
  %v683 = vmul.f32 %v657, %v678
  %v684 = vmul.f32 %v659, %v679
  %v685 = vpack.c.bf16 %v680, %v680
  %v686 = vpack.c.bf16 %v681, %v681
  %v687 = vpack.c.bf16 %v682, %v682
  %v688 = vpack.c.bf16 %v683, %v683
  %v689 = vpack.c.bf16 %v684, %v684
  %v690 = vpack.c.bf16 %v361, %v361
  %v691 = vpack.c.bf16 %v369, %v369
  %v692 = vpack.c.bf16 %v368, %v368
  %v693 = vpack.c.bf16 %v370, %v370
  %v694 = vpack.c.bf16 %v377, %v377
  %vm695 = vcmask 15360
  %v697 = vsel %vm695, %v685, 0
  %vm699 = vcmask 1040384
  %v701 = vsel %vm699, %v690, 0
  %703 = vmatprep.subr.bf16.mxu0 0
  %704 = vmatpush1.bf16.msra.mxu0 %v701
  %705 = vmatprep.subr.bf16.mxu0 0
  %706 = vmatpush1.bf16.msra.mxu0 0
  %707 = vmatprep.subr.bf16.mxu0 0
  %708 = vmatpush1.bf16.msra.mxu0 0
  %709 = vmatprep.subr.bf16.mxu0 0
  %710 = vmatpush1.bf16.msra.mxu0 0
  %711 = vmatprep.subr.bf16.mxu0 0
  %712 = vmatpush1.bf16.msra.mxu0 0
  %713 = vmatprep.subr.bf16.mxu0 0
  %714 = vmatpush1.bf16.msra.mxu0 0
  %715 = vmatprep.subr.bf16.mxu0 0
  %716 = vmatpush1.bf16.msra.mxu0 0
  %717 = vmatprep.subr.bf16.mxu0 0
  %718 = vmatpush1.bf16.msra.mxu0 0
  %719 = vmatprep.subr.bf16.mxu0 0
  %720 = vmatpush1.bf16.msra.mxu0 0
  %721 = vmatprep.subr.bf16.mxu0 0
  %722 = vmatpush1.bf16.msra.mxu0 0
  %723 = vmatprep.subr.bf16.mxu0 0
  %724 = vmatpush1.bf16.msra.mxu0 0
  %725 = vmatprep.subr.bf16.mxu0 0
  %726 = vmatpush1.bf16.msra.mxu0 0
  %727 = vmatprep.subr.bf16.mxu0 0
  %728 = vmatpush1.bf16.msra.mxu0 0
  %729 = vmatprep.subr.bf16.mxu0 0
  %730 = vmatpush1.bf16.msra.mxu0 0
  %731 = vmatprep.subr.bf16.mxu0 0
  %732 = vmatpush1.bf16.msra.mxu0 0
  %733 = vmatprep.subr.bf16.mxu0 0
  %734 = vmatpush1.bf16.msra.mxu0 0
  %735 = vmatprep.mubr.bf16.mxu0 0
  %736 = vmatmul.mubr.bf16.gmra.mrb[0].mxu0 %v697
  %v737 = vpop.f32.mrb[0].mxu0
  %v738 = vadd.f32 0.0, %v737
  %v739 = vpop.f32.mrb[0].mxu0
  %v740 = vpop.f32.mrb[0].mxu0
  %v741 = vpop.f32.mrb[0].mxu0
  %742 = vdwg.mxu0
  %v744 = vsel %vm695, %v686, 0
  %v747 = vsel %vm699, %v691, 0
  %749 = vmatprep.subr.bf16.mxu0 0
  %750 = vmatpush1.bf16.msra.mxu0 %v747
  %751 = vmatprep.subr.bf16.mxu0 0
  %752 = vmatpush1.bf16.msra.mxu0 0
  %753 = vmatprep.subr.bf16.mxu0 0
  %754 = vmatpush1.bf16.msra.mxu0 0
  %755 = vmatprep.subr.bf16.mxu0 0
  %756 = vmatpush1.bf16.msra.mxu0 0
  %757 = vmatprep.subr.bf16.mxu0 0
  %758 = vmatpush1.bf16.msra.mxu0 0
  %759 = vmatprep.subr.bf16.mxu0 0
  %760 = vmatpush1.bf16.msra.mxu0 0
  %761 = vmatprep.subr.bf16.mxu0 0
  %762 = vmatpush1.bf16.msra.mxu0 0
  %763 = vmatprep.subr.bf16.mxu0 0
  %764 = vmatpush1.bf16.msra.mxu0 0
  %765 = vmatprep.subr.bf16.mxu0 0
  %766 = vmatpush1.bf16.msra.mxu0 0
  %767 = vmatprep.subr.bf16.mxu0 0
  %768 = vmatpush1.bf16.msra.mxu0 0
  %769 = vmatprep.subr.bf16.mxu0 0
  %770 = vmatpush1.bf16.msra.mxu0 0
  %771 = vmatprep.subr.bf16.mxu0 0
  %772 = vmatpush1.bf16.msra.mxu0 0
  %773 = vmatprep.subr.bf16.mxu0 0
  %774 = vmatpush1.bf16.msra.mxu0 0
  %775 = vmatprep.subr.bf16.mxu0 0
  %776 = vmatpush1.bf16.msra.mxu0 0
  %777 = vmatprep.subr.bf16.mxu0 0
  %778 = vmatpush1.bf16.msra.mxu0 0
  %779 = vmatprep.subr.bf16.mxu0 0
  %780 = vmatpush1.bf16.msra.mxu0 0
  %781 = vmatprep.mubr.bf16.mxu0 0
  %782 = vmatmul.mubr.bf16.gmra.mrb[0].mxu0 %v744
  %v783 = vpop.f32.mrb[0].mxu0
  %v784 = vadd.f32 0.0, %v783
  %v785 = vpop.f32.mrb[0].mxu0
  %v786 = vpop.f32.mrb[0].mxu0
  %v787 = vpop.f32.mrb[0].mxu0
  %788 = vdwg.mxu0
  %v790 = vsel %vm695, %v687, 0
  %v793 = vsel %vm699, %v692, 0
  %795 = vmatprep.subr.bf16.mxu0 0
  %796 = vmatpush1.bf16.msra.mxu0 %v793
  %797 = vmatprep.subr.bf16.mxu0 0
  %798 = vmatpush1.bf16.msra.mxu0 0
  %799 = vmatprep.subr.bf16.mxu0 0
  %800 = vmatpush1.bf16.msra.mxu0 0
  %801 = vmatprep.subr.bf16.mxu0 0
  %802 = vmatpush1.bf16.msra.mxu0 0
  %803 = vmatprep.subr.bf16.mxu0 0
  %804 = vmatpush1.bf16.msra.mxu0 0
  %805 = vmatprep.subr.bf16.mxu0 0
  %806 = vmatpush1.bf16.msra.mxu0 0
  %807 = vmatprep.subr.bf16.mxu0 0
  %808 = vmatpush1.bf16.msra.mxu0 0
  %809 = vmatprep.subr.bf16.mxu0 0
  %810 = vmatpush1.bf16.msra.mxu0 0
  %811 = vmatprep.subr.bf16.mxu0 0
  %812 = vmatpush1.bf16.msra.mxu0 0
  %813 = vmatprep.subr.bf16.mxu0 0
  %814 = vmatpush1.bf16.msra.mxu0 0
  %815 = vmatprep.subr.bf16.mxu0 0
  %816 = vmatpush1.bf16.msra.mxu0 0
  %817 = vmatprep.subr.bf16.mxu0 0
  %818 = vmatpush1.bf16.msra.mxu0 0
  %819 = vmatprep.subr.bf16.mxu0 0
  %820 = vmatpush1.bf16.msra.mxu0 0
  %821 = vmatprep.subr.bf16.mxu0 0
  %822 = vmatpush1.bf16.msra.mxu0 0
  %823 = vmatprep.subr.bf16.mxu0 0
  %824 = vmatpush1.bf16.msra.mxu0 0
  %825 = vmatprep.subr.bf16.mxu0 0
  %826 = vmatpush1.bf16.msra.mxu0 0
  %827 = vmatprep.mubr.bf16.mxu0 0
  %828 = vmatmul.mubr.bf16.gmra.mrb[0].mxu0 %v790
  %v829 = vpop.f32.mrb[0].mxu0
  %v830 = vadd.f32 0.0, %v829
  %v831 = vpop.f32.mrb[0].mxu0
  %v832 = vpop.f32.mrb[0].mxu0
  %v833 = vpop.f32.mrb[0].mxu0
  %834 = vdwg.mxu0
  %v836 = vsel %vm695, %v688, 0
  %v839 = vsel %vm699, %v693, 0
  %841 = vmatprep.subr.bf16.mxu0 0
  %842 = vmatpush1.bf16.msra.mxu0 %v839
  %843 = vmatprep.subr.bf16.mxu0 0
  %844 = vmatpush1.bf16.msra.mxu0 0
  %845 = vmatprep.subr.bf16.mxu0 0
  %846 = vmatpush1.bf16.msra.mxu0 0
  %847 = vmatprep.subr.bf16.mxu0 0
  %848 = vmatpush1.bf16.msra.mxu0 0
  %849 = vmatprep.subr.bf16.mxu0 0
  %850 = vmatpush1.bf16.msra.mxu0 0
  %851 = vmatprep.subr.bf16.mxu0 0
  %852 = vmatpush1.bf16.msra.mxu0 0
  %853 = vmatprep.subr.bf16.mxu0 0
  %854 = vmatpush1.bf16.msra.mxu0 0
  %855 = vmatprep.subr.bf16.mxu0 0
  %856 = vmatpush1.bf16.msra.mxu0 0
  %857 = vmatprep.subr.bf16.mxu0 0
  %858 = vmatpush1.bf16.msra.mxu0 0
  %859 = vmatprep.subr.bf16.mxu0 0
  %860 = vmatpush1.bf16.msra.mxu0 0
  %861 = vmatprep.subr.bf16.mxu0 0
  %862 = vmatpush1.bf16.msra.mxu0 0
  %863 = vmatprep.subr.bf16.mxu0 0
  %864 = vmatpush1.bf16.msra.mxu0 0
  %865 = vmatprep.subr.bf16.mxu0 0
  %866 = vmatpush1.bf16.msra.mxu0 0
  %867 = vmatprep.subr.bf16.mxu0 0
  %868 = vmatpush1.bf16.msra.mxu0 0
  %869 = vmatprep.subr.bf16.mxu0 0
  %870 = vmatpush1.bf16.msra.mxu0 0
  %871 = vmatprep.subr.bf16.mxu0 0
  %872 = vmatpush1.bf16.msra.mxu0 0
  %873 = vmatprep.mubr.bf16.mxu0 0
  %874 = vmatmul.mubr.bf16.gmra.mrb[0].mxu0 %v836
  %v875 = vpop.f32.mrb[0].mxu0
  %v876 = vadd.f32 0.0, %v875
  %v877 = vpop.f32.mrb[0].mxu0
  %v878 = vpop.f32.mrb[0].mxu0
  %v879 = vpop.f32.mrb[0].mxu0
  %880 = vdwg.mxu0
  %v882 = vsel %vm695, %v689, 0
  %v885 = vsel %vm699, %v694, 0
  %887 = vmatprep.subr.bf16.mxu0 0
  %888 = vmatpush1.bf16.msra.mxu0 %v885
  %889 = vmatprep.subr.bf16.mxu0 0
  %890 = vmatpush1.bf16.msra.mxu0 0
  %891 = vmatprep.subr.bf16.mxu0 0
  %892 = vmatpush1.bf16.msra.mxu0 0
  %893 = vmatprep.subr.bf16.mxu0 0
  %894 = vmatpush1.bf16.msra.mxu0 0
  %895 = vmatprep.subr.bf16.mxu0 0
  %896 = vmatpush1.bf16.msra.mxu0 0
  %897 = vmatprep.subr.bf16.mxu0 0
  %898 = vmatpush1.bf16.msra.mxu0 0
  %899 = vmatprep.subr.bf16.mxu0 0
  %900 = vmatpush1.bf16.msra.mxu0 0
  %901 = vmatprep.subr.bf16.mxu0 0
  %902 = vmatpush1.bf16.msra.mxu0 0
  %903 = vmatprep.subr.bf16.mxu0 0
  %904 = vmatpush1.bf16.msra.mxu0 0
  %905 = vmatprep.subr.bf16.mxu0 0
  %906 = vmatpush1.bf16.msra.mxu0 0
  %907 = vmatprep.subr.bf16.mxu0 0
  %908 = vmatpush1.bf16.msra.mxu0 0
  %909 = vmatprep.subr.bf16.mxu0 0
  %910 = vmatpush1.bf16.msra.mxu0 0
  %911 = vmatprep.subr.bf16.mxu0 0
  %912 = vmatpush1.bf16.msra.mxu0 0
  %913 = vmatprep.subr.bf16.mxu0 0
  %914 = vmatpush1.bf16.msra.mxu0 0
  %915 = vmatprep.subr.bf16.mxu0 0
  %916 = vmatpush1.bf16.msra.mxu0 0
  %917 = vmatprep.subr.bf16.mxu0 0
  %918 = vmatpush1.bf16.msra.mxu0 0
  %919 = vmatprep.mubr.bf16.mxu0 0
  %920 = vmatmul.mubr.bf16.gmra.mrb[0].mxu0 %v882
  %v921 = vpop.f32.mrb[0].mxu0
  %v922 = vadd.f32 0.0, %v921
  %v923 = vpop.f32.mrb[0].mxu0
  %v924 = vpop.f32.mrb[0].mxu0
  %v925 = vpop.f32.mrb[0].mxu0
  %926 = vdwg.mxu0
  %v932 = vcombine.low %v738, %v784
  %v933 = vcombine.low %v830, %v876
  %v935 = vunpack.c.l.s4 1983009808
  %v936 = vunpack.c.0.s8 %v935
  %v937 = vlaneseq
  %v938 = vshrl.u32 %v937, 7
  %v939 = vsub.s32 %v936, %v938
  %v940 = vrot.slane %v932, %v939
  %v942 = vunpack.c.l.s4 1983009808
  %v943 = vunpack.c.0.s8 %v942
  %v944 = vlaneseq
  %v945 = vshrl.u32 %v944, 7
  %v946 = vsub.s32 %v943, %v945
  %v947 = vrot.slane %v933, %v946
  %v948 = vcombine.low %v940, %v947
  %v950 = vunpack.c.l.s4 1983009808
  %v951 = vunpack.c.0.s8 %v950
  %v952 = vlaneseq
  %v953 = vshrl.u32 %v952, 7
  %v954 = vsub.s32 %v951, %v953
  %v955 = vrot.slane %v922, %v954
  %v958 = vpack.c.bf16 %v955, %v948
  %v959 = vld [vmem:[%s7] sm:$0xf]
  %s960 = scalar_lea.vmem %s1, 16
  %v961 = vld [vmem:[%s960] sm:$0xf]
  %v962 = vld [vmem:[%s960 + $0x4] sm:$0xf]
  %v963 = vld [vmem:[%s960 + $0x8] sm:$0xf]
  %v964 = vld [vmem:[%s960 + $0xc] sm:$0xf]
  %s965 = scalar_lea.vmem %s2, 1
  %v966 = vld [vmem:[%s965] sm:$0x1]
  %v968 = vlaneseq
  %v969 = vshrl.u32 %v968, 7
  %v970 = vsub.s32 0, %v969
  %v971 = vrot.slane %v966, %v970
  %v977 = vunpack.c.l.b16 %v961
  %v978 = vunpack.c.l.b16 %v962
  %v979 = vunpack.c.l.b16 %v963
  %v980 = vunpack.c.l.b16 %v964
  %v981 = vpack.c.b16 %v978, %v977
  %v982 = vpack.c.b16 %v980, %v979
  %985 = vmatprep.subr.bf16.mxu0 0
  %986 = vmatpush1.bf16.msra.mxu0 %v981
  %987 = vmatprep.subr.bf16.mxu0 0
  %988 = vmatpush1.bf16.msra.mxu0 %v982
  %989 = vmatprep.subr.bf16.mxu0 0
  %990 = vmatpush1.bf16.msra.mxu0 0
  %991 = vmatprep.subr.bf16.mxu0 0
  %992 = vmatpush1.bf16.msra.mxu0 0
  %993 = vmatprep.subr.bf16.mxu0 0
  %994 = vmatpush1.bf16.msra.mxu0 0
  %995 = vmatprep.subr.bf16.mxu0 0
  %996 = vmatpush1.bf16.msra.mxu0 0
  %997 = vmatprep.subr.bf16.mxu0 0
  %998 = vmatpush1.bf16.msra.mxu0 0
  %999 = vmatprep.subr.bf16.mxu0 0
  %1000 = vmatpush1.bf16.msra.mxu0 0
  %1001 = vmatprep.subr.bf16.mxu0 0
  %1002 = vmatpush1.bf16.msra.mxu0 0
  %1003 = vmatprep.subr.bf16.mxu0 0
  %1004 = vmatpush1.bf16.msra.mxu0 0
  %1005 = vmatprep.subr.bf16.mxu0 0
  %1006 = vmatpush1.bf16.msra.mxu0 0
  %1007 = vmatprep.subr.bf16.mxu0 0
  %1008 = vmatpush1.bf16.msra.mxu0 0
  %1009 = vmatprep.subr.bf16.mxu0 0
  %1010 = vmatpush1.bf16.msra.mxu0 0
  %1011 = vmatprep.subr.bf16.mxu0 0
  %1012 = vmatpush1.bf16.msra.mxu0 0
  %1013 = vmatprep.subr.bf16.mxu0 0
  %1014 = vmatpush1.bf16.msra.mxu0 0
  %1015 = vmatprep.subr.bf16.mxu0 0
  %1016 = vmatpush1.bf16.msra.mxu0 0
  %1017 = vmatprep.mubr.bf16.mxu0 0
  %1018 = vmatmul.mubr.bf16.gmra.mrb[0].mxu0 %v119
  %v1019 = vpop.f32.mrb[0].mxu0
  %v1020 = vadd.f32 %v971, %v1019
  %v1021 = vpop.f32.mrb[0].mxu0
  %v1022 = vpop.f32.mrb[0].mxu0
  %v1023 = vadd.f32 %v971, %v1022
  %v1024 = vpop.f32.mrb[0].mxu0
  %1025 = vdwg.mxu0
  %v1028 = vcombine.high %v1020, %v1020
  %v1030 = vunpack.c.l.s4 1983009808
  %v1031 = vunpack.c.0.s8 %v1030
  %v1032 = vlaneseq
  %v1033 = vshrl.u32 %v1032, 7
  %v1034 = vsub.s32 %v1031, %v1033
  %v1035 = vrot.slane %v1020, %v1034
  %v1037 = vunpack.c.l.s4 1983009808
  %v1038 = vunpack.c.0.s8 %v1037
  %v1039 = vlaneseq
  %v1040 = vshrl.u32 %v1039, 7
  %v1041 = vsub.s32 %v1038, %v1040
  %v1042 = vrot.slane %v1028, %v1041
  %v1043 = vcombine.high %v1035, %v1035
  %v1044 = vcombine.high %v1042, %v1042
  %v1046 = vunpack.c.l.s4 1983009808
  %v1047 = vunpack.c.0.s8 %v1046
  %v1048 = vlaneseq
  %v1049 = vshrl.u32 %v1048, 7
  %v1050 = vsub.s32 %v1047, %v1049
  %v1051 = vrot.slane %v1023, %v1050
  %s1057 = scalar_lea.vmem %s3, 16
  %v1058 = vld [vmem:[%s1057] sm:$0xf]
  %v1059 = vld [vmem:[%s1057 + $0x4] sm:$0xf]
  %v1060 = vld [vmem:[%s1057 + $0x8] sm:$0xf]
  %v1061 = vld [vmem:[%s1057 + $0xc] sm:$0xf]
  %s1062 = scalar_lea.vmem %s4, 1
  %v1063 = vld [vmem:[%s1062] sm:$0x1]
  %v1065 = vlaneseq
  %v1066 = vshrl.u32 %v1065, 7
  %v1067 = vsub.s32 0, %v1066
  %v1068 = vrot.slane %v1063, %v1067
  %v1074 = vunpack.c.l.b16 %v1058
  %v1075 = vunpack.c.l.b16 %v1059
  %v1076 = vunpack.c.l.b16 %v1060
  %v1077 = vunpack.c.l.b16 %v1061
  %v1078 = vpack.c.b16 %v1075, %v1074
  %v1079 = vpack.c.b16 %v1077, %v1076
  %1082 = vmatprep.subr.bf16.mxu0 0
  %1083 = vmatpush1.bf16.msra.mxu0 %v1078
  %1084 = vmatprep.subr.bf16.mxu0 0
  %1085 = vmatpush1.bf16.msra.mxu0 %v1079
  %1086 = vmatprep.subr.bf16.mxu0 0
  %1087 = vmatpush1.bf16.msra.mxu0 0
  %1088 = vmatprep.subr.bf16.mxu0 0
  %1089 = vmatpush1.bf16.msra.mxu0 0
  %1090 = vmatprep.subr.bf16.mxu0 0
  %1091 = vmatpush1.bf16.msra.mxu0 0
  %1092 = vmatprep.subr.bf16.mxu0 0
  %1093 = vmatpush1.bf16.msra.mxu0 0
  %1094 = vmatprep.subr.bf16.mxu0 0
  %1095 = vmatpush1.bf16.msra.mxu0 0
  %1096 = vmatprep.subr.bf16.mxu0 0
  %1097 = vmatpush1.bf16.msra.mxu0 0
  %1098 = vmatprep.subr.bf16.mxu0 0
  %1099 = vmatpush1.bf16.msra.mxu0 0
  %1100 = vmatprep.subr.bf16.mxu0 0
  %1101 = vmatpush1.bf16.msra.mxu0 0
  %1102 = vmatprep.subr.bf16.mxu0 0
  %1103 = vmatpush1.bf16.msra.mxu0 0
  %1104 = vmatprep.subr.bf16.mxu0 0
  %1105 = vmatpush1.bf16.msra.mxu0 0
  %1106 = vmatprep.subr.bf16.mxu0 0
  %1107 = vmatpush1.bf16.msra.mxu0 0
  %1108 = vmatprep.subr.bf16.mxu0 0
  %1109 = vmatpush1.bf16.msra.mxu0 0
  %1110 = vmatprep.subr.bf16.mxu0 0
  %1111 = vmatpush1.bf16.msra.mxu0 0
  %1112 = vmatprep.subr.bf16.mxu0 0
  %1113 = vmatpush1.bf16.msra.mxu0 0
  %1114 = vmatprep.mubr.bf16.mxu0 0
  %1115 = vmatmul.mubr.bf16.gmra.mrb[0].mxu0 %v119
  %v1116 = vpop.f32.mrb[0].mxu0
  %v1117 = vadd.f32 %v1068, %v1116
  %v1118 = vpop.f32.mrb[0].mxu0
  %v1119 = vpop.f32.mrb[0].mxu0
  %v1120 = vadd.f32 %v1068, %v1119
  %v1121 = vpop.f32.mrb[0].mxu0
  %1122 = vdwg.mxu0
  %v1125 = vcombine.high %v1117, %v1117
  %v1127 = vunpack.c.l.s4 1983009808
  %v1128 = vunpack.c.0.s8 %v1127
  %v1129 = vlaneseq
  %v1130 = vshrl.u32 %v1129, 7
  %v1131 = vsub.s32 %v1128, %v1130
  %v1132 = vrot.slane %v1117, %v1131
  %v1134 = vunpack.c.l.s4 1983009808
  %v1135 = vunpack.c.0.s8 %v1134
  %v1136 = vlaneseq
  %v1137 = vshrl.u32 %v1136, 7
  %v1138 = vsub.s32 %v1135, %v1137
  %v1139 = vrot.slane %v1125, %v1138
  %v1140 = vcombine.high %v1132, %v1132
  %v1141 = vcombine.high %v1139, %v1139
  %v1143 = vunpack.c.l.s4 1983009808
  %v1144 = vunpack.c.0.s8 %v1143
  %v1145 = vlaneseq
  %v1146 = vshrl.u32 %v1145, 7
  %v1147 = vsub.s32 %v1144, %v1146
  %v1148 = vrot.slane %v1120, %v1147
  %s1154 = scalar_lea.vmem %s5, 16
  %v1155 = vld [vmem:[%s1154] sm:$0xf]
  %v1156 = vld [vmem:[%s1154 + $0x4] sm:$0xf]
  %v1157 = vld [vmem:[%s1154 + $0x8] sm:$0xf]
  %v1158 = vld [vmem:[%s1154 + $0xc] sm:$0xf]
  %s1159 = scalar_lea.vmem %s6, 1
  %v1160 = vld [vmem:[%s1159] sm:$0x1]
  %v1162 = vlaneseq
  %v1163 = vshrl.u32 %v1162, 7
  %v1164 = vsub.s32 0, %v1163
  %v1165 = vrot.slane %v1160, %v1164
  %v1171 = vunpack.c.l.b16 %v1155
  %v1172 = vunpack.c.l.b16 %v1156
  %v1173 = vunpack.c.l.b16 %v1157
  %v1174 = vunpack.c.l.b16 %v1158
  %v1175 = vpack.c.b16 %v1172, %v1171
  %v1176 = vpack.c.b16 %v1174, %v1173
  %1179 = vmatprep.subr.bf16.mxu0 0
  %1180 = vmatpush1.bf16.msra.mxu0 %v1175
  %1181 = vmatprep.subr.bf16.mxu0 0
  %1182 = vmatpush1.bf16.msra.mxu0 %v1176
  %1183 = vmatprep.subr.bf16.mxu0 0
  %1184 = vmatpush1.bf16.msra.mxu0 0
  %1185 = vmatprep.subr.bf16.mxu0 0
  %1186 = vmatpush1.bf16.msra.mxu0 0
  %1187 = vmatprep.subr.bf16.mxu0 0
  %1188 = vmatpush1.bf16.msra.mxu0 0
  %1189 = vmatprep.subr.bf16.mxu0 0
  %1190 = vmatpush1.bf16.msra.mxu0 0
  %1191 = vmatprep.subr.bf16.mxu0 0
  %1192 = vmatpush1.bf16.msra.mxu0 0
  %1193 = vmatprep.subr.bf16.mxu0 0
  %1194 = vmatpush1.bf16.msra.mxu0 0
  %1195 = vmatprep.subr.bf16.mxu0 0
  %1196 = vmatpush1.bf16.msra.mxu0 0
  %1197 = vmatprep.subr.bf16.mxu0 0
  %1198 = vmatpush1.bf16.msra.mxu0 0
  %1199 = vmatprep.subr.bf16.mxu0 0
  %1200 = vmatpush1.bf16.msra.mxu0 0
  %1201 = vmatprep.subr.bf16.mxu0 0
  %1202 = vmatpush1.bf16.msra.mxu0 0
  %1203 = vmatprep.subr.bf16.mxu0 0
  %1204 = vmatpush1.bf16.msra.mxu0 0
  %1205 = vmatprep.subr.bf16.mxu0 0
  %1206 = vmatpush1.bf16.msra.mxu0 0
  %1207 = vmatprep.subr.bf16.mxu0 0
  %1208 = vmatpush1.bf16.msra.mxu0 0
  %1209 = vmatprep.subr.bf16.mxu0 0
  %1210 = vmatpush1.bf16.msra.mxu0 0
  %1211 = vmatprep.mubr.bf16.mxu0 0
  %1212 = vmatmul.mubr.bf16.gmra.mrb[0].mxu0 %v119
  %v1213 = vpop.f32.mrb[0].mxu0
  %v1214 = vadd.f32 %v1165, %v1213
  %v1215 = vpop.f32.mrb[0].mxu0
  %v1216 = vpop.f32.mrb[0].mxu0
  %v1217 = vadd.f32 %v1165, %v1216
  %v1218 = vpop.f32.mrb[0].mxu0
  %1219 = vdwg.mxu0
  %v1222 = vcombine.high %v1214, %v1214
  %v1224 = vunpack.c.l.s4 1983009808
  %v1225 = vunpack.c.0.s8 %v1224
  %v1226 = vlaneseq
  %v1227 = vshrl.u32 %v1226, 7
  %v1228 = vsub.s32 %v1225, %v1227
  %v1229 = vrot.slane %v1214, %v1228
  %v1231 = vunpack.c.l.s4 1983009808
  %v1232 = vunpack.c.0.s8 %v1231
  %v1233 = vlaneseq
  %v1234 = vshrl.u32 %v1233, 7
  %v1235 = vsub.s32 %v1232, %v1234
  %v1236 = vrot.slane %v1222, %v1235
  %v1237 = vcombine.high %v1229, %v1229
  %v1238 = vcombine.high %v1236, %v1236
  %v1240 = vunpack.c.l.s4 1983009808
  %v1241 = vunpack.c.0.s8 %v1240
  %v1242 = vlaneseq
  %v1243 = vshrl.u32 %v1242, 7
  %v1244 = vsub.s32 %v1241, %v1243
  %v1245 = vrot.slane %v1217, %v1244
  %v1251 = vpack.c.bf16 %v1035, %v1035
  %v1252 = vpack.c.bf16 %v1043, %v1043
  %v1253 = vpack.c.bf16 %v1042, %v1042
  %v1254 = vpack.c.bf16 %v1044, %v1044
  %v1255 = vpack.c.bf16 %v1051, %v1051
  %v1256 = vpack.c.bf16 %v1132, %v1132
  %v1257 = vpack.c.bf16 %v1140, %v1140
  %v1258 = vpack.c.bf16 %v1139, %v1139
  %v1259 = vpack.c.bf16 %v1141, %v1141
  %v1260 = vpack.c.bf16 %v1148, %v1148
  %v1262 = vsel %vm393, %v1251, 0
  %v1265 = vsel %vm393, %v1256, 0
  %1267 = vmatprep.subr.bf16.mxu0 0
  %1268 = vmatpush1.bf16.xpose.msra.mxu0 %v1265
  %1269 = vmatprep.subr.bf16.mxu0 0
  %1270 = vmatpush1.bf16.xpose.msra.mxu0 0
  %1271 = vmatprep.subr.bf16.mxu0 0
  %1272 = vmatpush1.bf16.xpose.msra.mxu0 0
  %1273 = vmatprep.subr.bf16.mxu0 0
  %1274 = vmatpush1.bf16.xpose.msra.mxu0 0
  %1275 = vmatprep.subr.bf16.mxu0 0
  %1276 = vmatpush1.bf16.xpose.msra.mxu0 0
  %1277 = vmatprep.subr.bf16.mxu0 0
  %1278 = vmatpush1.bf16.xpose.msra.mxu0 0
  %1279 = vmatprep.subr.bf16.mxu0 0
  %1280 = vmatpush1.bf16.xpose.msra.mxu0 0
  %1281 = vmatprep.subr.bf16.mxu0 0
  %1282 = vmatpush1.bf16.xpose.msra.mxu0 0
  %1283 = vmatprep.subr.bf16.mxu0 0
  %1284 = vmatpush1.bf16.xpose.msra.mxu0 0
  %1285 = vmatprep.subr.bf16.mxu0 0
  %1286 = vmatpush1.bf16.xpose.msra.mxu0 0
  %1287 = vmatprep.subr.bf16.mxu0 0
  %1288 = vmatpush1.bf16.xpose.msra.mxu0 0
  %1289 = vmatprep.subr.bf16.mxu0 0
  %1290 = vmatpush1.bf16.xpose.msra.mxu0 0
  %1291 = vmatprep.subr.bf16.mxu0 0
  %1292 = vmatpush1.bf16.xpose.msra.mxu0 0
  %1293 = vmatprep.subr.bf16.mxu0 0
  %1294 = vmatpush1.bf16.xpose.msra.mxu0 0
  %1295 = vmatprep.subr.bf16.mxu0 0
  %1296 = vmatpush1.bf16.xpose.msra.mxu0 0
  %1297 = vmatprep.subr.bf16.mxu0 0
  %1298 = vmatpush1.bf16.xpose.msra.mxu0 0
  %1299 = vmatprep.mubr.bf16.mxu0 0
  %1300 = vmatmul.mubr.bf16.gmra.mrb[0].mxu0 %v1262
  %v1301 = vpop.f32.mrb[0].mxu0
  %v1302 = vadd.f32 0.0, %v1301
  %v1303 = vpop.f32.mrb[0].mxu0
  %v1304 = vpop.f32.mrb[0].mxu0
  %v1305 = vpop.f32.mrb[0].mxu0
  %1306 = vdwg.mxu0
  %v1308 = vsel %vm393, %v1252, 0
  %v1311 = vsel %vm393, %v1257, 0
  %1313 = vmatprep.subr.bf16.mxu0 0
  %1314 = vmatpush1.bf16.xpose.msra.mxu0 %v1311
  %1315 = vmatprep.subr.bf16.mxu0 0
  %1316 = vmatpush1.bf16.xpose.msra.mxu0 0
  %1317 = vmatprep.subr.bf16.mxu0 0
  %1318 = vmatpush1.bf16.xpose.msra.mxu0 0
  %1319 = vmatprep.subr.bf16.mxu0 0
  %1320 = vmatpush1.bf16.xpose.msra.mxu0 0
  %1321 = vmatprep.subr.bf16.mxu0 0
  %1322 = vmatpush1.bf16.xpose.msra.mxu0 0
  %1323 = vmatprep.subr.bf16.mxu0 0
  %1324 = vmatpush1.bf16.xpose.msra.mxu0 0
  %1325 = vmatprep.subr.bf16.mxu0 0
  %1326 = vmatpush1.bf16.xpose.msra.mxu0 0
  %1327 = vmatprep.subr.bf16.mxu0 0
  %1328 = vmatpush1.bf16.xpose.msra.mxu0 0
  %1329 = vmatprep.subr.bf16.mxu0 0
  %1330 = vmatpush1.bf16.xpose.msra.mxu0 0
  %1331 = vmatprep.subr.bf16.mxu0 0
  %1332 = vmatpush1.bf16.xpose.msra.mxu0 0
  %1333 = vmatprep.subr.bf16.mxu0 0
  %1334 = vmatpush1.bf16.xpose.msra.mxu0 0
  %1335 = vmatprep.subr.bf16.mxu0 0
  %1336 = vmatpush1.bf16.xpose.msra.mxu0 0
  %1337 = vmatprep.subr.bf16.mxu0 0
  %1338 = vmatpush1.bf16.xpose.msra.mxu0 0
  %1339 = vmatprep.subr.bf16.mxu0 0
  %1340 = vmatpush1.bf16.xpose.msra.mxu0 0
  %1341 = vmatprep.subr.bf16.mxu0 0
  %1342 = vmatpush1.bf16.xpose.msra.mxu0 0
  %1343 = vmatprep.subr.bf16.mxu0 0
  %1344 = vmatpush1.bf16.xpose.msra.mxu0 0
  %1345 = vmatprep.mubr.bf16.mxu0 0
  %1346 = vmatmul.mubr.bf16.gmra.mrb[0].mxu0 %v1308
  %v1347 = vpop.f32.mrb[0].mxu0
  %v1348 = vadd.f32 0.0, %v1347
  %v1349 = vpop.f32.mrb[0].mxu0
  %v1350 = vpop.f32.mrb[0].mxu0
  %v1351 = vpop.f32.mrb[0].mxu0
  %1352 = vdwg.mxu0
  %v1354 = vsel %vm393, %v1253, 0
  %v1357 = vsel %vm393, %v1258, 0
  %1359 = vmatprep.subr.bf16.mxu0 0
  %1360 = vmatpush1.bf16.xpose.msra.mxu0 %v1357
  %1361 = vmatprep.subr.bf16.mxu0 0
  %1362 = vmatpush1.bf16.xpose.msra.mxu0 0
  %1363 = vmatprep.subr.bf16.mxu0 0
  %1364 = vmatpush1.bf16.xpose.msra.mxu0 0
  %1365 = vmatprep.subr.bf16.mxu0 0
  %1366 = vmatpush1.bf16.xpose.msra.mxu0 0
  %1367 = vmatprep.subr.bf16.mxu0 0
  %1368 = vmatpush1.bf16.xpose.msra.mxu0 0
  %1369 = vmatprep.subr.bf16.mxu0 0
  %1370 = vmatpush1.bf16.xpose.msra.mxu0 0
  %1371 = vmatprep.subr.bf16.mxu0 0
  %1372 = vmatpush1.bf16.xpose.msra.mxu0 0
  %1373 = vmatprep.subr.bf16.mxu0 0
  %1374 = vmatpush1.bf16.xpose.msra.mxu0 0
  %1375 = vmatprep.subr.bf16.mxu0 0
  %1376 = vmatpush1.bf16.xpose.msra.mxu0 0
  %1377 = vmatprep.subr.bf16.mxu0 0
  %1378 = vmatpush1.bf16.xpose.msra.mxu0 0
  %1379 = vmatprep.subr.bf16.mxu0 0
  %1380 = vmatpush1.bf16.xpose.msra.mxu0 0
  %1381 = vmatprep.subr.bf16.mxu0 0
  %1382 = vmatpush1.bf16.xpose.msra.mxu0 0
  %1383 = vmatprep.subr.bf16.mxu0 0
  %1384 = vmatpush1.bf16.xpose.msra.mxu0 0
  %1385 = vmatprep.subr.bf16.mxu0 0
  %1386 = vmatpush1.bf16.xpose.msra.mxu0 0
  %1387 = vmatprep.subr.bf16.mxu0 0
  %1388 = vmatpush1.bf16.xpose.msra.mxu0 0
  %1389 = vmatprep.subr.bf16.mxu0 0
  %1390 = vmatpush1.bf16.xpose.msra.mxu0 0
  %1391 = vmatprep.mubr.bf16.mxu0 0
  %1392 = vmatmul.mubr.bf16.gmra.mrb[0].mxu0 %v1354
  %v1393 = vpop.f32.mrb[0].mxu0
  %v1394 = vadd.f32 0.0, %v1393
  %v1395 = vpop.f32.mrb[0].mxu0
  %v1396 = vpop.f32.mrb[0].mxu0
  %v1397 = vpop.f32.mrb[0].mxu0
  %1398 = vdwg.mxu0
  %v1400 = vsel %vm393, %v1254, 0
  %v1403 = vsel %vm393, %v1259, 0
  %1405 = vmatprep.subr.bf16.mxu0 0
  %1406 = vmatpush1.bf16.xpose.msra.mxu0 %v1403
  %1407 = vmatprep.subr.bf16.mxu0 0
  %1408 = vmatpush1.bf16.xpose.msra.mxu0 0
  %1409 = vmatprep.subr.bf16.mxu0 0
  %1410 = vmatpush1.bf16.xpose.msra.mxu0 0
  %1411 = vmatprep.subr.bf16.mxu0 0
  %1412 = vmatpush1.bf16.xpose.msra.mxu0 0
  %1413 = vmatprep.subr.bf16.mxu0 0
  %1414 = vmatpush1.bf16.xpose.msra.mxu0 0
  %1415 = vmatprep.subr.bf16.mxu0 0
  %1416 = vmatpush1.bf16.xpose.msra.mxu0 0
  %1417 = vmatprep.subr.bf16.mxu0 0
  %1418 = vmatpush1.bf16.xpose.msra.mxu0 0
  %1419 = vmatprep.subr.bf16.mxu0 0
  %1420 = vmatpush1.bf16.xpose.msra.mxu0 0
  %1421 = vmatprep.subr.bf16.mxu0 0
  %1422 = vmatpush1.bf16.xpose.msra.mxu0 0
  %1423 = vmatprep.subr.bf16.mxu0 0
  %1424 = vmatpush1.bf16.xpose.msra.mxu0 0
  %1425 = vmatprep.subr.bf16.mxu0 0
  %1426 = vmatpush1.bf16.xpose.msra.mxu0 0
  %1427 = vmatprep.subr.bf16.mxu0 0
  %1428 = vmatpush1.bf16.xpose.msra.mxu0 0
  %1429 = vmatprep.subr.bf16.mxu0 0
  %1430 = vmatpush1.bf16.xpose.msra.mxu0 0
  %1431 = vmatprep.subr.bf16.mxu0 0
  %1432 = vmatpush1.bf16.xpose.msra.mxu0 0
  %1433 = vmatprep.subr.bf16.mxu0 0
  %1434 = vmatpush1.bf16.xpose.msra.mxu0 0
  %1435 = vmatprep.subr.bf16.mxu0 0
  %1436 = vmatpush1.bf16.xpose.msra.mxu0 0
  %1437 = vmatprep.mubr.bf16.mxu0 0
  %1438 = vmatmul.mubr.bf16.gmra.mrb[0].mxu0 %v1400
  %v1439 = vpop.f32.mrb[0].mxu0
  %v1440 = vadd.f32 0.0, %v1439
  %v1441 = vpop.f32.mrb[0].mxu0
  %v1442 = vpop.f32.mrb[0].mxu0
  %v1443 = vpop.f32.mrb[0].mxu0
  %1444 = vdwg.mxu0
  %v1446 = vsel %vm393, %v1255, 0
  %v1449 = vsel %vm393, %v1260, 0
  %1451 = vmatprep.subr.bf16.mxu0 0
  %1452 = vmatpush1.bf16.xpose.msra.mxu0 %v1449
  %1453 = vmatprep.subr.bf16.mxu0 0
  %1454 = vmatpush1.bf16.xpose.msra.mxu0 0
  %1455 = vmatprep.subr.bf16.mxu0 0
  %1456 = vmatpush1.bf16.xpose.msra.mxu0 0
  %1457 = vmatprep.subr.bf16.mxu0 0
  %1458 = vmatpush1.bf16.xpose.msra.mxu0 0
  %1459 = vmatprep.subr.bf16.mxu0 0
  %1460 = vmatpush1.bf16.xpose.msra.mxu0 0
  %1461 = vmatprep.subr.bf16.mxu0 0
  %1462 = vmatpush1.bf16.xpose.msra.mxu0 0
  %1463 = vmatprep.subr.bf16.mxu0 0
  %1464 = vmatpush1.bf16.xpose.msra.mxu0 0
  %1465 = vmatprep.subr.bf16.mxu0 0
  %1466 = vmatpush1.bf16.xpose.msra.mxu0 0
  %1467 = vmatprep.subr.bf16.mxu0 0
  %1468 = vmatpush1.bf16.xpose.msra.mxu0 0
  %1469 = vmatprep.subr.bf16.mxu0 0
  %1470 = vmatpush1.bf16.xpose.msra.mxu0 0
  %1471 = vmatprep.subr.bf16.mxu0 0
  %1472 = vmatpush1.bf16.xpose.msra.mxu0 0
  %1473 = vmatprep.subr.bf16.mxu0 0
  %1474 = vmatpush1.bf16.xpose.msra.mxu0 0
  %1475 = vmatprep.subr.bf16.mxu0 0
  %1476 = vmatpush1.bf16.xpose.msra.mxu0 0
  %1477 = vmatprep.subr.bf16.mxu0 0
  %1478 = vmatpush1.bf16.xpose.msra.mxu0 0
  %1479 = vmatprep.subr.bf16.mxu0 0
  %1480 = vmatpush1.bf16.xpose.msra.mxu0 0
  %1481 = vmatprep.subr.bf16.mxu0 0
  %1482 = vmatpush1.bf16.xpose.msra.mxu0 0
  %1483 = vmatprep.mubr.bf16.mxu0 0
  %1484 = vmatmul.mubr.bf16.gmra.mrb[0].mxu0 %v1446
  %v1485 = vpop.f32.mrb[0].mxu0
  %v1486 = vadd.f32 0.0, %v1485
  %v1487 = vpop.f32.mrb[0].mxu0
  %v1488 = vpop.f32.mrb[0].mxu0
  %v1489 = vpop.f32.mrb[0].mxu0
  %1490 = vdwg.mxu0
  %v1491 = vmul.f32 %v1302, 0.35355338
  %v1492 = vmul.f32 %v1348, 0.35355338
  %v1493 = vmul.f32 %v1394, 0.35355338
  %v1494 = vmul.f32 %v1440, 0.35355338
  %v1495 = vmul.f32 %v1486, 0.35355338
  %v1496 = vsel %vm629, %v1491, -inf
  %1497 = vmax.xlane.f32.xlu0 %v1496
  %v1498 = vpop.xlane.xlu0 %1497
  %v1499 = vsel %vm629, %v1492, -inf
  %1500 = vmax.xlane.f32.xlu0 %v1499
  %v1501 = vpop.xlane.xlu0 %1500
  %v1502 = vsel %vm629, %v1493, -inf
  %1503 = vmax.xlane.f32.xlu0 %v1502
  %v1504 = vpop.xlane.xlu0 %1503
  %v1505 = vsel %vm629, %v1494, -inf
  %1506 = vmax.xlane.f32.xlu0 %v1505
  %v1507 = vpop.xlane.xlu0 %1506
  %v1508 = vsel %vm629, %v1495, -inf
  %1509 = vmax.xlane.f32.xlu0 %v1508
  %v1510 = vpop.xlane.xlu0 %1509
  %v1511 = vsub.f32 %v1491, %v1498
  %v1512 = vsub.f32 %v1492, %v1501
  %v1513 = vsub.f32 %v1493, %v1504
  %v1514 = vsub.f32 %v1494, %v1507
  %v1515 = vsub.f32 %v1495, %v1510
  %v1516 = vmul.f32 %v1511, 1.442695
  %v1517 = vpow.pop %v1516
  %v1518 = vmul.f32 %v1512, 1.442695
  %v1519 = vpow.pop %v1518
  %v1520 = vmul.f32 %v1513, 1.442695
  %v1521 = vpow.pop %v1520
  %v1522 = vmul.f32 %v1514, 1.442695
  %v1523 = vpow.pop %v1522
  %v1524 = vmul.f32 %v1515, 1.442695
  %v1525 = vpow.pop %v1524
  %v1526 = vsel %vm629, %v1517, 0.0
  %1527 = vadd.xlane.f32.xlu0 %v1526
  %v1528 = vpop.xlane.xlu0 %1527
  %v1529 = vsel %vm629, %v1519, 0.0
  %1530 = vadd.xlane.f32.xlu0 %v1529
  %v1531 = vpop.xlane.xlu0 %1530
  %v1532 = vsel %vm629, %v1521, 0.0
  %1533 = vadd.xlane.f32.xlu0 %v1532
  %v1534 = vpop.xlane.xlu0 %1533
  %v1535 = vsel %vm629, %v1523, 0.0
  %1536 = vadd.xlane.f32.xlu0 %v1535
  %v1537 = vpop.xlane.xlu0 %1536
  %v1538 = vsel %vm629, %v1525, 0.0
  %1539 = vadd.xlane.f32.xlu0 %v1538
  %v1540 = vpop.xlane.xlu0 %1539
  %v1541 = vrcp.pop %v1528
  %v1542 = vrcp.pop %v1531
  %v1543 = vrcp.pop %v1534
  %v1544 = vrcp.pop %v1537
  %v1545 = vrcp.pop %v1540
  %v1546 = vmul.f32 %v1517, %v1541
  %v1547 = vmul.f32 %v1519, %v1542
  %v1548 = vmul.f32 %v1521, %v1543
  %v1549 = vmul.f32 %v1523, %v1544
  %v1550 = vmul.f32 %v1525, %v1545
  %v1551 = vpack.c.bf16 %v1546, %v1546
  %v1552 = vpack.c.bf16 %v1547, %v1547
  %v1553 = vpack.c.bf16 %v1548, %v1548
  %v1554 = vpack.c.bf16 %v1549, %v1549
  %v1555 = vpack.c.bf16 %v1550, %v1550
  %v1556 = vpack.c.bf16 %v1229, %v1229
  %v1557 = vpack.c.bf16 %v1237, %v1237
  %v1558 = vpack.c.bf16 %v1236, %v1236
  %v1559 = vpack.c.bf16 %v1238, %v1238
  %v1560 = vpack.c.bf16 %v1245, %v1245
  %v1562 = vsel %vm695, %v1551, 0
  %v1565 = vsel %vm699, %v1556, 0
  %1567 = vmatprep.subr.bf16.mxu0 0
  %1568 = vmatpush1.bf16.msra.mxu0 %v1565
  %1569 = vmatprep.subr.bf16.mxu0 0
  %1570 = vmatpush1.bf16.msra.mxu0 0
  %1571 = vmatprep.subr.bf16.mxu0 0
  %1572 = vmatpush1.bf16.msra.mxu0 0
  %1573 = vmatprep.subr.bf16.mxu0 0
  %1574 = vmatpush1.bf16.msra.mxu0 0
  %1575 = vmatprep.subr.bf16.mxu0 0
  %1576 = vmatpush1.bf16.msra.mxu0 0
  %1577 = vmatprep.subr.bf16.mxu0 0
  %1578 = vmatpush1.bf16.msra.mxu0 0
  %1579 = vmatprep.subr.bf16.mxu0 0
  %1580 = vmatpush1.bf16.msra.mxu0 0
  %1581 = vmatprep.subr.bf16.mxu0 0
  %1582 = vmatpush1.bf16.msra.mxu0 0
  %1583 = vmatprep.subr.bf16.mxu0 0
  %1584 = vmatpush1.bf16.msra.mxu0 0
  %1585 = vmatprep.subr.bf16.mxu0 0
  %1586 = vmatpush1.bf16.msra.mxu0 0
  %1587 = vmatprep.subr.bf16.mxu0 0
  %1588 = vmatpush1.bf16.msra.mxu0 0
  %1589 = vmatprep.subr.bf16.mxu0 0
  %1590 = vmatpush1.bf16.msra.mxu0 0
  %1591 = vmatprep.subr.bf16.mxu0 0
  %1592 = vmatpush1.bf16.msra.mxu0 0
  %1593 = vmatprep.subr.bf16.mxu0 0
  %1594 = vmatpush1.bf16.msra.mxu0 0
  %1595 = vmatprep.subr.bf16.mxu0 0
  %1596 = vmatpush1.bf16.msra.mxu0 0
  %1597 = vmatprep.subr.bf16.mxu0 0
  %1598 = vmatpush1.bf16.msra.mxu0 0
  %1599 = vmatprep.mubr.bf16.mxu0 0
  %1600 = vmatmul.mubr.bf16.gmra.mrb[0].mxu0 %v1562
  %v1601 = vpop.f32.mrb[0].mxu0
  %v1602 = vadd.f32 0.0, %v1601
  %v1603 = vpop.f32.mrb[0].mxu0
  %v1604 = vpop.f32.mrb[0].mxu0
  %v1605 = vpop.f32.mrb[0].mxu0
  %1606 = vdwg.mxu0
  %v1608 = vsel %vm695, %v1552, 0
  %v1611 = vsel %vm699, %v1557, 0
  %1613 = vmatprep.subr.bf16.mxu0 0
  %1614 = vmatpush1.bf16.msra.mxu0 %v1611
  %1615 = vmatprep.subr.bf16.mxu0 0
  %1616 = vmatpush1.bf16.msra.mxu0 0
  %1617 = vmatprep.subr.bf16.mxu0 0
  %1618 = vmatpush1.bf16.msra.mxu0 0
  %1619 = vmatprep.subr.bf16.mxu0 0
  %1620 = vmatpush1.bf16.msra.mxu0 0
  %1621 = vmatprep.subr.bf16.mxu0 0
  %1622 = vmatpush1.bf16.msra.mxu0 0
  %1623 = vmatprep.subr.bf16.mxu0 0
  %1624 = vmatpush1.bf16.msra.mxu0 0
  %1625 = vmatprep.subr.bf16.mxu0 0
  %1626 = vmatpush1.bf16.msra.mxu0 0
  %1627 = vmatprep.subr.bf16.mxu0 0
  %1628 = vmatpush1.bf16.msra.mxu0 0
  %1629 = vmatprep.subr.bf16.mxu0 0
  %1630 = vmatpush1.bf16.msra.mxu0 0
  %1631 = vmatprep.subr.bf16.mxu0 0
  %1632 = vmatpush1.bf16.msra.mxu0 0
  %1633 = vmatprep.subr.bf16.mxu0 0
  %1634 = vmatpush1.bf16.msra.mxu0 0
  %1635 = vmatprep.subr.bf16.mxu0 0
  %1636 = vmatpush1.bf16.msra.mxu0 0
  %1637 = vmatprep.subr.bf16.mxu0 0
  %1638 = vmatpush1.bf16.msra.mxu0 0
  %1639 = vmatprep.subr.bf16.mxu0 0
  %1640 = vmatpush1.bf16.msra.mxu0 0
  %1641 = vmatprep.subr.bf16.mxu0 0
  %1642 = vmatpush1.bf16.msra.mxu0 0
  %1643 = vmatprep.subr.bf16.mxu0 0
  %1644 = vmatpush1.bf16.msra.mxu0 0
  %1645 = vmatprep.mubr.bf16.mxu0 0
  %1646 = vmatmul.mubr.bf16.gmra.mrb[0].mxu0 %v1608
  %v1647 = vpop.f32.mrb[0].mxu0
  %v1648 = vadd.f32 0.0, %v1647
  %v1649 = vpop.f32.mrb[0].mxu0
  %v1650 = vpop.f32.mrb[0].mxu0
  %v1651 = vpop.f32.mrb[0].mxu0
  %1652 = vdwg.mxu0
  %v1654 = vsel %vm695, %v1553, 0
  %v1657 = vsel %vm699, %v1558, 0
  %1659 = vmatprep.subr.bf16.mxu0 0
  %1660 = vmatpush1.bf16.msra.mxu0 %v1657
  %1661 = vmatprep.subr.bf16.mxu0 0
  %1662 = vmatpush1.bf16.msra.mxu0 0
  %1663 = vmatprep.subr.bf16.mxu0 0
  %1664 = vmatpush1.bf16.msra.mxu0 0
  %1665 = vmatprep.subr.bf16.mxu0 0
  %1666 = vmatpush1.bf16.msra.mxu0 0
  %1667 = vmatprep.subr.bf16.mxu0 0
  %1668 = vmatpush1.bf16.msra.mxu0 0
  %1669 = vmatprep.subr.bf16.mxu0 0
  %1670 = vmatpush1.bf16.msra.mxu0 0
  %1671 = vmatprep.subr.bf16.mxu0 0
  %1672 = vmatpush1.bf16.msra.mxu0 0
  %1673 = vmatprep.subr.bf16.mxu0 0
  %1674 = vmatpush1.bf16.msra.mxu0 0
  %1675 = vmatprep.subr.bf16.mxu0 0
  %1676 = vmatpush1.bf16.msra.mxu0 0
  %1677 = vmatprep.subr.bf16.mxu0 0
  %1678 = vmatpush1.bf16.msra.mxu0 0
  %1679 = vmatprep.subr.bf16.mxu0 0
  %1680 = vmatpush1.bf16.msra.mxu0 0
  %1681 = vmatprep.subr.bf16.mxu0 0
  %1682 = vmatpush1.bf16.msra.mxu0 0
  %1683 = vmatprep.subr.bf16.mxu0 0
  %1684 = vmatpush1.bf16.msra.mxu0 0
  %1685 = vmatprep.subr.bf16.mxu0 0
  %1686 = vmatpush1.bf16.msra.mxu0 0
  %1687 = vmatprep.subr.bf16.mxu0 0
  %1688 = vmatpush1.bf16.msra.mxu0 0
  %1689 = vmatprep.subr.bf16.mxu0 0
  %1690 = vmatpush1.bf16.msra.mxu0 0
  %1691 = vmatprep.mubr.bf16.mxu0 0
  %1692 = vmatmul.mubr.bf16.gmra.mrb[0].mxu0 %v1654
  %v1693 = vpop.f32.mrb[0].mxu0
  %v1694 = vadd.f32 0.0, %v1693
  %v1695 = vpop.f32.mrb[0].mxu0
  %v1696 = vpop.f32.mrb[0].mxu0
  %v1697 = vpop.f32.mrb[0].mxu0
  %1698 = vdwg.mxu0
  %v1700 = vsel %vm695, %v1554, 0
  %v1703 = vsel %vm699, %v1559, 0
  %1705 = vmatprep.subr.bf16.mxu0 0
  %1706 = vmatpush1.bf16.msra.mxu0 %v1703
  %1707 = vmatprep.subr.bf16.mxu0 0
  %1708 = vmatpush1.bf16.msra.mxu0 0
  %1709 = vmatprep.subr.bf16.mxu0 0
  %1710 = vmatpush1.bf16.msra.mxu0 0
  %1711 = vmatprep.subr.bf16.mxu0 0
  %1712 = vmatpush1.bf16.msra.mxu0 0
  %1713 = vmatprep.subr.bf16.mxu0 0
  %1714 = vmatpush1.bf16.msra.mxu0 0
  %1715 = vmatprep.subr.bf16.mxu0 0
  %1716 = vmatpush1.bf16.msra.mxu0 0
  %1717 = vmatprep.subr.bf16.mxu0 0
  %1718 = vmatpush1.bf16.msra.mxu0 0
  %1719 = vmatprep.subr.bf16.mxu0 0
  %1720 = vmatpush1.bf16.msra.mxu0 0
  %1721 = vmatprep.subr.bf16.mxu0 0
  %1722 = vmatpush1.bf16.msra.mxu0 0
  %1723 = vmatprep.subr.bf16.mxu0 0
  %1724 = vmatpush1.bf16.msra.mxu0 0
  %1725 = vmatprep.subr.bf16.mxu0 0
  %1726 = vmatpush1.bf16.msra.mxu0 0
  %1727 = vmatprep.subr.bf16.mxu0 0
  %1728 = vmatpush1.bf16.msra.mxu0 0
  %1729 = vmatprep.subr.bf16.mxu0 0
  %1730 = vmatpush1.bf16.msra.mxu0 0
  %1731 = vmatprep.subr.bf16.mxu0 0
  %1732 = vmatpush1.bf16.msra.mxu0 0
  %1733 = vmatprep.subr.bf16.mxu0 0
  %1734 = vmatpush1.bf16.msra.mxu0 0
  %1735 = vmatprep.subr.bf16.mxu0 0
  %1736 = vmatpush1.bf16.msra.mxu0 0
  %1737 = vmatprep.mubr.bf16.mxu0 0
  %1738 = vmatmul.mubr.bf16.gmra.mrb[0].mxu0 %v1700
  %v1739 = vpop.f32.mrb[0].mxu0
  %v1740 = vadd.f32 0.0, %v1739
  %v1741 = vpop.f32.mrb[0].mxu0
  %v1742 = vpop.f32.mrb[0].mxu0
  %v1743 = vpop.f32.mrb[0].mxu0
  %1744 = vdwg.mxu0
  %v1746 = vsel %vm695, %v1555, 0
  %v1749 = vsel %vm699, %v1560, 0
  %1751 = vmatprep.subr.bf16.mxu0 0
  %1752 = vmatpush1.bf16.msra.mxu0 %v1749
  %1753 = vmatprep.subr.bf16.mxu0 0
  %1754 = vmatpush1.bf16.msra.mxu0 0
  %1755 = vmatprep.subr.bf16.mxu0 0
  %1756 = vmatpush1.bf16.msra.mxu0 0
  %1757 = vmatprep.subr.bf16.mxu0 0
  %1758 = vmatpush1.bf16.msra.mxu0 0
  %1759 = vmatprep.subr.bf16.mxu0 0
  %1760 = vmatpush1.bf16.msra.mxu0 0
  %1761 = vmatprep.subr.bf16.mxu0 0
  %1762 = vmatpush1.bf16.msra.mxu0 0
  %1763 = vmatprep.subr.bf16.mxu0 0
  %1764 = vmatpush1.bf16.msra.mxu0 0
  %1765 = vmatprep.subr.bf16.mxu0 0
  %1766 = vmatpush1.bf16.msra.mxu0 0
  %1767 = vmatprep.subr.bf16.mxu0 0
  %1768 = vmatpush1.bf16.msra.mxu0 0
  %1769 = vmatprep.subr.bf16.mxu0 0
  %1770 = vmatpush1.bf16.msra.mxu0 0
  %1771 = vmatprep.subr.bf16.mxu0 0
  %1772 = vmatpush1.bf16.msra.mxu0 0
  %1773 = vmatprep.subr.bf16.mxu0 0
  %1774 = vmatpush1.bf16.msra.mxu0 0
  %1775 = vmatprep.subr.bf16.mxu0 0
  %1776 = vmatpush1.bf16.msra.mxu0 0
  %1777 = vmatprep.subr.bf16.mxu0 0
  %1778 = vmatpush1.bf16.msra.mxu0 0
  %1779 = vmatprep.subr.bf16.mxu0 0
  %1780 = vmatpush1.bf16.msra.mxu0 0
  %1781 = vmatprep.subr.bf16.mxu0 0
  %1782 = vmatpush1.bf16.msra.mxu0 0
  %1783 = vmatprep.mubr.bf16.mxu0 0
  %1784 = vmatmul.mubr.bf16.gmra.mrb[0].mxu0 %v1746
  %v1785 = vpop.f32.mrb[0].mxu0
  %v1786 = vadd.f32 0.0, %v1785
  %v1787 = vpop.f32.mrb[0].mxu0
  %v1788 = vpop.f32.mrb[0].mxu0
  %v1789 = vpop.f32.mrb[0].mxu0
  %1790 = vdwg.mxu0
  %v1796 = vcombine.low %v1602, %v1648
  %v1797 = vcombine.low %v1694, %v1740
  %v1799 = vunpack.c.l.s4 1983009808
  %v1800 = vunpack.c.0.s8 %v1799
  %v1801 = vlaneseq
  %v1802 = vshrl.u32 %v1801, 7
  %v1803 = vsub.s32 %v1800, %v1802
  %v1804 = vrot.slane %v1796, %v1803
  %v1806 = vunpack.c.l.s4 1983009808
  %v1807 = vunpack.c.0.s8 %v1806
  %v1808 = vlaneseq
  %v1809 = vshrl.u32 %v1808, 7
  %v1810 = vsub.s32 %v1807, %v1809
  %v1811 = vrot.slane %v1797, %v1810
  %v1812 = vcombine.low %v1804, %v1811
  %v1814 = vunpack.c.l.s4 1983009808
  %v1815 = vunpack.c.0.s8 %v1814
  %v1816 = vlaneseq
  %v1817 = vshrl.u32 %v1816, 7
  %v1818 = vsub.s32 %v1815, %v1817
  %v1819 = vrot.slane %v1786, %v1818
  %v1822 = vpack.c.bf16 %v1819, %v1812
  %s1823 = scalar_lea.vmem %s7, 4
  %v1824 = vld [vmem:[%s1823] sm:$0xf]
  %v1826 = vsel %vm393, %v1822, 0
  %vm1828 = vcmask 1043456
  %v1830 = vsel %vm1828, %v1824, 0
  %1832 = vmatprep.subr.bf16.mxu0 0
  %1833 = vmatpush1.bf16.msra.mxu0 %v1830
  %1834 = vmatprep.subr.bf16.mxu0 0
  %1835 = vmatpush1.bf16.msra.mxu0 0
  %1836 = vmatprep.subr.bf16.mxu0 0
  %1837 = vmatpush1.bf16.msra.mxu0 0
  %1838 = vmatprep.subr.bf16.mxu0 0
  %1839 = vmatpush1.bf16.msra.mxu0 0
  %1840 = vmatprep.subr.bf16.mxu0 0
  %1841 = vmatpush1.bf16.msra.mxu0 0
  %1842 = vmatprep.subr.bf16.mxu0 0
  %1843 = vmatpush1.bf16.msra.mxu0 0
  %1844 = vmatprep.subr.bf16.mxu0 0
  %1845 = vmatpush1.bf16.msra.mxu0 0
  %1846 = vmatprep.subr.bf16.mxu0 0
  %1847 = vmatpush1.bf16.msra.mxu0 0
  %1848 = vmatprep.subr.bf16.mxu0 0
  %1849 = vmatpush1.bf16.msra.mxu0 0
  %1850 = vmatprep.subr.bf16.mxu0 0
  %1851 = vmatpush1.bf16.msra.mxu0 0
  %1852 = vmatprep.subr.bf16.mxu0 0
  %1853 = vmatpush1.bf16.msra.mxu0 0
  %1854 = vmatprep.subr.bf16.mxu0 0
  %1855 = vmatpush1.bf16.msra.mxu0 0
  %1856 = vmatprep.subr.bf16.mxu0 0
  %1857 = vmatpush1.bf16.msra.mxu0 0
  %1858 = vmatprep.subr.bf16.mxu0 0
  %1859 = vmatpush1.bf16.msra.mxu0 0
  %1860 = vmatprep.subr.bf16.mxu0 0
  %1861 = vmatpush1.bf16.msra.mxu0 0
  %1862 = vmatprep.subr.bf16.mxu0 0
  %1863 = vmatpush1.bf16.msra.mxu0 0
  %1864 = vmatprep.mubr.bf16.mxu0 0
  %1865 = vmatmul.mubr.bf16.gmra.mrb[0].mxu0 %v1826
  %v1866 = vpop.f32.mrb[0].mxu0
  %v1867 = vadd.f32 0.0, %v1866
  %v1868 = vpop.f32.mrb[0].mxu0
  %v1869 = vpop.f32.mrb[0].mxu0
  %v1870 = vadd.f32 0.0, %v1869
  %v1871 = vpop.f32.mrb[0].mxu0
  %1872 = vdwg.mxu0
  %v1874 = vsel %vm393, %v958, 0
  %v1877 = vsel %vm1828, %v959, 0
  %1879 = vmatprep.subr.bf16.mxu0 0
  %1880 = vmatpush1.bf16.msra.mxu0 %v1877
  %1881 = vmatprep.subr.bf16.mxu0 0
  %1882 = vmatpush1.bf16.msra.mxu0 0
  %1883 = vmatprep.subr.bf16.mxu0 0
  %1884 = vmatpush1.bf16.msra.mxu0 0
  %1885 = vmatprep.subr.bf16.mxu0 0
  %1886 = vmatpush1.bf16.msra.mxu0 0
  %1887 = vmatprep.subr.bf16.mxu0 0
  %1888 = vmatpush1.bf16.msra.mxu0 0
  %1889 = vmatprep.subr.bf16.mxu0 0
  %1890 = vmatpush1.bf16.msra.mxu0 0
  %1891 = vmatprep.subr.bf16.mxu0 0
  %1892 = vmatpush1.bf16.msra.mxu0 0
  %1893 = vmatprep.subr.bf16.mxu0 0
  %1894 = vmatpush1.bf16.msra.mxu0 0
  %1895 = vmatprep.subr.bf16.mxu0 0
  %1896 = vmatpush1.bf16.msra.mxu0 0
  %1897 = vmatprep.subr.bf16.mxu0 0
  %1898 = vmatpush1.bf16.msra.mxu0 0
  %1899 = vmatprep.subr.bf16.mxu0 0
  %1900 = vmatpush1.bf16.msra.mxu0 0
  %1901 = vmatprep.subr.bf16.mxu0 0
  %1902 = vmatpush1.bf16.msra.mxu0 0
  %1903 = vmatprep.subr.bf16.mxu0 0
  %1904 = vmatpush1.bf16.msra.mxu0 0
  %1905 = vmatprep.subr.bf16.mxu0 0
  %1906 = vmatpush1.bf16.msra.mxu0 0
  %1907 = vmatprep.subr.bf16.mxu0 0
  %1908 = vmatpush1.bf16.msra.mxu0 0
  %1909 = vmatprep.subr.bf16.mxu0 0
  %1910 = vmatpush1.bf16.msra.mxu0 0
  %1911 = vmatprep.mubr.bf16.mxu0 0
  %1912 = vmatmul.mubr.bf16.gmra.mrb[0].mxu0 %v1874
  %v1913 = vpop.f32.mrb[0].mxu0
  %v1914 = vadd.f32 %v1867, %v1913
  %v1915 = vpop.f32.mrb[0].mxu0
  %v1916 = vpop.f32.mrb[0].mxu0
  %v1917 = vadd.f32 %v1870, %v1916
  %v1918 = vpop.f32.mrb[0].mxu0
  %1919 = vdwg.mxu0
  %s1920 = scalar_lea.vmem %s1, 32
  %v1921 = vld [vmem:[%s1920] sm:$0xf]
  %v1922 = vld [vmem:[%s1920 + $0x4] sm:$0xf]
  %v1923 = vld [vmem:[%s1920 + $0x8] sm:$0xf]
  %v1924 = vld [vmem:[%s1920 + $0xc] sm:$0xf]
  %s1925 = scalar_lea.vmem %s2, 2
  %v1926 = vld [vmem:[%s1925] sm:$0x1]
  %v1928 = vlaneseq
  %v1929 = vshrl.u32 %v1928, 7
  %v1930 = vsub.s32 0, %v1929
  %v1931 = vrot.slane %v1926, %v1930
  %v1937 = vunpack.c.l.b16 %v1921
  %v1938 = vunpack.c.l.b16 %v1922
  %v1939 = vunpack.c.l.b16 %v1923
  %v1940 = vunpack.c.l.b16 %v1924
  %v1941 = vpack.c.b16 %v1938, %v1937
  %v1942 = vpack.c.b16 %v1940, %v1939
  %1945 = vmatprep.subr.bf16.mxu0 0
  %1946 = vmatpush1.bf16.msra.mxu0 %v1941
  %1947 = vmatprep.subr.bf16.mxu0 0
  %1948 = vmatpush1.bf16.msra.mxu0 %v1942
  %1949 = vmatprep.subr.bf16.mxu0 0
  %1950 = vmatpush1.bf16.msra.mxu0 0
  %1951 = vmatprep.subr.bf16.mxu0 0
  %1952 = vmatpush1.bf16.msra.mxu0 0
  %1953 = vmatprep.subr.bf16.mxu0 0
  %1954 = vmatpush1.bf16.msra.mxu0 0
  %1955 = vmatprep.subr.bf16.mxu0 0
  %1956 = vmatpush1.bf16.msra.mxu0 0
  %1957 = vmatprep.subr.bf16.mxu0 0
  %1958 = vmatpush1.bf16.msra.mxu0 0
  %1959 = vmatprep.subr.bf16.mxu0 0
  %1960 = vmatpush1.bf16.msra.mxu0 0
  %1961 = vmatprep.subr.bf16.mxu0 0
  %1962 = vmatpush1.bf16.msra.mxu0 0
  %1963 = vmatprep.subr.bf16.mxu0 0
  %1964 = vmatpush1.bf16.msra.mxu0 0
  %1965 = vmatprep.subr.bf16.mxu0 0
  %1966 = vmatpush1.bf16.msra.mxu0 0
  %1967 = vmatprep.subr.bf16.mxu0 0
  %1968 = vmatpush1.bf16.msra.mxu0 0
  %1969 = vmatprep.subr.bf16.mxu0 0
  %1970 = vmatpush1.bf16.msra.mxu0 0
  %1971 = vmatprep.subr.bf16.mxu0 0
  %1972 = vmatpush1.bf16.msra.mxu0 0
  %1973 = vmatprep.subr.bf16.mxu0 0
  %1974 = vmatpush1.bf16.msra.mxu0 0
  %1975 = vmatprep.subr.bf16.mxu0 0
  %1976 = vmatpush1.bf16.msra.mxu0 0
  %1977 = vmatprep.mubr.bf16.mxu0 0
  %1978 = vmatmul.mubr.bf16.gmra.mrb[0].mxu0 %v119
  %v1979 = vpop.f32.mrb[0].mxu0
  %v1980 = vadd.f32 %v1931, %v1979
  %v1981 = vpop.f32.mrb[0].mxu0
  %v1982 = vpop.f32.mrb[0].mxu0
  %v1983 = vadd.f32 %v1931, %v1982
  %v1984 = vpop.f32.mrb[0].mxu0
  %1985 = vdwg.mxu0
  %v1988 = vcombine.high %v1980, %v1980
  %v1990 = vunpack.c.l.s4 1983009808
  %v1991 = vunpack.c.0.s8 %v1990
  %v1992 = vlaneseq
  %v1993 = vshrl.u32 %v1992, 7
  %v1994 = vsub.s32 %v1991, %v1993
  %v1995 = vrot.slane %v1980, %v1994
  %v1997 = vunpack.c.l.s4 1983009808
  %v1998 = vunpack.c.0.s8 %v1997
  %v1999 = vlaneseq
  %v2000 = vshrl.u32 %v1999, 7
  %v2001 = vsub.s32 %v1998, %v2000
  %v2002 = vrot.slane %v1988, %v2001
  %v2003 = vcombine.high %v1995, %v1995
  %v2004 = vcombine.high %v2002, %v2002
  %v2006 = vunpack.c.l.s4 1983009808
  %v2007 = vunpack.c.0.s8 %v2006
  %v2008 = vlaneseq
  %v2009 = vshrl.u32 %v2008, 7
  %v2010 = vsub.s32 %v2007, %v2009
  %v2011 = vrot.slane %v1983, %v2010
  %s2017 = scalar_lea.vmem %s3, 32
  %v2018 = vld [vmem:[%s2017] sm:$0xf]
  %v2019 = vld [vmem:[%s2017 + $0x4] sm:$0xf]
  %v2020 = vld [vmem:[%s2017 + $0x8] sm:$0xf]
  %v2021 = vld [vmem:[%s2017 + $0xc] sm:$0xf]
  %s2022 = scalar_lea.vmem %s4, 2
  %v2023 = vld [vmem:[%s2022] sm:$0x1]
  %v2025 = vlaneseq
  %v2026 = vshrl.u32 %v2025, 7
  %v2027 = vsub.s32 0, %v2026
  %v2028 = vrot.slane %v2023, %v2027
  %v2034 = vunpack.c.l.b16 %v2018
  %v2035 = vunpack.c.l.b16 %v2019
  %v2036 = vunpack.c.l.b16 %v2020
  %v2037 = vunpack.c.l.b16 %v2021
  %v2038 = vpack.c.b16 %v2035, %v2034
  %v2039 = vpack.c.b16 %v2037, %v2036
  %2042 = vmatprep.subr.bf16.mxu0 0
  %2043 = vmatpush1.bf16.msra.mxu0 %v2038
  %2044 = vmatprep.subr.bf16.mxu0 0
  %2045 = vmatpush1.bf16.msra.mxu0 %v2039
  %2046 = vmatprep.subr.bf16.mxu0 0
  %2047 = vmatpush1.bf16.msra.mxu0 0
  %2048 = vmatprep.subr.bf16.mxu0 0
  %2049 = vmatpush1.bf16.msra.mxu0 0
  %2050 = vmatprep.subr.bf16.mxu0 0
  %2051 = vmatpush1.bf16.msra.mxu0 0
  %2052 = vmatprep.subr.bf16.mxu0 0
  %2053 = vmatpush1.bf16.msra.mxu0 0
  %2054 = vmatprep.subr.bf16.mxu0 0
  %2055 = vmatpush1.bf16.msra.mxu0 0
  %2056 = vmatprep.subr.bf16.mxu0 0
  %2057 = vmatpush1.bf16.msra.mxu0 0
  %2058 = vmatprep.subr.bf16.mxu0 0
  %2059 = vmatpush1.bf16.msra.mxu0 0
  %2060 = vmatprep.subr.bf16.mxu0 0
  %2061 = vmatpush1.bf16.msra.mxu0 0
  %2062 = vmatprep.subr.bf16.mxu0 0
  %2063 = vmatpush1.bf16.msra.mxu0 0
  %2064 = vmatprep.subr.bf16.mxu0 0
  %2065 = vmatpush1.bf16.msra.mxu0 0
  %2066 = vmatprep.subr.bf16.mxu0 0
  %2067 = vmatpush1.bf16.msra.mxu0 0
  %2068 = vmatprep.subr.bf16.mxu0 0
  %2069 = vmatpush1.bf16.msra.mxu0 0
  %2070 = vmatprep.subr.bf16.mxu0 0
  %2071 = vmatpush1.bf16.msra.mxu0 0
  %2072 = vmatprep.subr.bf16.mxu0 0
  %2073 = vmatpush1.bf16.msra.mxu0 0
  %2074 = vmatprep.mubr.bf16.mxu0 0
  %2075 = vmatmul.mubr.bf16.gmra.mrb[0].mxu0 %v119
  %v2076 = vpop.f32.mrb[0].mxu0
  %v2077 = vadd.f32 %v2028, %v2076
  %v2078 = vpop.f32.mrb[0].mxu0
  %v2079 = vpop.f32.mrb[0].mxu0
  %v2080 = vadd.f32 %v2028, %v2079
  %v2081 = vpop.f32.mrb[0].mxu0
  %2082 = vdwg.mxu0
  %v2085 = vcombine.high %v2077, %v2077
  %v2087 = vunpack.c.l.s4 1983009808
  %v2088 = vunpack.c.0.s8 %v2087
  %v2089 = vlaneseq
  %v2090 = vshrl.u32 %v2089, 7
  %v2091 = vsub.s32 %v2088, %v2090
  %v2092 = vrot.slane %v2077, %v2091
  %v2094 = vunpack.c.l.s4 1983009808
  %v2095 = vunpack.c.0.s8 %v2094
  %v2096 = vlaneseq
  %v2097 = vshrl.u32 %v2096, 7
  %v2098 = vsub.s32 %v2095, %v2097
  %v2099 = vrot.slane %v2085, %v2098
  %v2100 = vcombine.high %v2092, %v2092
  %v2101 = vcombine.high %v2099, %v2099
  %v2103 = vunpack.c.l.s4 1983009808
  %v2104 = vunpack.c.0.s8 %v2103
  %v2105 = vlaneseq
  %v2106 = vshrl.u32 %v2105, 7
  %v2107 = vsub.s32 %v2104, %v2106
  %v2108 = vrot.slane %v2080, %v2107
  %s2114 = scalar_lea.vmem %s5, 32
  %v2115 = vld [vmem:[%s2114] sm:$0xf]
  %v2116 = vld [vmem:[%s2114 + $0x4] sm:$0xf]
  %v2117 = vld [vmem:[%s2114 + $0x8] sm:$0xf]
  %v2118 = vld [vmem:[%s2114 + $0xc] sm:$0xf]
  %s2119 = scalar_lea.vmem %s6, 2
  %v2120 = vld [vmem:[%s2119] sm:$0x1]
  %v2122 = vlaneseq
  %v2123 = vshrl.u32 %v2122, 7
  %v2124 = vsub.s32 0, %v2123
  %v2125 = vrot.slane %v2120, %v2124
  %v2131 = vunpack.c.l.b16 %v2115
  %v2132 = vunpack.c.l.b16 %v2116
  %v2133 = vunpack.c.l.b16 %v2117
  %v2134 = vunpack.c.l.b16 %v2118
  %v2135 = vpack.c.b16 %v2132, %v2131
  %v2136 = vpack.c.b16 %v2134, %v2133
  %2139 = vmatprep.subr.bf16.mxu0 0
  %2140 = vmatpush1.bf16.msra.mxu0 %v2135
  %2141 = vmatprep.subr.bf16.mxu0 0
  %2142 = vmatpush1.bf16.msra.mxu0 %v2136
  %2143 = vmatprep.subr.bf16.mxu0 0
  %2144 = vmatpush1.bf16.msra.mxu0 0
  %2145 = vmatprep.subr.bf16.mxu0 0
  %2146 = vmatpush1.bf16.msra.mxu0 0
  %2147 = vmatprep.subr.bf16.mxu0 0
  %2148 = vmatpush1.bf16.msra.mxu0 0
  %2149 = vmatprep.subr.bf16.mxu0 0
  %2150 = vmatpush1.bf16.msra.mxu0 0
  %2151 = vmatprep.subr.bf16.mxu0 0
  %2152 = vmatpush1.bf16.msra.mxu0 0
  %2153 = vmatprep.subr.bf16.mxu0 0
  %2154 = vmatpush1.bf16.msra.mxu0 0
  %2155 = vmatprep.subr.bf16.mxu0 0
  %2156 = vmatpush1.bf16.msra.mxu0 0
  %2157 = vmatprep.subr.bf16.mxu0 0
  %2158 = vmatpush1.bf16.msra.mxu0 0
  %2159 = vmatprep.subr.bf16.mxu0 0
  %2160 = vmatpush1.bf16.msra.mxu0 0
  %2161 = vmatprep.subr.bf16.mxu0 0
  %2162 = vmatpush1.bf16.msra.mxu0 0
  %2163 = vmatprep.subr.bf16.mxu0 0
  %2164 = vmatpush1.bf16.msra.mxu0 0
  %2165 = vmatprep.subr.bf16.mxu0 0
  %2166 = vmatpush1.bf16.msra.mxu0 0
  %2167 = vmatprep.subr.bf16.mxu0 0
  %2168 = vmatpush1.bf16.msra.mxu0 0
  %2169 = vmatprep.subr.bf16.mxu0 0
  %2170 = vmatpush1.bf16.msra.mxu0 0
  %2171 = vmatprep.mubr.bf16.mxu0 0
  %2172 = vmatmul.mubr.bf16.gmra.mrb[0].mxu0 %v119
  %v2173 = vpop.f32.mrb[0].mxu0
  %v2174 = vadd.f32 %v2125, %v2173
  %v2175 = vpop.f32.mrb[0].mxu0
  %v2176 = vpop.f32.mrb[0].mxu0
  %v2177 = vadd.f32 %v2125, %v2176
  %v2178 = vpop.f32.mrb[0].mxu0
  %2179 = vdwg.mxu0
  %v2182 = vcombine.high %v2174, %v2174
  %v2184 = vunpack.c.l.s4 1983009808
  %v2185 = vunpack.c.0.s8 %v2184
  %v2186 = vlaneseq
  %v2187 = vshrl.u32 %v2186, 7
  %v2188 = vsub.s32 %v2185, %v2187
  %v2189 = vrot.slane %v2174, %v2188
  %v2191 = vunpack.c.l.s4 1983009808
  %v2192 = vunpack.c.0.s8 %v2191
  %v2193 = vlaneseq
  %v2194 = vshrl.u32 %v2193, 7
  %v2195 = vsub.s32 %v2192, %v2194
  %v2196 = vrot.slane %v2182, %v2195
  %v2197 = vcombine.high %v2189, %v2189
  %v2198 = vcombine.high %v2196, %v2196
  %v2200 = vunpack.c.l.s4 1983009808
  %v2201 = vunpack.c.0.s8 %v2200
  %v2202 = vlaneseq
  %v2203 = vshrl.u32 %v2202, 7
  %v2204 = vsub.s32 %v2201, %v2203
  %v2205 = vrot.slane %v2177, %v2204
  %v2211 = vpack.c.bf16 %v1995, %v1995
  %v2212 = vpack.c.bf16 %v2003, %v2003
  %v2213 = vpack.c.bf16 %v2002, %v2002
  %v2214 = vpack.c.bf16 %v2004, %v2004
  %v2215 = vpack.c.bf16 %v2011, %v2011
  %v2216 = vpack.c.bf16 %v2092, %v2092
  %v2217 = vpack.c.bf16 %v2100, %v2100
  %v2218 = vpack.c.bf16 %v2099, %v2099
  %v2219 = vpack.c.bf16 %v2101, %v2101
  %v2220 = vpack.c.bf16 %v2108, %v2108
  %v2222 = vsel %vm393, %v2211, 0
  %v2225 = vsel %vm393, %v2216, 0
  %2227 = vmatprep.subr.bf16.mxu0 0
  %2228 = vmatpush1.bf16.xpose.msra.mxu0 %v2225
  %2229 = vmatprep.subr.bf16.mxu0 0
  %2230 = vmatpush1.bf16.xpose.msra.mxu0 0
  %2231 = vmatprep.subr.bf16.mxu0 0
  %2232 = vmatpush1.bf16.xpose.msra.mxu0 0
  %2233 = vmatprep.subr.bf16.mxu0 0
  %2234 = vmatpush1.bf16.xpose.msra.mxu0 0
  %2235 = vmatprep.subr.bf16.mxu0 0
  %2236 = vmatpush1.bf16.xpose.msra.mxu0 0
  %2237 = vmatprep.subr.bf16.mxu0 0
  %2238 = vmatpush1.bf16.xpose.msra.mxu0 0
  %2239 = vmatprep.subr.bf16.mxu0 0
  %2240 = vmatpush1.bf16.xpose.msra.mxu0 0
  %2241 = vmatprep.subr.bf16.mxu0 0
  %2242 = vmatpush1.bf16.xpose.msra.mxu0 0
  %2243 = vmatprep.subr.bf16.mxu0 0
  %2244 = vmatpush1.bf16.xpose.msra.mxu0 0
  %2245 = vmatprep.subr.bf16.mxu0 0
  %2246 = vmatpush1.bf16.xpose.msra.mxu0 0
  %2247 = vmatprep.subr.bf16.mxu0 0
  %2248 = vmatpush1.bf16.xpose.msra.mxu0 0
  %2249 = vmatprep.subr.bf16.mxu0 0
  %2250 = vmatpush1.bf16.xpose.msra.mxu0 0
  %2251 = vmatprep.subr.bf16.mxu0 0
  %2252 = vmatpush1.bf16.xpose.msra.mxu0 0
  %2253 = vmatprep.subr.bf16.mxu0 0
  %2254 = vmatpush1.bf16.xpose.msra.mxu0 0
  %2255 = vmatprep.subr.bf16.mxu0 0
  %2256 = vmatpush1.bf16.xpose.msra.mxu0 0
  %2257 = vmatprep.subr.bf16.mxu0 0
  %2258 = vmatpush1.bf16.xpose.msra.mxu0 0
  %2259 = vmatprep.mubr.bf16.mxu0 0
  %2260 = vmatmul.mubr.bf16.gmra.mrb[0].mxu0 %v2222
  %v2261 = vpop.f32.mrb[0].mxu0
  %v2262 = vadd.f32 0.0, %v2261
  %v2263 = vpop.f32.mrb[0].mxu0
  %v2264 = vpop.f32.mrb[0].mxu0
  %v2265 = vpop.f32.mrb[0].mxu0
  %2266 = vdwg.mxu0
  %v2268 = vsel %vm393, %v2212, 0
  %v2271 = vsel %vm393, %v2217, 0
  %2273 = vmatprep.subr.bf16.mxu0 0
  %2274 = vmatpush1.bf16.xpose.msra.mxu0 %v2271
  %2275 = vmatprep.subr.bf16.mxu0 0
  %2276 = vmatpush1.bf16.xpose.msra.mxu0 0
  %2277 = vmatprep.subr.bf16.mxu0 0
  %2278 = vmatpush1.bf16.xpose.msra.mxu0 0
  %2279 = vmatprep.subr.bf16.mxu0 0
  %2280 = vmatpush1.bf16.xpose.msra.mxu0 0
  %2281 = vmatprep.subr.bf16.mxu0 0
  %2282 = vmatpush1.bf16.xpose.msra.mxu0 0
  %2283 = vmatprep.subr.bf16.mxu0 0
  %2284 = vmatpush1.bf16.xpose.msra.mxu0 0
  %2285 = vmatprep.subr.bf16.mxu0 0
  %2286 = vmatpush1.bf16.xpose.msra.mxu0 0
  %2287 = vmatprep.subr.bf16.mxu0 0
  %2288 = vmatpush1.bf16.xpose.msra.mxu0 0
  %2289 = vmatprep.subr.bf16.mxu0 0
  %2290 = vmatpush1.bf16.xpose.msra.mxu0 0
  %2291 = vmatprep.subr.bf16.mxu0 0
  %2292 = vmatpush1.bf16.xpose.msra.mxu0 0
  %2293 = vmatprep.subr.bf16.mxu0 0
  %2294 = vmatpush1.bf16.xpose.msra.mxu0 0
  %2295 = vmatprep.subr.bf16.mxu0 0
  %2296 = vmatpush1.bf16.xpose.msra.mxu0 0
  %2297 = vmatprep.subr.bf16.mxu0 0
  %2298 = vmatpush1.bf16.xpose.msra.mxu0 0
  %2299 = vmatprep.subr.bf16.mxu0 0
  %2300 = vmatpush1.bf16.xpose.msra.mxu0 0
  %2301 = vmatprep.subr.bf16.mxu0 0
  %2302 = vmatpush1.bf16.xpose.msra.mxu0 0
  %2303 = vmatprep.subr.bf16.mxu0 0
  %2304 = vmatpush1.bf16.xpose.msra.mxu0 0
  %2305 = vmatprep.mubr.bf16.mxu0 0
  %2306 = vmatmul.mubr.bf16.gmra.mrb[0].mxu0 %v2268
  %v2307 = vpop.f32.mrb[0].mxu0
  %v2308 = vadd.f32 0.0, %v2307
  %v2309 = vpop.f32.mrb[0].mxu0
  %v2310 = vpop.f32.mrb[0].mxu0
  %v2311 = vpop.f32.mrb[0].mxu0
  %2312 = vdwg.mxu0
  %v2314 = vsel %vm393, %v2213, 0
  %v2317 = vsel %vm393, %v2218, 0
  %2319 = vmatprep.subr.bf16.mxu0 0
  %2320 = vmatpush1.bf16.xpose.msra.mxu0 %v2317
  %2321 = vmatprep.subr.bf16.mxu0 0
  %2322 = vmatpush1.bf16.xpose.msra.mxu0 0
  %2323 = vmatprep.subr.bf16.mxu0 0
  %2324 = vmatpush1.bf16.xpose.msra.mxu0 0
  %2325 = vmatprep.subr.bf16.mxu0 0
  %2326 = vmatpush1.bf16.xpose.msra.mxu0 0
  %2327 = vmatprep.subr.bf16.mxu0 0
  %2328 = vmatpush1.bf16.xpose.msra.mxu0 0
  %2329 = vmatprep.subr.bf16.mxu0 0
  %2330 = vmatpush1.bf16.xpose.msra.mxu0 0
  %2331 = vmatprep.subr.bf16.mxu0 0
  %2332 = vmatpush1.bf16.xpose.msra.mxu0 0
  %2333 = vmatprep.subr.bf16.mxu0 0
  %2334 = vmatpush1.bf16.xpose.msra.mxu0 0
  %2335 = vmatprep.subr.bf16.mxu0 0
  %2336 = vmatpush1.bf16.xpose.msra.mxu0 0
  %2337 = vmatprep.subr.bf16.mxu0 0
  %2338 = vmatpush1.bf16.xpose.msra.mxu0 0
  %2339 = vmatprep.subr.bf16.mxu0 0
  %2340 = vmatpush1.bf16.xpose.msra.mxu0 0
  %2341 = vmatprep.subr.bf16.mxu0 0
  %2342 = vmatpush1.bf16.xpose.msra.mxu0 0
  %2343 = vmatprep.subr.bf16.mxu0 0
  %2344 = vmatpush1.bf16.xpose.msra.mxu0 0
  %2345 = vmatprep.subr.bf16.mxu0 0
  %2346 = vmatpush1.bf16.xpose.msra.mxu0 0
  %2347 = vmatprep.subr.bf16.mxu0 0
  %2348 = vmatpush1.bf16.xpose.msra.mxu0 0
  %2349 = vmatprep.subr.bf16.mxu0 0
  %2350 = vmatpush1.bf16.xpose.msra.mxu0 0
  %2351 = vmatprep.mubr.bf16.mxu0 0
  %2352 = vmatmul.mubr.bf16.gmra.mrb[0].mxu0 %v2314
  %v2353 = vpop.f32.mrb[0].mxu0
  %v2354 = vadd.f32 0.0, %v2353
  %v2355 = vpop.f32.mrb[0].mxu0
  %v2356 = vpop.f32.mrb[0].mxu0
  %v2357 = vpop.f32.mrb[0].mxu0
  %2358 = vdwg.mxu0
  %v2360 = vsel %vm393, %v2214, 0
  %v2363 = vsel %vm393, %v2219, 0
  %2365 = vmatprep.subr.bf16.mxu0 0
  %2366 = vmatpush1.bf16.xpose.msra.mxu0 %v2363
  %2367 = vmatprep.subr.bf16.mxu0 0
  %2368 = vmatpush1.bf16.xpose.msra.mxu0 0
  %2369 = vmatprep.subr.bf16.mxu0 0
  %2370 = vmatpush1.bf16.xpose.msra.mxu0 0
  %2371 = vmatprep.subr.bf16.mxu0 0
  %2372 = vmatpush1.bf16.xpose.msra.mxu0 0
  %2373 = vmatprep.subr.bf16.mxu0 0
  %2374 = vmatpush1.bf16.xpose.msra.mxu0 0
  %2375 = vmatprep.subr.bf16.mxu0 0
  %2376 = vmatpush1.bf16.xpose.msra.mxu0 0
  %2377 = vmatprep.subr.bf16.mxu0 0
  %2378 = vmatpush1.bf16.xpose.msra.mxu0 0
  %2379 = vmatprep.subr.bf16.mxu0 0
  %2380 = vmatpush1.bf16.xpose.msra.mxu0 0
  %2381 = vmatprep.subr.bf16.mxu0 0
  %2382 = vmatpush1.bf16.xpose.msra.mxu0 0
  %2383 = vmatprep.subr.bf16.mxu0 0
  %2384 = vmatpush1.bf16.xpose.msra.mxu0 0
  %2385 = vmatprep.subr.bf16.mxu0 0
  %2386 = vmatpush1.bf16.xpose.msra.mxu0 0
  %2387 = vmatprep.subr.bf16.mxu0 0
  %2388 = vmatpush1.bf16.xpose.msra.mxu0 0
  %2389 = vmatprep.subr.bf16.mxu0 0
  %2390 = vmatpush1.bf16.xpose.msra.mxu0 0
  %2391 = vmatprep.subr.bf16.mxu0 0
  %2392 = vmatpush1.bf16.xpose.msra.mxu0 0
  %2393 = vmatprep.subr.bf16.mxu0 0
  %2394 = vmatpush1.bf16.xpose.msra.mxu0 0
  %2395 = vmatprep.subr.bf16.mxu0 0
  %2396 = vmatpush1.bf16.xpose.msra.mxu0 0
  %2397 = vmatprep.mubr.bf16.mxu0 0
  %2398 = vmatmul.mubr.bf16.gmra.mrb[0].mxu0 %v2360
  %v2399 = vpop.f32.mrb[0].mxu0
  %v2400 = vadd.f32 0.0, %v2399
  %v2401 = vpop.f32.mrb[0].mxu0
  %v2402 = vpop.f32.mrb[0].mxu0
  %v2403 = vpop.f32.mrb[0].mxu0
  %2404 = vdwg.mxu0
  %v2406 = vsel %vm393, %v2215, 0
  %v2409 = vsel %vm393, %v2220, 0
  %2411 = vmatprep.subr.bf16.mxu0 0
  %2412 = vmatpush1.bf16.xpose.msra.mxu0 %v2409
  %2413 = vmatprep.subr.bf16.mxu0 0
  %2414 = vmatpush1.bf16.xpose.msra.mxu0 0
  %2415 = vmatprep.subr.bf16.mxu0 0
  %2416 = vmatpush1.bf16.xpose.msra.mxu0 0
  %2417 = vmatprep.subr.bf16.mxu0 0
  %2418 = vmatpush1.bf16.xpose.msra.mxu0 0
  %2419 = vmatprep.subr.bf16.mxu0 0
  %2420 = vmatpush1.bf16.xpose.msra.mxu0 0
  %2421 = vmatprep.subr.bf16.mxu0 0
  %2422 = vmatpush1.bf16.xpose.msra.mxu0 0
  %2423 = vmatprep.subr.bf16.mxu0 0
  %2424 = vmatpush1.bf16.xpose.msra.mxu0 0
  %2425 = vmatprep.subr.bf16.mxu0 0
  %2426 = vmatpush1.bf16.xpose.msra.mxu0 0
  %2427 = vmatprep.subr.bf16.mxu0 0
  %2428 = vmatpush1.bf16.xpose.msra.mxu0 0
  %2429 = vmatprep.subr.bf16.mxu0 0
  %2430 = vmatpush1.bf16.xpose.msra.mxu0 0
  %2431 = vmatprep.subr.bf16.mxu0 0
  %2432 = vmatpush1.bf16.xpose.msra.mxu0 0
  %2433 = vmatprep.subr.bf16.mxu0 0
  %2434 = vmatpush1.bf16.xpose.msra.mxu0 0
  %2435 = vmatprep.subr.bf16.mxu0 0
  %2436 = vmatpush1.bf16.xpose.msra.mxu0 0
  %2437 = vmatprep.subr.bf16.mxu0 0
  %2438 = vmatpush1.bf16.xpose.msra.mxu0 0
  %2439 = vmatprep.subr.bf16.mxu0 0
  %2440 = vmatpush1.bf16.xpose.msra.mxu0 0
  %2441 = vmatprep.subr.bf16.mxu0 0
  %2442 = vmatpush1.bf16.xpose.msra.mxu0 0
  %2443 = vmatprep.mubr.bf16.mxu0 0
  %2444 = vmatmul.mubr.bf16.gmra.mrb[0].mxu0 %v2406
  %v2445 = vpop.f32.mrb[0].mxu0
  %v2446 = vadd.f32 0.0, %v2445
  %v2447 = vpop.f32.mrb[0].mxu0
  %v2448 = vpop.f32.mrb[0].mxu0
  %v2449 = vpop.f32.mrb[0].mxu0
  %2450 = vdwg.mxu0
  %v2451 = vmul.f32 %v2262, 0.35355338
  %v2452 = vmul.f32 %v2308, 0.35355338
  %v2453 = vmul.f32 %v2354, 0.35355338
  %v2454 = vmul.f32 %v2400, 0.35355338
  %v2455 = vmul.f32 %v2446, 0.35355338
  %v2456 = vsel %vm629, %v2451, -inf
  %2457 = vmax.xlane.f32.xlu0 %v2456
  %v2458 = vpop.xlane.xlu0 %2457
  %v2459 = vsel %vm629, %v2452, -inf
  %2460 = vmax.xlane.f32.xlu0 %v2459
  %v2461 = vpop.xlane.xlu0 %2460
  %v2462 = vsel %vm629, %v2453, -inf
  %2463 = vmax.xlane.f32.xlu0 %v2462
  %v2464 = vpop.xlane.xlu0 %2463
  %v2465 = vsel %vm629, %v2454, -inf
  %2466 = vmax.xlane.f32.xlu0 %v2465
  %v2467 = vpop.xlane.xlu0 %2466
  %v2468 = vsel %vm629, %v2455, -inf
  %2469 = vmax.xlane.f32.xlu0 %v2468
  %v2470 = vpop.xlane.xlu0 %2469
  %v2471 = vsub.f32 %v2451, %v2458
  %v2472 = vsub.f32 %v2452, %v2461
  %v2473 = vsub.f32 %v2453, %v2464
  %v2474 = vsub.f32 %v2454, %v2467
  %v2475 = vsub.f32 %v2455, %v2470
  %v2476 = vmul.f32 %v2471, 1.442695
  %v2477 = vpow.pop %v2476
  %v2478 = vmul.f32 %v2472, 1.442695
  %v2479 = vpow.pop %v2478
  %v2480 = vmul.f32 %v2473, 1.442695
  %v2481 = vpow.pop %v2480
  %v2482 = vmul.f32 %v2474, 1.442695
  %v2483 = vpow.pop %v2482
  %v2484 = vmul.f32 %v2475, 1.442695
  %v2485 = vpow.pop %v2484
  %v2486 = vsel %vm629, %v2477, 0.0
  %2487 = vadd.xlane.f32.xlu0 %v2486
  %v2488 = vpop.xlane.xlu0 %2487
  %v2489 = vsel %vm629, %v2479, 0.0
  %2490 = vadd.xlane.f32.xlu0 %v2489
  %v2491 = vpop.xlane.xlu0 %2490
  %v2492 = vsel %vm629, %v2481, 0.0
  %2493 = vadd.xlane.f32.xlu0 %v2492
  %v2494 = vpop.xlane.xlu0 %2493
  %v2495 = vsel %vm629, %v2483, 0.0
  %2496 = vadd.xlane.f32.xlu0 %v2495
  %v2497 = vpop.xlane.xlu0 %2496
  %v2498 = vsel %vm629, %v2485, 0.0
  %2499 = vadd.xlane.f32.xlu0 %v2498
  %v2500 = vpop.xlane.xlu0 %2499
  %v2501 = vrcp.pop %v2488
  %v2502 = vrcp.pop %v2491
  %v2503 = vrcp.pop %v2494
  %v2504 = vrcp.pop %v2497
  %v2505 = vrcp.pop %v2500
  %v2506 = vmul.f32 %v2477, %v2501
  %v2507 = vmul.f32 %v2479, %v2502
  %v2508 = vmul.f32 %v2481, %v2503
  %v2509 = vmul.f32 %v2483, %v2504
  %v2510 = vmul.f32 %v2485, %v2505
  %v2511 = vpack.c.bf16 %v2506, %v2506
  %v2512 = vpack.c.bf16 %v2507, %v2507
  %v2513 = vpack.c.bf16 %v2508, %v2508
  %v2514 = vpack.c.bf16 %v2509, %v2509
  %v2515 = vpack.c.bf16 %v2510, %v2510
  %v2516 = vpack.c.bf16 %v2189, %v2189
  %v2517 = vpack.c.bf16 %v2197, %v2197
  %v2518 = vpack.c.bf16 %v2196, %v2196
  %v2519 = vpack.c.bf16 %v2198, %v2198
  %v2520 = vpack.c.bf16 %v2205, %v2205
  %v2522 = vsel %vm695, %v2511, 0
  %v2525 = vsel %vm699, %v2516, 0
  %2527 = vmatprep.subr.bf16.mxu0 0
  %2528 = vmatpush1.bf16.msra.mxu0 %v2525
  %2529 = vmatprep.subr.bf16.mxu0 0
  %2530 = vmatpush1.bf16.msra.mxu0 0
  %2531 = vmatprep.subr.bf16.mxu0 0
  %2532 = vmatpush1.bf16.msra.mxu0 0
  %2533 = vmatprep.subr.bf16.mxu0 0
  %2534 = vmatpush1.bf16.msra.mxu0 0
  %2535 = vmatprep.subr.bf16.mxu0 0
  %2536 = vmatpush1.bf16.msra.mxu0 0
  %2537 = vmatprep.subr.bf16.mxu0 0
  %2538 = vmatpush1.bf16.msra.mxu0 0
  %2539 = vmatprep.subr.bf16.mxu0 0
  %2540 = vmatpush1.bf16.msra.mxu0 0
  %2541 = vmatprep.subr.bf16.mxu0 0
  %2542 = vmatpush1.bf16.msra.mxu0 0
  %2543 = vmatprep.subr.bf16.mxu0 0
  %2544 = vmatpush1.bf16.msra.mxu0 0
  %2545 = vmatprep.subr.bf16.mxu0 0
  %2546 = vmatpush1.bf16.msra.mxu0 0
  %2547 = vmatprep.subr.bf16.mxu0 0
  %2548 = vmatpush1.bf16.msra.mxu0 0
  %2549 = vmatprep.subr.bf16.mxu0 0
  %2550 = vmatpush1.bf16.msra.mxu0 0
  %2551 = vmatprep.subr.bf16.mxu0 0
  %2552 = vmatpush1.bf16.msra.mxu0 0
  %2553 = vmatprep.subr.bf16.mxu0 0
  %2554 = vmatpush1.bf16.msra.mxu0 0
  %2555 = vmatprep.subr.bf16.mxu0 0
  %2556 = vmatpush1.bf16.msra.mxu0 0
  %2557 = vmatprep.subr.bf16.mxu0 0
  %2558 = vmatpush1.bf16.msra.mxu0 0
  %2559 = vmatprep.mubr.bf16.mxu0 0
  %2560 = vmatmul.mubr.bf16.gmra.mrb[0].mxu0 %v2522
  %v2561 = vpop.f32.mrb[0].mxu0
  %v2562 = vadd.f32 0.0, %v2561
  %v2563 = vpop.f32.mrb[0].mxu0
  %v2564 = vpop.f32.mrb[0].mxu0
  %v2565 = vpop.f32.mrb[0].mxu0
  %2566 = vdwg.mxu0
  %v2568 = vsel %vm695, %v2512, 0
  %v2571 = vsel %vm699, %v2517, 0
  %2573 = vmatprep.subr.bf16.mxu0 0
  %2574 = vmatpush1.bf16.msra.mxu0 %v2571
  %2575 = vmatprep.subr.bf16.mxu0 0
  %2576 = vmatpush1.bf16.msra.mxu0 0
  %2577 = vmatprep.subr.bf16.mxu0 0
  %2578 = vmatpush1.bf16.msra.mxu0 0
  %2579 = vmatprep.subr.bf16.mxu0 0
  %2580 = vmatpush1.bf16.msra.mxu0 0
  %2581 = vmatprep.subr.bf16.mxu0 0
  %2582 = vmatpush1.bf16.msra.mxu0 0
  %2583 = vmatprep.subr.bf16.mxu0 0
  %2584 = vmatpush1.bf16.msra.mxu0 0
  %2585 = vmatprep.subr.bf16.mxu0 0
  %2586 = vmatpush1.bf16.msra.mxu0 0
  %2587 = vmatprep.subr.bf16.mxu0 0
  %2588 = vmatpush1.bf16.msra.mxu0 0
  %2589 = vmatprep.subr.bf16.mxu0 0
  %2590 = vmatpush1.bf16.msra.mxu0 0
  %2591 = vmatprep.subr.bf16.mxu0 0
  %2592 = vmatpush1.bf16.msra.mxu0 0
  %2593 = vmatprep.subr.bf16.mxu0 0
  %2594 = vmatpush1.bf16.msra.mxu0 0
  %2595 = vmatprep.subr.bf16.mxu0 0
  %2596 = vmatpush1.bf16.msra.mxu0 0
  %2597 = vmatprep.subr.bf16.mxu0 0
  %2598 = vmatpush1.bf16.msra.mxu0 0
  %2599 = vmatprep.subr.bf16.mxu0 0
  %2600 = vmatpush1.bf16.msra.mxu0 0
  %2601 = vmatprep.subr.bf16.mxu0 0
  %2602 = vmatpush1.bf16.msra.mxu0 0
  %2603 = vmatprep.subr.bf16.mxu0 0
  %2604 = vmatpush1.bf16.msra.mxu0 0
  %2605 = vmatprep.mubr.bf16.mxu0 0
  %2606 = vmatmul.mubr.bf16.gmra.mrb[0].mxu0 %v2568
  %v2607 = vpop.f32.mrb[0].mxu0
  %v2608 = vadd.f32 0.0, %v2607
  %v2609 = vpop.f32.mrb[0].mxu0
  %v2610 = vpop.f32.mrb[0].mxu0
  %v2611 = vpop.f32.mrb[0].mxu0
  %2612 = vdwg.mxu0
  %v2614 = vsel %vm695, %v2513, 0
  %v2617 = vsel %vm699, %v2518, 0
  %2619 = vmatprep.subr.bf16.mxu0 0
  %2620 = vmatpush1.bf16.msra.mxu0 %v2617
  %2621 = vmatprep.subr.bf16.mxu0 0
  %2622 = vmatpush1.bf16.msra.mxu0 0
  %2623 = vmatprep.subr.bf16.mxu0 0
  %2624 = vmatpush1.bf16.msra.mxu0 0
  %2625 = vmatprep.subr.bf16.mxu0 0
  %2626 = vmatpush1.bf16.msra.mxu0 0
  %2627 = vmatprep.subr.bf16.mxu0 0
  %2628 = vmatpush1.bf16.msra.mxu0 0
  %2629 = vmatprep.subr.bf16.mxu0 0
  %2630 = vmatpush1.bf16.msra.mxu0 0
  %2631 = vmatprep.subr.bf16.mxu0 0
  %2632 = vmatpush1.bf16.msra.mxu0 0
  %2633 = vmatprep.subr.bf16.mxu0 0
  %2634 = vmatpush1.bf16.msra.mxu0 0
  %2635 = vmatprep.subr.bf16.mxu0 0
  %2636 = vmatpush1.bf16.msra.mxu0 0
  %2637 = vmatprep.subr.bf16.mxu0 0
  %2638 = vmatpush1.bf16.msra.mxu0 0
  %2639 = vmatprep.subr.bf16.mxu0 0
  %2640 = vmatpush1.bf16.msra.mxu0 0
  %2641 = vmatprep.subr.bf16.mxu0 0
  %2642 = vmatpush1.bf16.msra.mxu0 0
  %2643 = vmatprep.subr.bf16.mxu0 0
  %2644 = vmatpush1.bf16.msra.mxu0 0
  %2645 = vmatprep.subr.bf16.mxu0 0
  %2646 = vmatpush1.bf16.msra.mxu0 0
  %2647 = vmatprep.subr.bf16.mxu0 0
  %2648 = vmatpush1.bf16.msra.mxu0 0
  %2649 = vmatprep.subr.bf16.mxu0 0
  %2650 = vmatpush1.bf16.msra.mxu0 0
  %2651 = vmatprep.mubr.bf16.mxu0 0
  %2652 = vmatmul.mubr.bf16.gmra.mrb[0].mxu0 %v2614
  %v2653 = vpop.f32.mrb[0].mxu0
  %v2654 = vadd.f32 0.0, %v2653
  %v2655 = vpop.f32.mrb[0].mxu0
  %v2656 = vpop.f32.mrb[0].mxu0
  %v2657 = vpop.f32.mrb[0].mxu0
  %2658 = vdwg.mxu0
  %v2660 = vsel %vm695, %v2514, 0
  %v2663 = vsel %vm699, %v2519, 0
  %2665 = vmatprep.subr.bf16.mxu0 0
  %2666 = vmatpush1.bf16.msra.mxu0 %v2663
  %2667 = vmatprep.subr.bf16.mxu0 0
  %2668 = vmatpush1.bf16.msra.mxu0 0
  %2669 = vmatprep.subr.bf16.mxu0 0
  %2670 = vmatpush1.bf16.msra.mxu0 0
  %2671 = vmatprep.subr.bf16.mxu0 0
  %2672 = vmatpush1.bf16.msra.mxu0 0
  %2673 = vmatprep.subr.bf16.mxu0 0
  %2674 = vmatpush1.bf16.msra.mxu0 0
  %2675 = vmatprep.subr.bf16.mxu0 0
  %2676 = vmatpush1.bf16.msra.mxu0 0
  %2677 = vmatprep.subr.bf16.mxu0 0
  %2678 = vmatpush1.bf16.msra.mxu0 0
  %2679 = vmatprep.subr.bf16.mxu0 0
  %2680 = vmatpush1.bf16.msra.mxu0 0
  %2681 = vmatprep.subr.bf16.mxu0 0
  %2682 = vmatpush1.bf16.msra.mxu0 0
  %2683 = vmatprep.subr.bf16.mxu0 0
  %2684 = vmatpush1.bf16.msra.mxu0 0
  %2685 = vmatprep.subr.bf16.mxu0 0
  %2686 = vmatpush1.bf16.msra.mxu0 0
  %2687 = vmatprep.subr.bf16.mxu0 0
  %2688 = vmatpush1.bf16.msra.mxu0 0
  %2689 = vmatprep.subr.bf16.mxu0 0
  %2690 = vmatpush1.bf16.msra.mxu0 0
  %2691 = vmatprep.subr.bf16.mxu0 0
  %2692 = vmatpush1.bf16.msra.mxu0 0
  %2693 = vmatprep.subr.bf16.mxu0 0
  %2694 = vmatpush1.bf16.msra.mxu0 0
  %2695 = vmatprep.subr.bf16.mxu0 0
  %2696 = vmatpush1.bf16.msra.mxu0 0
  %2697 = vmatprep.mubr.bf16.mxu0 0
  %2698 = vmatmul.mubr.bf16.gmra.mrb[0].mxu0 %v2660
  %v2699 = vpop.f32.mrb[0].mxu0
  %v2700 = vadd.f32 0.0, %v2699
  %v2701 = vpop.f32.mrb[0].mxu0
  %v2702 = vpop.f32.mrb[0].mxu0
  %v2703 = vpop.f32.mrb[0].mxu0
  %2704 = vdwg.mxu0
  %v2706 = vsel %vm695, %v2515, 0
  %v2709 = vsel %vm699, %v2520, 0
  %2711 = vmatprep.subr.bf16.mxu0 0
  %2712 = vmatpush1.bf16.msra.mxu0 %v2709
  %2713 = vmatprep.subr.bf16.mxu0 0
  %2714 = vmatpush1.bf16.msra.mxu0 0
  %2715 = vmatprep.subr.bf16.mxu0 0
  %2716 = vmatpush1.bf16.msra.mxu0 0
  %2717 = vmatprep.subr.bf16.mxu0 0
  %2718 = vmatpush1.bf16.msra.mxu0 0
  %2719 = vmatprep.subr.bf16.mxu0 0
  %2720 = vmatpush1.bf16.msra.mxu0 0
  %2721 = vmatprep.subr.bf16.mxu0 0
  %2722 = vmatpush1.bf16.msra.mxu0 0
  %2723 = vmatprep.subr.bf16.mxu0 0
  %2724 = vmatpush1.bf16.msra.mxu0 0
  %2725 = vmatprep.subr.bf16.mxu0 0
  %2726 = vmatpush1.bf16.msra.mxu0 0
  %2727 = vmatprep.subr.bf16.mxu0 0
  %2728 = vmatpush1.bf16.msra.mxu0 0
  %2729 = vmatprep.subr.bf16.mxu0 0
  %2730 = vmatpush1.bf16.msra.mxu0 0
  %2731 = vmatprep.subr.bf16.mxu0 0
  %2732 = vmatpush1.bf16.msra.mxu0 0
  %2733 = vmatprep.subr.bf16.mxu0 0
  %2734 = vmatpush1.bf16.msra.mxu0 0
  %2735 = vmatprep.subr.bf16.mxu0 0
  %2736 = vmatpush1.bf16.msra.mxu0 0
  %2737 = vmatprep.subr.bf16.mxu0 0
  %2738 = vmatpush1.bf16.msra.mxu0 0
  %2739 = vmatprep.subr.bf16.mxu0 0
  %2740 = vmatpush1.bf16.msra.mxu0 0
  %2741 = vmatprep.subr.bf16.mxu0 0
  %2742 = vmatpush1.bf16.msra.mxu0 0
  %2743 = vmatprep.mubr.bf16.mxu0 0
  %2744 = vmatmul.mubr.bf16.gmra.mrb[0].mxu0 %v2706
  %v2745 = vpop.f32.mrb[0].mxu0
  %v2746 = vadd.f32 0.0, %v2745
  %v2747 = vpop.f32.mrb[0].mxu0
  %v2748 = vpop.f32.mrb[0].mxu0
  %v2749 = vpop.f32.mrb[0].mxu0
  %2750 = vdwg.mxu0
  %v2756 = vcombine.low %v2562, %v2608
  %v2757 = vcombine.low %v2654, %v2700
  %v2759 = vunpack.c.l.s4 1983009808
  %v2760 = vunpack.c.0.s8 %v2759
  %v2761 = vlaneseq
  %v2762 = vshrl.u32 %v2761, 7
  %v2763 = vsub.s32 %v2760, %v2762
  %v2764 = vrot.slane %v2756, %v2763
  %v2766 = vunpack.c.l.s4 1983009808
  %v2767 = vunpack.c.0.s8 %v2766
  %v2768 = vlaneseq
  %v2769 = vshrl.u32 %v2768, 7
  %v2770 = vsub.s32 %v2767, %v2769
  %v2771 = vrot.slane %v2757, %v2770
  %v2772 = vcombine.low %v2764, %v2771
  %v2774 = vunpack.c.l.s4 1983009808
  %v2775 = vunpack.c.0.s8 %v2774
  %v2776 = vlaneseq
  %v2777 = vshrl.u32 %v2776, 7
  %v2778 = vsub.s32 %v2775, %v2777
  %v2779 = vrot.slane %v2746, %v2778
  %v2782 = vpack.c.bf16 %v2779, %v2772
  %s2783 = scalar_lea.vmem %s7, 8
  %v2784 = vld [vmem:[%s2783] sm:$0xf]
  %v2786 = vsel %vm393, %v2782, 0
  %v2789 = vsel %vm1828, %v2784, 0
  %2791 = vmatprep.subr.bf16.mxu0 0
  %2792 = vmatpush1.bf16.msra.mxu0 %v2789
  %2793 = vmatprep.subr.bf16.mxu0 0
  %2794 = vmatpush1.bf16.msra.mxu0 0
  %2795 = vmatprep.subr.bf16.mxu0 0
  %2796 = vmatpush1.bf16.msra.mxu0 0
  %2797 = vmatprep.subr.bf16.mxu0 0
  %2798 = vmatpush1.bf16.msra.mxu0 0
  %2799 = vmatprep.subr.bf16.mxu0 0
  %2800 = vmatpush1.bf16.msra.mxu0 0
  %2801 = vmatprep.subr.bf16.mxu0 0
  %2802 = vmatpush1.bf16.msra.mxu0 0
  %2803 = vmatprep.subr.bf16.mxu0 0
  %2804 = vmatpush1.bf16.msra.mxu0 0
  %2805 = vmatprep.subr.bf16.mxu0 0
  %2806 = vmatpush1.bf16.msra.mxu0 0
  %2807 = vmatprep.subr.bf16.mxu0 0
  %2808 = vmatpush1.bf16.msra.mxu0 0
  %2809 = vmatprep.subr.bf16.mxu0 0
  %2810 = vmatpush1.bf16.msra.mxu0 0
  %2811 = vmatprep.subr.bf16.mxu0 0
  %2812 = vmatpush1.bf16.msra.mxu0 0
  %2813 = vmatprep.subr.bf16.mxu0 0
  %2814 = vmatpush1.bf16.msra.mxu0 0
  %2815 = vmatprep.subr.bf16.mxu0 0
  %2816 = vmatpush1.bf16.msra.mxu0 0
  %2817 = vmatprep.subr.bf16.mxu0 0
  %2818 = vmatpush1.bf16.msra.mxu0 0
  %2819 = vmatprep.subr.bf16.mxu0 0
  %2820 = vmatpush1.bf16.msra.mxu0 0
  %2821 = vmatprep.subr.bf16.mxu0 0
  %2822 = vmatpush1.bf16.msra.mxu0 0
  %2823 = vmatprep.mubr.bf16.mxu0 0
  %2824 = vmatmul.mubr.bf16.gmra.mrb[0].mxu0 %v2786
  %v2825 = vpop.f32.mrb[0].mxu0
  %v2826 = vadd.f32 0.0, %v2825
  %v2827 = vpop.f32.mrb[0].mxu0
  %v2828 = vpop.f32.mrb[0].mxu0
  %v2829 = vadd.f32 0.0, %v2828
  %v2830 = vpop.f32.mrb[0].mxu0
  %2831 = vdwg.mxu0
  %v2832 = vadd.f32 %v1914, %v2826
  %v2833 = vadd.f32 %v1917, %v2829
  %s2834 = scalar_lea.vmem %s1, 48
  %v2835 = vld [vmem:[%s2834] sm:$0xf]
  %v2836 = vld [vmem:[%s2834 + $0x4] sm:$0xf]
  %v2837 = vld [vmem:[%s2834 + $0x8] sm:$0xf]
  %v2838 = vld [vmem:[%s2834 + $0xc] sm:$0xf]
  %s2839 = scalar_lea.vmem %s2, 3
  %v2840 = vld [vmem:[%s2839] sm:$0x1]
  %v2842 = vlaneseq
  %v2843 = vshrl.u32 %v2842, 7
  %v2844 = vsub.s32 0, %v2843
  %v2845 = vrot.slane %v2840, %v2844
  %v2851 = vunpack.c.l.b16 %v2835
  %v2852 = vunpack.c.l.b16 %v2836
  %v2853 = vunpack.c.l.b16 %v2837
  %v2854 = vunpack.c.l.b16 %v2838
  %v2855 = vpack.c.b16 %v2852, %v2851
  %v2856 = vpack.c.b16 %v2854, %v2853
  %2859 = vmatprep.subr.bf16.mxu0 0
  %2860 = vmatpush1.bf16.msra.mxu0 %v2855
  %2861 = vmatprep.subr.bf16.mxu0 0
  %2862 = vmatpush1.bf16.msra.mxu0 %v2856
  %2863 = vmatprep.subr.bf16.mxu0 0
  %2864 = vmatpush1.bf16.msra.mxu0 0
  %2865 = vmatprep.subr.bf16.mxu0 0
  %2866 = vmatpush1.bf16.msra.mxu0 0
  %2867 = vmatprep.subr.bf16.mxu0 0
  %2868 = vmatpush1.bf16.msra.mxu0 0
  %2869 = vmatprep.subr.bf16.mxu0 0
  %2870 = vmatpush1.bf16.msra.mxu0 0
  %2871 = vmatprep.subr.bf16.mxu0 0
  %2872 = vmatpush1.bf16.msra.mxu0 0
  %2873 = vmatprep.subr.bf16.mxu0 0
  %2874 = vmatpush1.bf16.msra.mxu0 0
  %2875 = vmatprep.subr.bf16.mxu0 0
  %2876 = vmatpush1.bf16.msra.mxu0 0
  %2877 = vmatprep.subr.bf16.mxu0 0
  %2878 = vmatpush1.bf16.msra.mxu0 0
  %2879 = vmatprep.subr.bf16.mxu0 0
  %2880 = vmatpush1.bf16.msra.mxu0 0
  %2881 = vmatprep.subr.bf16.mxu0 0
  %2882 = vmatpush1.bf16.msra.mxu0 0
  %2883 = vmatprep.subr.bf16.mxu0 0
  %2884 = vmatpush1.bf16.msra.mxu0 0
  %2885 = vmatprep.subr.bf16.mxu0 0
  %2886 = vmatpush1.bf16.msra.mxu0 0
  %2887 = vmatprep.subr.bf16.mxu0 0
  %2888 = vmatpush1.bf16.msra.mxu0 0
  %2889 = vmatprep.subr.bf16.mxu0 0
  %2890 = vmatpush1.bf16.msra.mxu0 0
  %2891 = vmatprep.mubr.bf16.mxu0 0
  %2892 = vmatmul.mubr.bf16.gmra.mrb[0].mxu0 %v119
  %v2893 = vpop.f32.mrb[0].mxu0
  %v2894 = vadd.f32 %v2845, %v2893
  %v2895 = vpop.f32.mrb[0].mxu0
  %v2896 = vpop.f32.mrb[0].mxu0
  %v2897 = vadd.f32 %v2845, %v2896
  %v2898 = vpop.f32.mrb[0].mxu0
  %2899 = vdwg.mxu0
  %v2902 = vcombine.high %v2894, %v2894
  %v2904 = vunpack.c.l.s4 1983009808
  %v2905 = vunpack.c.0.s8 %v2904
  %v2906 = vlaneseq
  %v2907 = vshrl.u32 %v2906, 7
  %v2908 = vsub.s32 %v2905, %v2907
  %v2909 = vrot.slane %v2894, %v2908
  %v2911 = vunpack.c.l.s4 1983009808
  %v2912 = vunpack.c.0.s8 %v2911
  %v2913 = vlaneseq
  %v2914 = vshrl.u32 %v2913, 7
  %v2915 = vsub.s32 %v2912, %v2914
  %v2916 = vrot.slane %v2902, %v2915
  %v2917 = vcombine.high %v2909, %v2909
  %v2918 = vcombine.high %v2916, %v2916
  %v2920 = vunpack.c.l.s4 1983009808
  %v2921 = vunpack.c.0.s8 %v2920
  %v2922 = vlaneseq
  %v2923 = vshrl.u32 %v2922, 7
  %v2924 = vsub.s32 %v2921, %v2923
  %v2925 = vrot.slane %v2897, %v2924
  %s2931 = scalar_lea.vmem %s3, 48
  %v2932 = vld [vmem:[%s2931] sm:$0xf]
  %v2933 = vld [vmem:[%s2931 + $0x4] sm:$0xf]
  %v2934 = vld [vmem:[%s2931 + $0x8] sm:$0xf]
  %v2935 = vld [vmem:[%s2931 + $0xc] sm:$0xf]
  %s2936 = scalar_lea.vmem %s4, 3
  %v2937 = vld [vmem:[%s2936] sm:$0x1]
  %v2939 = vlaneseq
  %v2940 = vshrl.u32 %v2939, 7
  %v2941 = vsub.s32 0, %v2940
  %v2942 = vrot.slane %v2937, %v2941
  %v2948 = vunpack.c.l.b16 %v2932
  %v2949 = vunpack.c.l.b16 %v2933
  %v2950 = vunpack.c.l.b16 %v2934
  %v2951 = vunpack.c.l.b16 %v2935
  %v2952 = vpack.c.b16 %v2949, %v2948
  %v2953 = vpack.c.b16 %v2951, %v2950
  %2956 = vmatprep.subr.bf16.mxu0 0
  %2957 = vmatpush1.bf16.msra.mxu0 %v2952
  %2958 = vmatprep.subr.bf16.mxu0 0
  %2959 = vmatpush1.bf16.msra.mxu0 %v2953
  %2960 = vmatprep.subr.bf16.mxu0 0
  %2961 = vmatpush1.bf16.msra.mxu0 0
  %2962 = vmatprep.subr.bf16.mxu0 0
  %2963 = vmatpush1.bf16.msra.mxu0 0
  %2964 = vmatprep.subr.bf16.mxu0 0
  %2965 = vmatpush1.bf16.msra.mxu0 0
  %2966 = vmatprep.subr.bf16.mxu0 0
  %2967 = vmatpush1.bf16.msra.mxu0 0
  %2968 = vmatprep.subr.bf16.mxu0 0
  %2969 = vmatpush1.bf16.msra.mxu0 0
  %2970 = vmatprep.subr.bf16.mxu0 0
  %2971 = vmatpush1.bf16.msra.mxu0 0
  %2972 = vmatprep.subr.bf16.mxu0 0
  %2973 = vmatpush1.bf16.msra.mxu0 0
  %2974 = vmatprep.subr.bf16.mxu0 0
  %2975 = vmatpush1.bf16.msra.mxu0 0
  %2976 = vmatprep.subr.bf16.mxu0 0
  %2977 = vmatpush1.bf16.msra.mxu0 0
  %2978 = vmatprep.subr.bf16.mxu0 0
  %2979 = vmatpush1.bf16.msra.mxu0 0
  %2980 = vmatprep.subr.bf16.mxu0 0
  %2981 = vmatpush1.bf16.msra.mxu0 0
  %2982 = vmatprep.subr.bf16.mxu0 0
  %2983 = vmatpush1.bf16.msra.mxu0 0
  %2984 = vmatprep.subr.bf16.mxu0 0
  %2985 = vmatpush1.bf16.msra.mxu0 0
  %2986 = vmatprep.subr.bf16.mxu0 0
  %2987 = vmatpush1.bf16.msra.mxu0 0
  %2988 = vmatprep.mubr.bf16.mxu0 0
  %2989 = vmatmul.mubr.bf16.gmra.mrb[0].mxu0 %v119
  %v2990 = vpop.f32.mrb[0].mxu0
  %v2991 = vadd.f32 %v2942, %v2990
  %v2992 = vpop.f32.mrb[0].mxu0
  %v2993 = vpop.f32.mrb[0].mxu0
  %v2994 = vadd.f32 %v2942, %v2993
  %v2995 = vpop.f32.mrb[0].mxu0
  %2996 = vdwg.mxu0
  %v2999 = vcombine.high %v2991, %v2991
  %v3001 = vunpack.c.l.s4 1983009808
  %v3002 = vunpack.c.0.s8 %v3001
  %v3003 = vlaneseq
  %v3004 = vshrl.u32 %v3003, 7
  %v3005 = vsub.s32 %v3002, %v3004
  %v3006 = vrot.slane %v2991, %v3005
  %v3008 = vunpack.c.l.s4 1983009808
  %v3009 = vunpack.c.0.s8 %v3008
  %v3010 = vlaneseq
  %v3011 = vshrl.u32 %v3010, 7
  %v3012 = vsub.s32 %v3009, %v3011
  %v3013 = vrot.slane %v2999, %v3012
  %v3014 = vcombine.high %v3006, %v3006
  %v3015 = vcombine.high %v3013, %v3013
  %v3017 = vunpack.c.l.s4 1983009808
  %v3018 = vunpack.c.0.s8 %v3017
  %v3019 = vlaneseq
  %v3020 = vshrl.u32 %v3019, 7
  %v3021 = vsub.s32 %v3018, %v3020
  %v3022 = vrot.slane %v2994, %v3021
  %s3028 = scalar_lea.vmem %s5, 48
  %v3029 = vld [vmem:[%s3028] sm:$0xf]
  %v3030 = vld [vmem:[%s3028 + $0x4] sm:$0xf]
  %v3031 = vld [vmem:[%s3028 + $0x8] sm:$0xf]
  %v3032 = vld [vmem:[%s3028 + $0xc] sm:$0xf]
  %s3033 = scalar_lea.vmem %s6, 3
  %v3034 = vld [vmem:[%s3033] sm:$0x1]
  %v3036 = vlaneseq
  %v3037 = vshrl.u32 %v3036, 7
  %v3038 = vsub.s32 0, %v3037
  %v3039 = vrot.slane %v3034, %v3038
  %v3045 = vunpack.c.l.b16 %v3029
  %v3046 = vunpack.c.l.b16 %v3030
  %v3047 = vunpack.c.l.b16 %v3031
  %v3048 = vunpack.c.l.b16 %v3032
  %v3049 = vpack.c.b16 %v3046, %v3045
  %v3050 = vpack.c.b16 %v3048, %v3047
  %3053 = vmatprep.subr.bf16.mxu0 0
  %3054 = vmatpush1.bf16.msra.mxu0 %v3049
  %3055 = vmatprep.subr.bf16.mxu0 0
  %3056 = vmatpush1.bf16.msra.mxu0 %v3050
  %3057 = vmatprep.subr.bf16.mxu0 0
  %3058 = vmatpush1.bf16.msra.mxu0 0
  %3059 = vmatprep.subr.bf16.mxu0 0
  %3060 = vmatpush1.bf16.msra.mxu0 0
  %3061 = vmatprep.subr.bf16.mxu0 0
  %3062 = vmatpush1.bf16.msra.mxu0 0
  %3063 = vmatprep.subr.bf16.mxu0 0
  %3064 = vmatpush1.bf16.msra.mxu0 0
  %3065 = vmatprep.subr.bf16.mxu0 0
  %3066 = vmatpush1.bf16.msra.mxu0 0
  %3067 = vmatprep.subr.bf16.mxu0 0
  %3068 = vmatpush1.bf16.msra.mxu0 0
  %3069 = vmatprep.subr.bf16.mxu0 0
  %3070 = vmatpush1.bf16.msra.mxu0 0
  %3071 = vmatprep.subr.bf16.mxu0 0
  %3072 = vmatpush1.bf16.msra.mxu0 0
  %3073 = vmatprep.subr.bf16.mxu0 0
  %3074 = vmatpush1.bf16.msra.mxu0 0
  %3075 = vmatprep.subr.bf16.mxu0 0
  %3076 = vmatpush1.bf16.msra.mxu0 0
  %3077 = vmatprep.subr.bf16.mxu0 0
  %3078 = vmatpush1.bf16.msra.mxu0 0
  %3079 = vmatprep.subr.bf16.mxu0 0
  %3080 = vmatpush1.bf16.msra.mxu0 0
  %3081 = vmatprep.subr.bf16.mxu0 0
  %3082 = vmatpush1.bf16.msra.mxu0 0
  %3083 = vmatprep.subr.bf16.mxu0 0
  %3084 = vmatpush1.bf16.msra.mxu0 0
  %3085 = vmatprep.mubr.bf16.mxu0 0
  %3086 = vmatmul.mubr.bf16.gmra.mrb[0].mxu0 %v119
  %v3087 = vpop.f32.mrb[0].mxu0
  %v3088 = vadd.f32 %v3039, %v3087
  %v3089 = vpop.f32.mrb[0].mxu0
  %v3090 = vpop.f32.mrb[0].mxu0
  %v3091 = vadd.f32 %v3039, %v3090
  %v3092 = vpop.f32.mrb[0].mxu0
  %3093 = vdwg.mxu0
  %v3096 = vcombine.high %v3088, %v3088
  %v3098 = vunpack.c.l.s4 1983009808
  %v3099 = vunpack.c.0.s8 %v3098
  %v3100 = vlaneseq
  %v3101 = vshrl.u32 %v3100, 7
  %v3102 = vsub.s32 %v3099, %v3101
  %v3103 = vrot.slane %v3088, %v3102
  %v3105 = vunpack.c.l.s4 1983009808
  %v3106 = vunpack.c.0.s8 %v3105
  %v3107 = vlaneseq
  %v3108 = vshrl.u32 %v3107, 7
  %v3109 = vsub.s32 %v3106, %v3108
  %v3110 = vrot.slane %v3096, %v3109
  %v3111 = vcombine.high %v3103, %v3103
  %v3112 = vcombine.high %v3110, %v3110
  %v3114 = vunpack.c.l.s4 1983009808
  %v3115 = vunpack.c.0.s8 %v3114
  %v3116 = vlaneseq
  %v3117 = vshrl.u32 %v3116, 7
  %v3118 = vsub.s32 %v3115, %v3117
  %v3119 = vrot.slane %v3091, %v3118
  %v3125 = vpack.c.bf16 %v2909, %v2909
  %v3126 = vpack.c.bf16 %v2917, %v2917
  %v3127 = vpack.c.bf16 %v2916, %v2916
  %v3128 = vpack.c.bf16 %v2918, %v2918
  %v3129 = vpack.c.bf16 %v2925, %v2925
  %v3130 = vpack.c.bf16 %v3006, %v3006
  %v3131 = vpack.c.bf16 %v3014, %v3014
  %v3132 = vpack.c.bf16 %v3013, %v3013
  %v3133 = vpack.c.bf16 %v3015, %v3015
  %v3134 = vpack.c.bf16 %v3022, %v3022
  %v3136 = vsel %vm393, %v3125, 0
  %v3139 = vsel %vm393, %v3130, 0
  %3141 = vmatprep.subr.bf16.mxu0 0
  %3142 = vmatpush1.bf16.xpose.msra.mxu0 %v3139
  %3143 = vmatprep.subr.bf16.mxu0 0
  %3144 = vmatpush1.bf16.xpose.msra.mxu0 0
  %3145 = vmatprep.subr.bf16.mxu0 0
  %3146 = vmatpush1.bf16.xpose.msra.mxu0 0
  %3147 = vmatprep.subr.bf16.mxu0 0
  %3148 = vmatpush1.bf16.xpose.msra.mxu0 0
  %3149 = vmatprep.subr.bf16.mxu0 0
  %3150 = vmatpush1.bf16.xpose.msra.mxu0 0
  %3151 = vmatprep.subr.bf16.mxu0 0
  %3152 = vmatpush1.bf16.xpose.msra.mxu0 0
  %3153 = vmatprep.subr.bf16.mxu0 0
  %3154 = vmatpush1.bf16.xpose.msra.mxu0 0
  %3155 = vmatprep.subr.bf16.mxu0 0
  %3156 = vmatpush1.bf16.xpose.msra.mxu0 0
  %3157 = vmatprep.subr.bf16.mxu0 0
  %3158 = vmatpush1.bf16.xpose.msra.mxu0 0
  %3159 = vmatprep.subr.bf16.mxu0 0
  %3160 = vmatpush1.bf16.xpose.msra.mxu0 0
  %3161 = vmatprep.subr.bf16.mxu0 0
  %3162 = vmatpush1.bf16.xpose.msra.mxu0 0
  %3163 = vmatprep.subr.bf16.mxu0 0
  %3164 = vmatpush1.bf16.xpose.msra.mxu0 0
  %3165 = vmatprep.subr.bf16.mxu0 0
  %3166 = vmatpush1.bf16.xpose.msra.mxu0 0
  %3167 = vmatprep.subr.bf16.mxu0 0
  %3168 = vmatpush1.bf16.xpose.msra.mxu0 0
  %3169 = vmatprep.subr.bf16.mxu0 0
  %3170 = vmatpush1.bf16.xpose.msra.mxu0 0
  %3171 = vmatprep.subr.bf16.mxu0 0
  %3172 = vmatpush1.bf16.xpose.msra.mxu0 0
  %3173 = vmatprep.mubr.bf16.mxu0 0
  %3174 = vmatmul.mubr.bf16.gmra.mrb[0].mxu0 %v3136
  %v3175 = vpop.f32.mrb[0].mxu0
  %v3176 = vadd.f32 0.0, %v3175
  %v3177 = vpop.f32.mrb[0].mxu0
  %v3178 = vpop.f32.mrb[0].mxu0
  %v3179 = vpop.f32.mrb[0].mxu0
  %3180 = vdwg.mxu0
  %v3182 = vsel %vm393, %v3126, 0
  %v3185 = vsel %vm393, %v3131, 0
  %3187 = vmatprep.subr.bf16.mxu0 0
  %3188 = vmatpush1.bf16.xpose.msra.mxu0 %v3185
  %3189 = vmatprep.subr.bf16.mxu0 0
  %3190 = vmatpush1.bf16.xpose.msra.mxu0 0
  %3191 = vmatprep.subr.bf16.mxu0 0
  %3192 = vmatpush1.bf16.xpose.msra.mxu0 0
  %3193 = vmatprep.subr.bf16.mxu0 0
  %3194 = vmatpush1.bf16.xpose.msra.mxu0 0
  %3195 = vmatprep.subr.bf16.mxu0 0
  %3196 = vmatpush1.bf16.xpose.msra.mxu0 0
  %3197 = vmatprep.subr.bf16.mxu0 0
  %3198 = vmatpush1.bf16.xpose.msra.mxu0 0
  %3199 = vmatprep.subr.bf16.mxu0 0
  %3200 = vmatpush1.bf16.xpose.msra.mxu0 0
  %3201 = vmatprep.subr.bf16.mxu0 0
  %3202 = vmatpush1.bf16.xpose.msra.mxu0 0
  %3203 = vmatprep.subr.bf16.mxu0 0
  %3204 = vmatpush1.bf16.xpose.msra.mxu0 0
  %3205 = vmatprep.subr.bf16.mxu0 0
  %3206 = vmatpush1.bf16.xpose.msra.mxu0 0
  %3207 = vmatprep.subr.bf16.mxu0 0
  %3208 = vmatpush1.bf16.xpose.msra.mxu0 0
  %3209 = vmatprep.subr.bf16.mxu0 0
  %3210 = vmatpush1.bf16.xpose.msra.mxu0 0
  %3211 = vmatprep.subr.bf16.mxu0 0
  %3212 = vmatpush1.bf16.xpose.msra.mxu0 0
  %3213 = vmatprep.subr.bf16.mxu0 0
  %3214 = vmatpush1.bf16.xpose.msra.mxu0 0
  %3215 = vmatprep.subr.bf16.mxu0 0
  %3216 = vmatpush1.bf16.xpose.msra.mxu0 0
  %3217 = vmatprep.subr.bf16.mxu0 0
  %3218 = vmatpush1.bf16.xpose.msra.mxu0 0
  %3219 = vmatprep.mubr.bf16.mxu0 0
  %3220 = vmatmul.mubr.bf16.gmra.mrb[0].mxu0 %v3182
  %v3221 = vpop.f32.mrb[0].mxu0
  %v3222 = vadd.f32 0.0, %v3221
  %v3223 = vpop.f32.mrb[0].mxu0
  %v3224 = vpop.f32.mrb[0].mxu0
  %v3225 = vpop.f32.mrb[0].mxu0
  %3226 = vdwg.mxu0
  %v3228 = vsel %vm393, %v3127, 0
  %v3231 = vsel %vm393, %v3132, 0
  %3233 = vmatprep.subr.bf16.mxu0 0
  %3234 = vmatpush1.bf16.xpose.msra.mxu0 %v3231
  %3235 = vmatprep.subr.bf16.mxu0 0
  %3236 = vmatpush1.bf16.xpose.msra.mxu0 0
  %3237 = vmatprep.subr.bf16.mxu0 0
  %3238 = vmatpush1.bf16.xpose.msra.mxu0 0
  %3239 = vmatprep.subr.bf16.mxu0 0
  %3240 = vmatpush1.bf16.xpose.msra.mxu0 0
  %3241 = vmatprep.subr.bf16.mxu0 0
  %3242 = vmatpush1.bf16.xpose.msra.mxu0 0
  %3243 = vmatprep.subr.bf16.mxu0 0
  %3244 = vmatpush1.bf16.xpose.msra.mxu0 0
  %3245 = vmatprep.subr.bf16.mxu0 0
  %3246 = vmatpush1.bf16.xpose.msra.mxu0 0
  %3247 = vmatprep.subr.bf16.mxu0 0
  %3248 = vmatpush1.bf16.xpose.msra.mxu0 0
  %3249 = vmatprep.subr.bf16.mxu0 0
  %3250 = vmatpush1.bf16.xpose.msra.mxu0 0
  %3251 = vmatprep.subr.bf16.mxu0 0
  %3252 = vmatpush1.bf16.xpose.msra.mxu0 0
  %3253 = vmatprep.subr.bf16.mxu0 0
  %3254 = vmatpush1.bf16.xpose.msra.mxu0 0
  %3255 = vmatprep.subr.bf16.mxu0 0
  %3256 = vmatpush1.bf16.xpose.msra.mxu0 0
  %3257 = vmatprep.subr.bf16.mxu0 0
  %3258 = vmatpush1.bf16.xpose.msra.mxu0 0
  %3259 = vmatprep.subr.bf16.mxu0 0
  %3260 = vmatpush1.bf16.xpose.msra.mxu0 0
  %3261 = vmatprep.subr.bf16.mxu0 0
  %3262 = vmatpush1.bf16.xpose.msra.mxu0 0
  %3263 = vmatprep.subr.bf16.mxu0 0
  %3264 = vmatpush1.bf16.xpose.msra.mxu0 0
  %3265 = vmatprep.mubr.bf16.mxu0 0
  %3266 = vmatmul.mubr.bf16.gmra.mrb[0].mxu0 %v3228
  %v3267 = vpop.f32.mrb[0].mxu0
  %v3268 = vadd.f32 0.0, %v3267
  %v3269 = vpop.f32.mrb[0].mxu0
  %v3270 = vpop.f32.mrb[0].mxu0
  %v3271 = vpop.f32.mrb[0].mxu0
  %3272 = vdwg.mxu0
  %v3274 = vsel %vm393, %v3128, 0
  %v3277 = vsel %vm393, %v3133, 0
  %3279 = vmatprep.subr.bf16.mxu0 0
  %3280 = vmatpush1.bf16.xpose.msra.mxu0 %v3277
  %3281 = vmatprep.subr.bf16.mxu0 0
  %3282 = vmatpush1.bf16.xpose.msra.mxu0 0
  %3283 = vmatprep.subr.bf16.mxu0 0
  %3284 = vmatpush1.bf16.xpose.msra.mxu0 0
  %3285 = vmatprep.subr.bf16.mxu0 0
  %3286 = vmatpush1.bf16.xpose.msra.mxu0 0
  %3287 = vmatprep.subr.bf16.mxu0 0
  %3288 = vmatpush1.bf16.xpose.msra.mxu0 0
  %3289 = vmatprep.subr.bf16.mxu0 0
  %3290 = vmatpush1.bf16.xpose.msra.mxu0 0
  %3291 = vmatprep.subr.bf16.mxu0 0
  %3292 = vmatpush1.bf16.xpose.msra.mxu0 0
  %3293 = vmatprep.subr.bf16.mxu0 0
  %3294 = vmatpush1.bf16.xpose.msra.mxu0 0
  %3295 = vmatprep.subr.bf16.mxu0 0
  %3296 = vmatpush1.bf16.xpose.msra.mxu0 0
  %3297 = vmatprep.subr.bf16.mxu0 0
  %3298 = vmatpush1.bf16.xpose.msra.mxu0 0
  %3299 = vmatprep.subr.bf16.mxu0 0
  %3300 = vmatpush1.bf16.xpose.msra.mxu0 0
  %3301 = vmatprep.subr.bf16.mxu0 0
  %3302 = vmatpush1.bf16.xpose.msra.mxu0 0
  %3303 = vmatprep.subr.bf16.mxu0 0
  %3304 = vmatpush1.bf16.xpose.msra.mxu0 0
  %3305 = vmatprep.subr.bf16.mxu0 0
  %3306 = vmatpush1.bf16.xpose.msra.mxu0 0
  %3307 = vmatprep.subr.bf16.mxu0 0
  %3308 = vmatpush1.bf16.xpose.msra.mxu0 0
  %3309 = vmatprep.subr.bf16.mxu0 0
  %3310 = vmatpush1.bf16.xpose.msra.mxu0 0
  %3311 = vmatprep.mubr.bf16.mxu0 0
  %3312 = vmatmul.mubr.bf16.gmra.mrb[0].mxu0 %v3274
  %v3313 = vpop.f32.mrb[0].mxu0
  %v3314 = vadd.f32 0.0, %v3313
  %v3315 = vpop.f32.mrb[0].mxu0
  %v3316 = vpop.f32.mrb[0].mxu0
  %v3317 = vpop.f32.mrb[0].mxu0
  %3318 = vdwg.mxu0
  %v3320 = vsel %vm393, %v3129, 0
  %v3323 = vsel %vm393, %v3134, 0
  %3325 = vmatprep.subr.bf16.mxu0 0
  %3326 = vmatpush1.bf16.xpose.msra.mxu0 %v3323
  %3327 = vmatprep.subr.bf16.mxu0 0
  %3328 = vmatpush1.bf16.xpose.msra.mxu0 0
  %3329 = vmatprep.subr.bf16.mxu0 0
  %3330 = vmatpush1.bf16.xpose.msra.mxu0 0
  %3331 = vmatprep.subr.bf16.mxu0 0
  %3332 = vmatpush1.bf16.xpose.msra.mxu0 0
  %3333 = vmatprep.subr.bf16.mxu0 0
  %3334 = vmatpush1.bf16.xpose.msra.mxu0 0
  %3335 = vmatprep.subr.bf16.mxu0 0
  %3336 = vmatpush1.bf16.xpose.msra.mxu0 0
  %3337 = vmatprep.subr.bf16.mxu0 0
  %3338 = vmatpush1.bf16.xpose.msra.mxu0 0
  %3339 = vmatprep.subr.bf16.mxu0 0
  %3340 = vmatpush1.bf16.xpose.msra.mxu0 0
  %3341 = vmatprep.subr.bf16.mxu0 0
  %3342 = vmatpush1.bf16.xpose.msra.mxu0 0
  %3343 = vmatprep.subr.bf16.mxu0 0
  %3344 = vmatpush1.bf16.xpose.msra.mxu0 0
  %3345 = vmatprep.subr.bf16.mxu0 0
  %3346 = vmatpush1.bf16.xpose.msra.mxu0 0
  %3347 = vmatprep.subr.bf16.mxu0 0
  %3348 = vmatpush1.bf16.xpose.msra.mxu0 0
  %3349 = vmatprep.subr.bf16.mxu0 0
  %3350 = vmatpush1.bf16.xpose.msra.mxu0 0
  %3351 = vmatprep.subr.bf16.mxu0 0
  %3352 = vmatpush1.bf16.xpose.msra.mxu0 0
  %3353 = vmatprep.subr.bf16.mxu0 0
  %3354 = vmatpush1.bf16.xpose.msra.mxu0 0
  %3355 = vmatprep.subr.bf16.mxu0 0
  %3356 = vmatpush1.bf16.xpose.msra.mxu0 0
  %3357 = vmatprep.mubr.bf16.mxu0 0
  %3358 = vmatmul.mubr.bf16.gmra.mrb[0].mxu0 %v3320
  %v3359 = vpop.f32.mrb[0].mxu0
  %v3360 = vadd.f32 0.0, %v3359
  %v3361 = vpop.f32.mrb[0].mxu0
  %v3362 = vpop.f32.mrb[0].mxu0
  %v3363 = vpop.f32.mrb[0].mxu0
  %3364 = vdwg.mxu0
  %v3365 = vmul.f32 %v3176, 0.35355338
  %v3366 = vmul.f32 %v3222, 0.35355338
  %v3367 = vmul.f32 %v3268, 0.35355338
  %v3368 = vmul.f32 %v3314, 0.35355338
  %v3369 = vmul.f32 %v3360, 0.35355338
  %v3370 = vsel %vm629, %v3365, -inf
  %3371 = vmax.xlane.f32.xlu0 %v3370
  %v3372 = vpop.xlane.xlu0 %3371
  %v3373 = vsel %vm629, %v3366, -inf
  %3374 = vmax.xlane.f32.xlu0 %v3373
  %v3375 = vpop.xlane.xlu0 %3374
  %v3376 = vsel %vm629, %v3367, -inf
  %3377 = vmax.xlane.f32.xlu0 %v3376
  %v3378 = vpop.xlane.xlu0 %3377
  %v3379 = vsel %vm629, %v3368, -inf
  %3380 = vmax.xlane.f32.xlu0 %v3379
  %v3381 = vpop.xlane.xlu0 %3380
  %v3382 = vsel %vm629, %v3369, -inf
  %3383 = vmax.xlane.f32.xlu0 %v3382
  %v3384 = vpop.xlane.xlu0 %3383
  %v3385 = vsub.f32 %v3365, %v3372
  %v3386 = vsub.f32 %v3366, %v3375
  %v3387 = vsub.f32 %v3367, %v3378
  %v3388 = vsub.f32 %v3368, %v3381
  %v3389 = vsub.f32 %v3369, %v3384
  %v3390 = vmul.f32 %v3385, 1.442695
  %v3391 = vpow.pop %v3390
  %v3392 = vmul.f32 %v3386, 1.442695
  %v3393 = vpow.pop %v3392
  %v3394 = vmul.f32 %v3387, 1.442695
  %v3395 = vpow.pop %v3394
  %v3396 = vmul.f32 %v3388, 1.442695
  %v3397 = vpow.pop %v3396
  %v3398 = vmul.f32 %v3389, 1.442695
  %v3399 = vpow.pop %v3398
  %v3400 = vsel %vm629, %v3391, 0.0
  %3401 = vadd.xlane.f32.xlu0 %v3400
  %v3402 = vpop.xlane.xlu0 %3401
  %v3403 = vsel %vm629, %v3393, 0.0
  %3404 = vadd.xlane.f32.xlu0 %v3403
  %v3405 = vpop.xlane.xlu0 %3404
  %v3406 = vsel %vm629, %v3395, 0.0
  %3407 = vadd.xlane.f32.xlu0 %v3406
  %v3408 = vpop.xlane.xlu0 %3407
  %v3409 = vsel %vm629, %v3397, 0.0
  %3410 = vadd.xlane.f32.xlu0 %v3409
  %v3411 = vpop.xlane.xlu0 %3410
  %v3412 = vsel %vm629, %v3399, 0.0
  %3413 = vadd.xlane.f32.xlu0 %v3412
  %v3414 = vpop.xlane.xlu0 %3413
  %v3415 = vrcp.pop %v3402
  %v3416 = vrcp.pop %v3405
  %v3417 = vrcp.pop %v3408
  %v3418 = vrcp.pop %v3411
  %v3419 = vrcp.pop %v3414
  %v3420 = vmul.f32 %v3391, %v3415
  %v3421 = vmul.f32 %v3393, %v3416
  %v3422 = vmul.f32 %v3395, %v3417
  %v3423 = vmul.f32 %v3397, %v3418
  %v3424 = vmul.f32 %v3399, %v3419
  %v3425 = vpack.c.bf16 %v3420, %v3420
  %v3426 = vpack.c.bf16 %v3421, %v3421
  %v3427 = vpack.c.bf16 %v3422, %v3422
  %v3428 = vpack.c.bf16 %v3423, %v3423
  %v3429 = vpack.c.bf16 %v3424, %v3424
  %v3430 = vpack.c.bf16 %v3103, %v3103
  %v3431 = vpack.c.bf16 %v3111, %v3111
  %v3432 = vpack.c.bf16 %v3110, %v3110
  %v3433 = vpack.c.bf16 %v3112, %v3112
  %v3434 = vpack.c.bf16 %v3119, %v3119
  %v3436 = vsel %vm695, %v3425, 0
  %v3439 = vsel %vm699, %v3430, 0
  %3441 = vmatprep.subr.bf16.mxu0 0
  %3442 = vmatpush1.bf16.msra.mxu0 %v3439
  %3443 = vmatprep.subr.bf16.mxu0 0
  %3444 = vmatpush1.bf16.msra.mxu0 0
  %3445 = vmatprep.subr.bf16.mxu0 0
  %3446 = vmatpush1.bf16.msra.mxu0 0
  %3447 = vmatprep.subr.bf16.mxu0 0
  %3448 = vmatpush1.bf16.msra.mxu0 0
  %3449 = vmatprep.subr.bf16.mxu0 0
  %3450 = vmatpush1.bf16.msra.mxu0 0
  %3451 = vmatprep.subr.bf16.mxu0 0
  %3452 = vmatpush1.bf16.msra.mxu0 0
  %3453 = vmatprep.subr.bf16.mxu0 0
  %3454 = vmatpush1.bf16.msra.mxu0 0
  %3455 = vmatprep.subr.bf16.mxu0 0
  %3456 = vmatpush1.bf16.msra.mxu0 0
  %3457 = vmatprep.subr.bf16.mxu0 0
  %3458 = vmatpush1.bf16.msra.mxu0 0
  %3459 = vmatprep.subr.bf16.mxu0 0
  %3460 = vmatpush1.bf16.msra.mxu0 0
  %3461 = vmatprep.subr.bf16.mxu0 0
  %3462 = vmatpush1.bf16.msra.mxu0 0
  %3463 = vmatprep.subr.bf16.mxu0 0
  %3464 = vmatpush1.bf16.msra.mxu0 0
  %3465 = vmatprep.subr.bf16.mxu0 0
  %3466 = vmatpush1.bf16.msra.mxu0 0
  %3467 = vmatprep.subr.bf16.mxu0 0
  %3468 = vmatpush1.bf16.msra.mxu0 0
  %3469 = vmatprep.subr.bf16.mxu0 0
  %3470 = vmatpush1.bf16.msra.mxu0 0
  %3471 = vmatprep.subr.bf16.mxu0 0
  %3472 = vmatpush1.bf16.msra.mxu0 0
  %3473 = vmatprep.mubr.bf16.mxu0 0
  %3474 = vmatmul.mubr.bf16.gmra.mrb[0].mxu0 %v3436
  %v3475 = vpop.f32.mrb[0].mxu0
  %v3476 = vadd.f32 0.0, %v3475
  %v3477 = vpop.f32.mrb[0].mxu0
  %v3478 = vpop.f32.mrb[0].mxu0
  %v3479 = vpop.f32.mrb[0].mxu0
  %3480 = vdwg.mxu0
  %v3482 = vsel %vm695, %v3426, 0
  %v3485 = vsel %vm699, %v3431, 0
  %3487 = vmatprep.subr.bf16.mxu0 0
  %3488 = vmatpush1.bf16.msra.mxu0 %v3485
  %3489 = vmatprep.subr.bf16.mxu0 0
  %3490 = vmatpush1.bf16.msra.mxu0 0
  %3491 = vmatprep.subr.bf16.mxu0 0
  %3492 = vmatpush1.bf16.msra.mxu0 0
  %3493 = vmatprep.subr.bf16.mxu0 0
  %3494 = vmatpush1.bf16.msra.mxu0 0
  %3495 = vmatprep.subr.bf16.mxu0 0
  %3496 = vmatpush1.bf16.msra.mxu0 0
  %3497 = vmatprep.subr.bf16.mxu0 0
  %3498 = vmatpush1.bf16.msra.mxu0 0
  %3499 = vmatprep.subr.bf16.mxu0 0
  %3500 = vmatpush1.bf16.msra.mxu0 0
  %3501 = vmatprep.subr.bf16.mxu0 0
  %3502 = vmatpush1.bf16.msra.mxu0 0
  %3503 = vmatprep.subr.bf16.mxu0 0
  %3504 = vmatpush1.bf16.msra.mxu0 0
  %3505 = vmatprep.subr.bf16.mxu0 0
  %3506 = vmatpush1.bf16.msra.mxu0 0
  %3507 = vmatprep.subr.bf16.mxu0 0
  %3508 = vmatpush1.bf16.msra.mxu0 0
  %3509 = vmatprep.subr.bf16.mxu0 0
  %3510 = vmatpush1.bf16.msra.mxu0 0
  %3511 = vmatprep.subr.bf16.mxu0 0
  %3512 = vmatpush1.bf16.msra.mxu0 0
  %3513 = vmatprep.subr.bf16.mxu0 0
  %3514 = vmatpush1.bf16.msra.mxu0 0
  %3515 = vmatprep.subr.bf16.mxu0 0
  %3516 = vmatpush1.bf16.msra.mxu0 0
  %3517 = vmatprep.subr.bf16.mxu0 0
  %3518 = vmatpush1.bf16.msra.mxu0 0
  %3519 = vmatprep.mubr.bf16.mxu0 0
  %3520 = vmatmul.mubr.bf16.gmra.mrb[0].mxu0 %v3482
  %v3521 = vpop.f32.mrb[0].mxu0
  %v3522 = vadd.f32 0.0, %v3521
  %v3523 = vpop.f32.mrb[0].mxu0
  %v3524 = vpop.f32.mrb[0].mxu0
  %v3525 = vpop.f32.mrb[0].mxu0
  %3526 = vdwg.mxu0
  %v3528 = vsel %vm695, %v3427, 0
  %v3531 = vsel %vm699, %v3432, 0
  %3533 = vmatprep.subr.bf16.mxu0 0
  %3534 = vmatpush1.bf16.msra.mxu0 %v3531
  %3535 = vmatprep.subr.bf16.mxu0 0
  %3536 = vmatpush1.bf16.msra.mxu0 0
  %3537 = vmatprep.subr.bf16.mxu0 0
  %3538 = vmatpush1.bf16.msra.mxu0 0
  %3539 = vmatprep.subr.bf16.mxu0 0
  %3540 = vmatpush1.bf16.msra.mxu0 0
  %3541 = vmatprep.subr.bf16.mxu0 0
  %3542 = vmatpush1.bf16.msra.mxu0 0
  %3543 = vmatprep.subr.bf16.mxu0 0
  %3544 = vmatpush1.bf16.msra.mxu0 0
  %3545 = vmatprep.subr.bf16.mxu0 0
  %3546 = vmatpush1.bf16.msra.mxu0 0
  %3547 = vmatprep.subr.bf16.mxu0 0
  %3548 = vmatpush1.bf16.msra.mxu0 0
  %3549 = vmatprep.subr.bf16.mxu0 0
  %3550 = vmatpush1.bf16.msra.mxu0 0
  %3551 = vmatprep.subr.bf16.mxu0 0
  %3552 = vmatpush1.bf16.msra.mxu0 0
  %3553 = vmatprep.subr.bf16.mxu0 0
  %3554 = vmatpush1.bf16.msra.mxu0 0
  %3555 = vmatprep.subr.bf16.mxu0 0
  %3556 = vmatpush1.bf16.msra.mxu0 0
  %3557 = vmatprep.subr.bf16.mxu0 0
  %3558 = vmatpush1.bf16.msra.mxu0 0
  %3559 = vmatprep.subr.bf16.mxu0 0
  %3560 = vmatpush1.bf16.msra.mxu0 0
  %3561 = vmatprep.subr.bf16.mxu0 0
  %3562 = vmatpush1.bf16.msra.mxu0 0
  %3563 = vmatprep.subr.bf16.mxu0 0
  %3564 = vmatpush1.bf16.msra.mxu0 0
  %3565 = vmatprep.mubr.bf16.mxu0 0
  %3566 = vmatmul.mubr.bf16.gmra.mrb[0].mxu0 %v3528
  %v3567 = vpop.f32.mrb[0].mxu0
  %v3568 = vadd.f32 0.0, %v3567
  %v3569 = vpop.f32.mrb[0].mxu0
  %v3570 = vpop.f32.mrb[0].mxu0
  %v3571 = vpop.f32.mrb[0].mxu0
  %3572 = vdwg.mxu0
  %v3574 = vsel %vm695, %v3428, 0
  %v3577 = vsel %vm699, %v3433, 0
  %3579 = vmatprep.subr.bf16.mxu0 0
  %3580 = vmatpush1.bf16.msra.mxu0 %v3577
  %3581 = vmatprep.subr.bf16.mxu0 0
  %3582 = vmatpush1.bf16.msra.mxu0 0
  %3583 = vmatprep.subr.bf16.mxu0 0
  %3584 = vmatpush1.bf16.msra.mxu0 0
  %3585 = vmatprep.subr.bf16.mxu0 0
  %3586 = vmatpush1.bf16.msra.mxu0 0
  %3587 = vmatprep.subr.bf16.mxu0 0
  %3588 = vmatpush1.bf16.msra.mxu0 0
  %3589 = vmatprep.subr.bf16.mxu0 0
  %3590 = vmatpush1.bf16.msra.mxu0 0
  %3591 = vmatprep.subr.bf16.mxu0 0
  %3592 = vmatpush1.bf16.msra.mxu0 0
  %3593 = vmatprep.subr.bf16.mxu0 0
  %3594 = vmatpush1.bf16.msra.mxu0 0
  %3595 = vmatprep.subr.bf16.mxu0 0
  %3596 = vmatpush1.bf16.msra.mxu0 0
  %3597 = vmatprep.subr.bf16.mxu0 0
  %3598 = vmatpush1.bf16.msra.mxu0 0
  %3599 = vmatprep.subr.bf16.mxu0 0
  %3600 = vmatpush1.bf16.msra.mxu0 0
  %3601 = vmatprep.subr.bf16.mxu0 0
  %3602 = vmatpush1.bf16.msra.mxu0 0
  %3603 = vmatprep.subr.bf16.mxu0 0
  %3604 = vmatpush1.bf16.msra.mxu0 0
  %3605 = vmatprep.subr.bf16.mxu0 0
  %3606 = vmatpush1.bf16.msra.mxu0 0
  %3607 = vmatprep.subr.bf16.mxu0 0
  %3608 = vmatpush1.bf16.msra.mxu0 0
  %3609 = vmatprep.subr.bf16.mxu0 0
  %3610 = vmatpush1.bf16.msra.mxu0 0
  %3611 = vmatprep.mubr.bf16.mxu0 0
  %3612 = vmatmul.mubr.bf16.gmra.mrb[0].mxu0 %v3574
  %v3613 = vpop.f32.mrb[0].mxu0
  %v3614 = vadd.f32 0.0, %v3613
  %v3615 = vpop.f32.mrb[0].mxu0
  %v3616 = vpop.f32.mrb[0].mxu0
  %v3617 = vpop.f32.mrb[0].mxu0
  %3618 = vdwg.mxu0
  %v3620 = vsel %vm695, %v3429, 0
  %v3623 = vsel %vm699, %v3434, 0
  %3625 = vmatprep.subr.bf16.mxu0 0
  %3626 = vmatpush1.bf16.msra.mxu0 %v3623
  %3627 = vmatprep.subr.bf16.mxu0 0
  %3628 = vmatpush1.bf16.msra.mxu0 0
  %3629 = vmatprep.subr.bf16.mxu0 0
  %3630 = vmatpush1.bf16.msra.mxu0 0
  %3631 = vmatprep.subr.bf16.mxu0 0
  %3632 = vmatpush1.bf16.msra.mxu0 0
  %3633 = vmatprep.subr.bf16.mxu0 0
  %3634 = vmatpush1.bf16.msra.mxu0 0
  %3635 = vmatprep.subr.bf16.mxu0 0
  %3636 = vmatpush1.bf16.msra.mxu0 0
  %3637 = vmatprep.subr.bf16.mxu0 0
  %3638 = vmatpush1.bf16.msra.mxu0 0
  %3639 = vmatprep.subr.bf16.mxu0 0
  %3640 = vmatpush1.bf16.msra.mxu0 0
  %3641 = vmatprep.subr.bf16.mxu0 0
  %3642 = vmatpush1.bf16.msra.mxu0 0
  %3643 = vmatprep.subr.bf16.mxu0 0
  %3644 = vmatpush1.bf16.msra.mxu0 0
  %3645 = vmatprep.subr.bf16.mxu0 0
  %3646 = vmatpush1.bf16.msra.mxu0 0
  %3647 = vmatprep.subr.bf16.mxu0 0
  %3648 = vmatpush1.bf16.msra.mxu0 0
  %3649 = vmatprep.subr.bf16.mxu0 0
  %3650 = vmatpush1.bf16.msra.mxu0 0
  %3651 = vmatprep.subr.bf16.mxu0 0
  %3652 = vmatpush1.bf16.msra.mxu0 0
  %3653 = vmatprep.subr.bf16.mxu0 0
  %3654 = vmatpush1.bf16.msra.mxu0 0
  %3655 = vmatprep.subr.bf16.mxu0 0
  %3656 = vmatpush1.bf16.msra.mxu0 0
  %3657 = vmatprep.mubr.bf16.mxu0 0
  %3658 = vmatmul.mubr.bf16.gmra.mrb[0].mxu0 %v3620
  %v3659 = vpop.f32.mrb[0].mxu0
  %v3660 = vadd.f32 0.0, %v3659
  %v3661 = vpop.f32.mrb[0].mxu0
  %v3662 = vpop.f32.mrb[0].mxu0
  %v3663 = vpop.f32.mrb[0].mxu0
  %3664 = vdwg.mxu0
  %v3670 = vcombine.low %v3476, %v3522
  %v3671 = vcombine.low %v3568, %v3614
  %v3673 = vunpack.c.l.s4 1983009808
  %v3674 = vunpack.c.0.s8 %v3673
  %v3675 = vlaneseq
  %v3676 = vshrl.u32 %v3675, 7
  %v3677 = vsub.s32 %v3674, %v3676
  %v3678 = vrot.slane %v3670, %v3677
  %v3680 = vunpack.c.l.s4 1983009808
  %v3681 = vunpack.c.0.s8 %v3680
  %v3682 = vlaneseq
  %v3683 = vshrl.u32 %v3682, 7
  %v3684 = vsub.s32 %v3681, %v3683
  %v3685 = vrot.slane %v3671, %v3684
  %v3686 = vcombine.low %v3678, %v3685
  %v3688 = vunpack.c.l.s4 1983009808
  %v3689 = vunpack.c.0.s8 %v3688
  %v3690 = vlaneseq
  %v3691 = vshrl.u32 %v3690, 7
  %v3692 = vsub.s32 %v3689, %v3691
  %v3693 = vrot.slane %v3660, %v3692
  %v3696 = vpack.c.bf16 %v3693, %v3686
  %s3697 = scalar_lea.vmem %s7, 12
  %v3698 = vld [vmem:[%s3697] sm:$0xf]
  %v3700 = vsel %vm393, %v3696, 0
  %v3703 = vsel %vm1828, %v3698, 0
  %3705 = vmatprep.subr.bf16.mxu0 0
  %3706 = vmatpush1.bf16.msra.mxu0 %v3703
  %3707 = vmatprep.subr.bf16.mxu0 0
  %3708 = vmatpush1.bf16.msra.mxu0 0
  %3709 = vmatprep.subr.bf16.mxu0 0
  %3710 = vmatpush1.bf16.msra.mxu0 0
  %3711 = vmatprep.subr.bf16.mxu0 0
  %3712 = vmatpush1.bf16.msra.mxu0 0
  %3713 = vmatprep.subr.bf16.mxu0 0
  %3714 = vmatpush1.bf16.msra.mxu0 0
  %3715 = vmatprep.subr.bf16.mxu0 0
  %3716 = vmatpush1.bf16.msra.mxu0 0
  %3717 = vmatprep.subr.bf16.mxu0 0
  %3718 = vmatpush1.bf16.msra.mxu0 0
  %3719 = vmatprep.subr.bf16.mxu0 0
  %3720 = vmatpush1.bf16.msra.mxu0 0
  %3721 = vmatprep.subr.bf16.mxu0 0
  %3722 = vmatpush1.bf16.msra.mxu0 0
  %3723 = vmatprep.subr.bf16.mxu0 0
  %3724 = vmatpush1.bf16.msra.mxu0 0
  %3725 = vmatprep.subr.bf16.mxu0 0
  %3726 = vmatpush1.bf16.msra.mxu0 0
  %3727 = vmatprep.subr.bf16.mxu0 0
  %3728 = vmatpush1.bf16.msra.mxu0 0
  %3729 = vmatprep.subr.bf16.mxu0 0
  %3730 = vmatpush1.bf16.msra.mxu0 0
  %3731 = vmatprep.subr.bf16.mxu0 0
  %3732 = vmatpush1.bf16.msra.mxu0 0
  %3733 = vmatprep.subr.bf16.mxu0 0
  %3734 = vmatpush1.bf16.msra.mxu0 0
  %3735 = vmatprep.subr.bf16.mxu0 0
  %3736 = vmatpush1.bf16.msra.mxu0 0
  %3737 = vmatprep.mubr.bf16.mxu0 0
  %3738 = vmatmul.mubr.bf16.gmra.mrb[0].mxu0 %v3700
  %v3739 = vpop.f32.mrb[0].mxu0
  %v3740 = vadd.f32 0.0, %v3739
  %v3741 = vpop.f32.mrb[0].mxu0
  %v3742 = vpop.f32.mrb[0].mxu0
  %v3743 = vadd.f32 0.0, %v3742
  %v3744 = vpop.f32.mrb[0].mxu0
  %3745 = vdwg.mxu0
  %v3746 = vadd.f32 %v2832, %v3740
  %v3747 = vadd.f32 %v2833, %v3743
  %v3748 = vld [vmem:[%s8] sm:$0x1]
  %v3750 = vlaneseq
  %v3751 = vshrl.u32 %v3750, 7
  %v3752 = vsub.s32 0, %v3751
  %v3753 = vrot.slane %v3748, %v3752
  %v3755 = vadd.f32 %v3746, %v3753
  %v3756 = vadd.f32 %v3747, %v3753
  %v3759 = vcombine.high %v3755, %v3755
  %v3761 = vunpack.c.l.s4 1983009808
  %v3762 = vunpack.c.0.s8 %v3761
  %v3763 = vlaneseq
  %v3764 = vshrl.u32 %v3763, 7
  %v3765 = vsub.s32 %v3762, %v3764
  %v3766 = vrot.slane %v3755, %v3765
  %v3768 = vunpack.c.l.s4 1983009808
  %v3769 = vunpack.c.0.s8 %v3768
  %v3770 = vlaneseq
  %v3771 = vshrl.u32 %v3770, 7
  %v3772 = vsub.s32 %v3769, %v3771
  %v3773 = vrot.slane %v3759, %v3772
  %v3774 = vcombine.high %v3766, %v3766
  %v3775 = vcombine.high %v3773, %v3773
  %v3777 = vunpack.c.l.s4 1983009808
  %v3778 = vunpack.c.0.s8 %v3777
  %v3779 = vlaneseq
  %v3780 = vshrl.u32 %v3779, 7
  %v3781 = vsub.s32 %v3778, %v3780
  %v3782 = vrot.slane %v3756, %v3781
  %v3788 = vadd.f32 %v57, %v3766
  %v3789 = vadd.f32 %v58, %v3774
  %v3790 = vadd.f32 %v59, %v3773
  %v3791 = vadd.f32 %v60, %v3775
  %v3792 = vadd.f32 %v61, %v3782
  %v3798 = vcombine.low %v3788, %v3789
  %v3799 = vcombine.low %v3790, %v3791
  %v3801 = vunpack.c.l.s4 1983009808
  %v3802 = vunpack.c.0.s8 %v3801
  %v3803 = vlaneseq
  %v3804 = vshrl.u32 %v3803, 7
  %v3805 = vsub.s32 %v3802, %v3804
  %v3806 = vrot.slane %v3798, %v3805
  %v3808 = vunpack.c.l.s4 1983009808
  %v3809 = vunpack.c.0.s8 %v3808
  %v3810 = vlaneseq
  %v3811 = vshrl.u32 %v3810, 7
  %v3812 = vsub.s32 %v3809, %v3811
  %v3813 = vrot.slane %v3799, %v3812
  %v3814 = vcombine.low %v3806, %v3813
  %v3816 = vunpack.c.l.s4 1983009808
  %v3817 = vunpack.c.0.s8 %v3816
  %v3818 = vlaneseq
  %v3819 = vshrl.u32 %v3818, 7
  %v3820 = vsub.s32 %v3817, %v3819
  %v3821 = vrot.slane %v3792, %v3820
  %v3824 = vsel %vm117, %v3814, 0.0
  %3825 = vadd.xlane.f32.xlu0 %v3824
  %v3826 = vpop.xlane.xlu0 %3825
  %vm3827 = vcmask 254976
  %v3828 = vsel %vm3827, %v3821, 0.0
  %3829 = vadd.xlane.f32.xlu0 %v3828
  %v3830 = vpop.xlane.xlu0 %3829
  %v3831 = vrcp.pop 32.0
  %v3832 = vmul.f32 %v3826, %v3831
  %v3833 = vmul.f32 %v3830, %v3831
  %v3837 = vunpack.c.l.s4 269488144
  %v3838 = vunpack.c.0.s8 %v3837
  %v3839 = vlaneseq
  %v3840 = vshrl.u32 %v3839, 7
  %v3841 = vsub.s32 %v3838, %v3840
  %v3842 = vrot.slane %v3832, %v3841
  %v3844 = vunpack.c.l.s4 842150450
  %v3845 = vunpack.c.0.s8 %v3844
  %v3846 = vlaneseq
  %v3847 = vshrl.u32 %v3846, 7
  %v3848 = vsub.s32 %v3845, %v3847
  %v3849 = vrot.slane %v3832, %v3848
  %v3851 = vunpack.c.l.s4 1414812756
  %v3852 = vunpack.c.0.s8 %v3851
  %v3853 = vlaneseq
  %v3854 = vshrl.u32 %v3853, 7
  %v3855 = vsub.s32 %v3852, %v3854
  %v3856 = vrot.slane %v3832, %v3855
  %v3858 = vunpack.c.l.s4 1987475062
  %v3859 = vunpack.c.0.s8 %v3858
  %v3860 = vlaneseq
  %v3861 = vshrl.u32 %v3860, 7
  %v3862 = vsub.s32 %v3859, %v3861
  %v3863 = vrot.slane %v3832, %v3862
  %v3865 = vunpack.c.l.s4 269488144
  %v3866 = vunpack.c.0.s8 %v3865
  %v3867 = vlaneseq
  %v3868 = vshrl.u32 %v3867, 7
  %v3869 = vsub.s32 %v3866, %v3868
  %v3870 = vrot.slane %v3833, %v3869
  %v3876 = vsub.f32 %v3788, %v3842
  %v3877 = vsub.f32 %v3789, %v3849
  %v3878 = vsub.f32 %v3790, %v3856
  %v3879 = vsub.f32 %v3791, %v3863
  %v3880 = vsub.f32 %v3792, %v3870
  %v3881 = vmul.f32 %v3876, %v3876
  %v3882 = vmul.f32 %v3877, %v3877
  %v3883 = vmul.f32 %v3878, %v3878
  %v3884 = vmul.f32 %v3879, %v3879
  %v3885 = vmul.f32 %v3880, %v3880
  %v3891 = vcombine.low %v3881, %v3882
  %v3892 = vcombine.low %v3883, %v3884
  %v3894 = vunpack.c.l.s4 1983009808
  %v3895 = vunpack.c.0.s8 %v3894
  %v3896 = vlaneseq
  %v3897 = vshrl.u32 %v3896, 7
  %v3898 = vsub.s32 %v3895, %v3897
  %v3899 = vrot.slane %v3891, %v3898
  %v3901 = vunpack.c.l.s4 1983009808
  %v3902 = vunpack.c.0.s8 %v3901
  %v3903 = vlaneseq
  %v3904 = vshrl.u32 %v3903, 7
  %v3905 = vsub.s32 %v3902, %v3904
  %v3906 = vrot.slane %v3892, %v3905
  %v3907 = vcombine.low %v3899, %v3906
  %v3909 = vunpack.c.l.s4 1983009808
  %v3910 = vunpack.c.0.s8 %v3909
  %v3911 = vlaneseq
  %v3912 = vshrl.u32 %v3911, 7
  %v3913 = vsub.s32 %v3910, %v3912
  %v3914 = vrot.slane %v3885, %v3913
  %v3917 = vsel %vm117, %v3907, 0.0
  %3918 = vadd.xlane.f32.xlu0 %v3917
  %v3919 = vpop.xlane.xlu0 %3918
  %v3920 = vsel %vm3827, %v3914, 0.0
  %3921 = vadd.xlane.f32.xlu0 %v3920
  %v3922 = vpop.xlane.xlu0 %3921
  %v3923 = vmul.f32 %v3919, %v3831
  %v3924 = vmul.f32 %v3922, %v3831
  %v3925 = vadd.f32 %v3923, 1e-05
  %v3926 = vadd.f32 %v3924, 1e-05
  %v3927 = vrsqrt.pop %v3925
  %v3928 = vrsqrt.pop %v3926
  %v3932 = vunpack.c.l.s4 269488144
  %v3933 = vunpack.c.0.s8 %v3932
  %v3934 = vlaneseq
  %v3935 = vshrl.u32 %v3934, 7
  %v3936 = vsub.s32 %v3933, %v3935
  %v3937 = vrot.slane %v3927, %v3936
  %v3939 = vunpack.c.l.s4 842150450
  %v3940 = vunpack.c.0.s8 %v3939
  %v3941 = vlaneseq
  %v3942 = vshrl.u32 %v3941, 7
  %v3943 = vsub.s32 %v3940, %v3942
  %v3944 = vrot.slane %v3927, %v3943
  %v3946 = vunpack.c.l.s4 1414812756
  %v3947 = vunpack.c.0.s8 %v3946
  %v3948 = vlaneseq
  %v3949 = vshrl.u32 %v3948, 7
  %v3950 = vsub.s32 %v3947, %v3949
  %v3951 = vrot.slane %v3927, %v3950
  %v3953 = vunpack.c.l.s4 1987475062
  %v3954 = vunpack.c.0.s8 %v3953
  %v3955 = vlaneseq
  %v3956 = vshrl.u32 %v3955, 7
  %v3957 = vsub.s32 %v3954, %v3956
  %v3958 = vrot.slane %v3927, %v3957
  %v3960 = vunpack.c.l.s4 269488144
  %v3961 = vunpack.c.0.s8 %v3960
  %v3962 = vlaneseq
  %v3963 = vshrl.u32 %v3962, 7
  %v3964 = vsub.s32 %v3961, %v3963
  %v3965 = vrot.slane %v3928, %v3964
  %v3971 = vmul.f32 %v3876, %v3937
  %v3972 = vmul.f32 %v3877, %v3944
  %v3973 = vmul.f32 %v3878, %v3951
  %v3974 = vmul.f32 %v3879, %v3958
  %v3975 = vmul.f32 %v3880, %v3965
  %v3976 = vld [vmem:[%s9] sm:$0x1]
  %v3978 = vlaneseq
  %v3979 = vshrl.u32 %v3978, 7
  %v3980 = vsub.s32 0, %v3979
  %v3981 = vrot.slane %v3976, %v3980
  %v3982 = vcombine.high %v3981, %v3981
  %v3984 = vunpack.c.l.s4 1983009808
  %v3985 = vunpack.c.0.s8 %v3984
  %v3986 = vlaneseq
  %v3987 = vshrl.u32 %v3986, 7
  %v3988 = vsub.s32 %v3985, %v3987
  %v3989 = vrot.slane %v3981, %v3988
  %v3991 = vunpack.c.l.s4 1983009808
  %v3992 = vunpack.c.0.s8 %v3991
  %v3993 = vlaneseq
  %v3994 = vshrl.u32 %v3993, 7
  %v3995 = vsub.s32 %v3992, %v3994
  %v3996 = vrot.slane %v3982, %v3995
  %v3997 = vcombine.high %v3989, %v3989
  %v3998 = vcombine.high %v3996, %v3996
  %v4003 = vmul.f32 %v3971, %v3989
  %v4004 = vmul.f32 %v3972, %v3997
  %v4005 = vmul.f32 %v3973, %v3996
  %v4006 = vmul.f32 %v3974, %v3998
  %v4007 = vmul.f32 %v3975, %v3989
  %v4008 = vld [vmem:[%s10] sm:$0x1]
  %v4010 = vlaneseq
  %v4011 = vshrl.u32 %v4010, 7
  %v4012 = vsub.s32 0, %v4011
  %v4013 = vrot.slane %v4008, %v4012
  %v4014 = vcombine.high %v4013, %v4013
  %v4016 = vunpack.c.l.s4 1983009808
  %v4017 = vunpack.c.0.s8 %v4016
  %v4018 = vlaneseq
  %v4019 = vshrl.u32 %v4018, 7
  %v4020 = vsub.s32 %v4017, %v4019
  %v4021 = vrot.slane %v4013, %v4020
  %v4023 = vunpack.c.l.s4 1983009808
  %v4024 = vunpack.c.0.s8 %v4023
  %v4025 = vlaneseq
  %v4026 = vshrl.u32 %v4025, 7
  %v4027 = vsub.s32 %v4024, %v4026
  %v4028 = vrot.slane %v4014, %v4027
  %v4029 = vcombine.high %v4021, %v4021
  %v4030 = vcombine.high %v4028, %v4028
  %v4035 = vadd.f32 %v4003, %v4021
  %v4036 = vadd.f32 %v4004, %v4029
  %v4037 = vadd.f32 %v4005, %v4028
  %v4038 = vadd.f32 %v4006, %v4030
  %v4039 = vadd.f32 %v4007, %v4021
  %v4045 = vcombine.low %v4035, %v4036
  %v4046 = vcombine.low %v4037, %v4038
  %v4048 = vunpack.c.l.s4 1983009808
  %v4049 = vunpack.c.0.s8 %v4048
  %v4050 = vlaneseq
  %v4051 = vshrl.u32 %v4050, 7
  %v4052 = vsub.s32 %v4049, %v4051
  %v4053 = vrot.slane %v4045, %v4052
  %v4055 = vunpack.c.l.s4 1983009808
  %v4056 = vunpack.c.0.s8 %v4055
  %v4057 = vlaneseq
  %v4058 = vshrl.u32 %v4057, 7
  %v4059 = vsub.s32 %v4056, %v4058
  %v4060 = vrot.slane %v4046, %v4059
  %v4061 = vcombine.low %v4053, %v4060
  %v4063 = vunpack.c.l.s4 1983009808
  %v4064 = vunpack.c.0.s8 %v4063
  %v4065 = vlaneseq
  %v4066 = vshrl.u32 %v4065, 7
  %v4067 = vsub.s32 %v4064, %v4066
  %v4068 = vrot.slane %v4039, %v4067
  %v4071 = vpack.c.bf16 %v4068, %v4061
  %v4072 = vld [vmem:[%s11] sm:$0xf]
  %v4073 = vld [vmem:[%s11 + $0x4] sm:$0xf]
  %v4074 = vld [vmem:[%s11 + $0x8] sm:$0xf]
  %v4075 = vld [vmem:[%s11 + $0xc] sm:$0xf]
  %v4076 = vld [vmem:[%s12] sm:$0x1]
  %v4078 = vlaneseq
  %v4079 = vshrl.u32 %v4078, 7
  %v4080 = vsub.s32 0, %v4079
  %v4081 = vrot.slane %v4076, %v4080
  %v4087 = vunpack.c.l.b16 %v4072
  %v4088 = vunpack.c.l.b16 %v4073
  %v4089 = vunpack.c.l.b16 %v4074
  %v4090 = vunpack.c.l.b16 %v4075
  %v4091 = vpack.c.b16 %v4088, %v4087
  %v4092 = vpack.c.b16 %v4090, %v4089
  %v4096 = vsel %vm117, %v4071, 0
  %4098 = vmatprep.subr.bf16.mxu0 0
  %4099 = vmatpush1.bf16.msra.mxu0 %v4091
  %4100 = vmatprep.subr.bf16.mxu0 0
  %4101 = vmatpush1.bf16.msra.mxu0 %v4092
  %4102 = vmatprep.subr.bf16.mxu0 0
  %4103 = vmatpush1.bf16.msra.mxu0 0
  %4104 = vmatprep.subr.bf16.mxu0 0
  %4105 = vmatpush1.bf16.msra.mxu0 0
  %4106 = vmatprep.subr.bf16.mxu0 0
  %4107 = vmatpush1.bf16.msra.mxu0 0
  %4108 = vmatprep.subr.bf16.mxu0 0
  %4109 = vmatpush1.bf16.msra.mxu0 0
  %4110 = vmatprep.subr.bf16.mxu0 0
  %4111 = vmatpush1.bf16.msra.mxu0 0
  %4112 = vmatprep.subr.bf16.mxu0 0
  %4113 = vmatpush1.bf16.msra.mxu0 0
  %4114 = vmatprep.subr.bf16.mxu0 0
  %4115 = vmatpush1.bf16.msra.mxu0 0
  %4116 = vmatprep.subr.bf16.mxu0 0
  %4117 = vmatpush1.bf16.msra.mxu0 0
  %4118 = vmatprep.subr.bf16.mxu0 0
  %4119 = vmatpush1.bf16.msra.mxu0 0
  %4120 = vmatprep.subr.bf16.mxu0 0
  %4121 = vmatpush1.bf16.msra.mxu0 0
  %4122 = vmatprep.subr.bf16.mxu0 0
  %4123 = vmatpush1.bf16.msra.mxu0 0
  %4124 = vmatprep.subr.bf16.mxu0 0
  %4125 = vmatpush1.bf16.msra.mxu0 0
  %4126 = vmatprep.subr.bf16.mxu0 0
  %4127 = vmatpush1.bf16.msra.mxu0 0
  %4128 = vmatprep.subr.bf16.mxu0 0
  %4129 = vmatpush1.bf16.msra.mxu0 0
  %4130 = vmatprep.mubr.bf16.mxu0 0
  %4131 = vmatmul.mubr.bf16.gmra.mrb[0].mxu0 %v4096
  %v4132 = vpop.f32.mrb[0].mxu0
  %v4133 = vadd.f32 %v4081, %v4132
  %v4134 = vpop.f32.mrb[0].mxu0
  %v4135 = vpop.f32.mrb[0].mxu0
  %v4136 = vadd.f32 %v4081, %v4135
  %v4137 = vpop.f32.mrb[0].mxu0
  %4138 = vdwg.mxu0
  %v4139 = vmax.f32 %v4133, 0.0
  %v4140 = vmax.f32 %v4136, 0.0
  %v4141 = vpack.c.bf16 %v4140, %v4139
  %v4142 = vld [vmem:[%s13] sm:$0xf]
  %v4143 = vld [vmem:[%s13 + $0x4] sm:$0xf]
  %v4144 = vld [vmem:[%s13 + $0x8] sm:$0xf]
  %v4145 = vld [vmem:[%s13 + $0xc] sm:$0xf]
  %v4146 = vld [vmem:[%s13 + $0x10] sm:$0xf]
  %v4147 = vld [vmem:[%s13 + $0x14] sm:$0xf]
  %v4148 = vld [vmem:[%s13 + $0x18] sm:$0xf]
  %v4149 = vld [vmem:[%s13 + $0x1c] sm:$0xf]
  %v4150 = vld [vmem:[%s14] sm:$0x1]
  %v4152 = vlaneseq
  %v4153 = vshrl.u32 %v4152, 7
  %v4154 = vsub.s32 0, %v4153
  %v4155 = vrot.slane %v4150, %v4154
  %v4165 = vunpack.c.l.b16 %v4142
  %v4166 = vunpack.c.l.b16 %v4143
  %v4167 = vunpack.c.l.b16 %v4144
  %v4168 = vunpack.c.l.b16 %v4145
  %v4169 = vunpack.c.l.b16 %v4146
  %v4170 = vunpack.c.l.b16 %v4147
  %v4171 = vunpack.c.l.b16 %v4148
  %v4172 = vunpack.c.l.b16 %v4149
  %v4173 = vpack.c.b16 %v4166, %v4165
  %v4174 = vpack.c.b16 %v4168, %v4167
  %v4175 = vpack.c.b16 %v4170, %v4169
  %v4176 = vpack.c.b16 %v4172, %v4171
  %vm4181 = vcmask 523264
  %v4183 = vsel %vm4181, %v4141, 0
  %4185 = vmatprep.subr.bf16.mxu0 0
  %4186 = vmatpush1.bf16.msra.mxu0 %v4173
  %4187 = vmatprep.subr.bf16.mxu0 0
  %4188 = vmatpush1.bf16.msra.mxu0 %v4174
  %4189 = vmatprep.subr.bf16.mxu0 0
  %4190 = vmatpush1.bf16.msra.mxu0 %v4175
  %4191 = vmatprep.subr.bf16.mxu0 0
  %4192 = vmatpush1.bf16.msra.mxu0 %v4176
  %4193 = vmatprep.subr.bf16.mxu0 0
  %4194 = vmatpush1.bf16.msra.mxu0 0
  %4195 = vmatprep.subr.bf16.mxu0 0
  %4196 = vmatpush1.bf16.msra.mxu0 0
  %4197 = vmatprep.subr.bf16.mxu0 0
  %4198 = vmatpush1.bf16.msra.mxu0 0
  %4199 = vmatprep.subr.bf16.mxu0 0
  %4200 = vmatpush1.bf16.msra.mxu0 0
  %4201 = vmatprep.subr.bf16.mxu0 0
  %4202 = vmatpush1.bf16.msra.mxu0 0
  %4203 = vmatprep.subr.bf16.mxu0 0
  %4204 = vmatpush1.bf16.msra.mxu0 0
  %4205 = vmatprep.subr.bf16.mxu0 0
  %4206 = vmatpush1.bf16.msra.mxu0 0
  %4207 = vmatprep.subr.bf16.mxu0 0
  %4208 = vmatpush1.bf16.msra.mxu0 0
  %4209 = vmatprep.subr.bf16.mxu0 0
  %4210 = vmatpush1.bf16.msra.mxu0 0
  %4211 = vmatprep.subr.bf16.mxu0 0
  %4212 = vmatpush1.bf16.msra.mxu0 0
  %4213 = vmatprep.subr.bf16.mxu0 0
  %4214 = vmatpush1.bf16.msra.mxu0 0
  %4215 = vmatprep.subr.bf16.mxu0 0
  %4216 = vmatpush1.bf16.msra.mxu0 0
  %4217 = vmatprep.mubr.bf16.mxu0 0
  %4218 = vmatmul.mubr.bf16.gmra.mrb[0].mxu0 %v4183
  %v4219 = vpop.f32.mrb[0].mxu0
  %v4220 = vadd.f32 %v4155, %v4219
  %v4221 = vpop.f32.mrb[0].mxu0
  %v4222 = vpop.f32.mrb[0].mxu0
  %v4223 = vadd.f32 %v4155, %v4222
  %v4224 = vpop.f32.mrb[0].mxu0
  %4225 = vdwg.mxu0
  %v4228 = vcombine.high %v4220, %v4220
  %v4230 = vunpack.c.l.s4 1983009808
  %v4231 = vunpack.c.0.s8 %v4230
  %v4232 = vlaneseq
  %v4233 = vshrl.u32 %v4232, 7
  %v4234 = vsub.s32 %v4231, %v4233
  %v4235 = vrot.slane %v4220, %v4234
  %v4237 = vunpack.c.l.s4 1983009808
  %v4238 = vunpack.c.0.s8 %v4237
  %v4239 = vlaneseq
  %v4240 = vshrl.u32 %v4239, 7
  %v4241 = vsub.s32 %v4238, %v4240
  %v4242 = vrot.slane %v4228, %v4241
  %v4243 = vcombine.high %v4235, %v4235
  %v4244 = vcombine.high %v4242, %v4242
  %v4246 = vunpack.c.l.s4 1983009808
  %v4247 = vunpack.c.0.s8 %v4246
  %v4248 = vlaneseq
  %v4249 = vshrl.u32 %v4248, 7
  %v4250 = vsub.s32 %v4247, %v4249
  %v4251 = vrot.slane %v4223, %v4250
  %v4257 = vadd.f32 %v4035, %v4235
  %v4258 = vadd.f32 %v4036, %v4243
  %v4259 = vadd.f32 %v4037, %v4242
  %v4260 = vadd.f32 %v4038, %v4244
  %v4261 = vadd.f32 %v4039, %v4251
  %v4267 = vcombine.low %v4257, %v4258
  %v4268 = vcombine.low %v4259, %v4260
  %v4270 = vunpack.c.l.s4 1983009808
  %v4271 = vunpack.c.0.s8 %v4270
  %v4272 = vlaneseq
  %v4273 = vshrl.u32 %v4272, 7
  %v4274 = vsub.s32 %v4271, %v4273
  %v4275 = vrot.slane %v4267, %v4274
  %v4277 = vunpack.c.l.s4 1983009808
  %v4278 = vunpack.c.0.s8 %v4277
  %v4279 = vlaneseq
  %v4280 = vshrl.u32 %v4279, 7
  %v4281 = vsub.s32 %v4278, %v4280
  %v4282 = vrot.slane %v4268, %v4281
  %v4283 = vcombine.low %v4275, %v4282
  %v4285 = vunpack.c.l.s4 1983009808
  %v4286 = vunpack.c.0.s8 %v4285
  %v4287 = vlaneseq
  %v4288 = vshrl.u32 %v4287, 7
  %v4289 = vsub.s32 %v4286, %v4288
  %v4290 = vrot.slane %v4261, %v4289
  %v4293 = vsel %vm117, %v4283, 0.0
  %4294 = vadd.xlane.f32.xlu0 %v4293
  %v4295 = vpop.xlane.xlu0 %4294
  %v4296 = vsel %vm3827, %v4290, 0.0
  %4297 = vadd.xlane.f32.xlu0 %v4296
  %v4298 = vpop.xlane.xlu0 %4297
  %v4299 = vmul.f32 %v4295, %v3831
  %v4300 = vmul.f32 %v4298, %v3831
  %v4304 = vunpack.c.l.s4 269488144
  %v4305 = vunpack.c.0.s8 %v4304
  %v4306 = vlaneseq
  %v4307 = vshrl.u32 %v4306, 7
  %v4308 = vsub.s32 %v4305, %v4307
  %v4309 = vrot.slane %v4299, %v4308
  %v4311 = vunpack.c.l.s4 842150450
  %v4312 = vunpack.c.0.s8 %v4311
  %v4313 = vlaneseq
  %v4314 = vshrl.u32 %v4313, 7
  %v4315 = vsub.s32 %v4312, %v4314
  %v4316 = vrot.slane %v4299, %v4315
  %v4318 = vunpack.c.l.s4 1414812756
  %v4319 = vunpack.c.0.s8 %v4318
  %v4320 = vlaneseq
  %v4321 = vshrl.u32 %v4320, 7
  %v4322 = vsub.s32 %v4319, %v4321
  %v4323 = vrot.slane %v4299, %v4322
  %v4325 = vunpack.c.l.s4 1987475062
  %v4326 = vunpack.c.0.s8 %v4325
  %v4327 = vlaneseq
  %v4328 = vshrl.u32 %v4327, 7
  %v4329 = vsub.s32 %v4326, %v4328
  %v4330 = vrot.slane %v4299, %v4329
  %v4332 = vunpack.c.l.s4 269488144
  %v4333 = vunpack.c.0.s8 %v4332
  %v4334 = vlaneseq
  %v4335 = vshrl.u32 %v4334, 7
  %v4336 = vsub.s32 %v4333, %v4335
  %v4337 = vrot.slane %v4300, %v4336
  %v4343 = vsub.f32 %v4257, %v4309
  %v4344 = vsub.f32 %v4258, %v4316
  %v4345 = vsub.f32 %v4259, %v4323
  %v4346 = vsub.f32 %v4260, %v4330
  %v4347 = vsub.f32 %v4261, %v4337
  %v4348 = vmul.f32 %v4343, %v4343
  %v4349 = vmul.f32 %v4344, %v4344
  %v4350 = vmul.f32 %v4345, %v4345
  %v4351 = vmul.f32 %v4346, %v4346
  %v4352 = vmul.f32 %v4347, %v4347
  %v4358 = vcombine.low %v4348, %v4349
  %v4359 = vcombine.low %v4350, %v4351
  %v4361 = vunpack.c.l.s4 1983009808
  %v4362 = vunpack.c.0.s8 %v4361
  %v4363 = vlaneseq
  %v4364 = vshrl.u32 %v4363, 7
  %v4365 = vsub.s32 %v4362, %v4364
  %v4366 = vrot.slane %v4358, %v4365
  %v4368 = vunpack.c.l.s4 1983009808
  %v4369 = vunpack.c.0.s8 %v4368
  %v4370 = vlaneseq
  %v4371 = vshrl.u32 %v4370, 7
  %v4372 = vsub.s32 %v4369, %v4371
  %v4373 = vrot.slane %v4359, %v4372
  %v4374 = vcombine.low %v4366, %v4373
  %v4376 = vunpack.c.l.s4 1983009808
  %v4377 = vunpack.c.0.s8 %v4376
  %v4378 = vlaneseq
  %v4379 = vshrl.u32 %v4378, 7
  %v4380 = vsub.s32 %v4377, %v4379
  %v4381 = vrot.slane %v4352, %v4380
  %v4384 = vsel %vm117, %v4374, 0.0
  %4385 = vadd.xlane.f32.xlu0 %v4384
  %v4386 = vpop.xlane.xlu0 %4385
  %v4387 = vsel %vm3827, %v4381, 0.0
  %4388 = vadd.xlane.f32.xlu0 %v4387
  %v4389 = vpop.xlane.xlu0 %4388
  %v4390 = vmul.f32 %v4386, %v3831
  %v4391 = vmul.f32 %v4389, %v3831
  %v4392 = vadd.f32 %v4390, 1e-05
  %v4393 = vadd.f32 %v4391, 1e-05
  %v4394 = vrsqrt.pop %v4392
  %v4395 = vrsqrt.pop %v4393
  %v4399 = vunpack.c.l.s4 269488144
  %v4400 = vunpack.c.0.s8 %v4399
  %v4401 = vlaneseq
  %v4402 = vshrl.u32 %v4401, 7
  %v4403 = vsub.s32 %v4400, %v4402
  %v4404 = vrot.slane %v4394, %v4403
  %v4406 = vunpack.c.l.s4 842150450
  %v4407 = vunpack.c.0.s8 %v4406
  %v4408 = vlaneseq
  %v4409 = vshrl.u32 %v4408, 7
  %v4410 = vsub.s32 %v4407, %v4409
  %v4411 = vrot.slane %v4394, %v4410
  %v4413 = vunpack.c.l.s4 1414812756
  %v4414 = vunpack.c.0.s8 %v4413
  %v4415 = vlaneseq
  %v4416 = vshrl.u32 %v4415, 7
  %v4417 = vsub.s32 %v4414, %v4416
  %v4418 = vrot.slane %v4394, %v4417
  %v4420 = vunpack.c.l.s4 1987475062
  %v4421 = vunpack.c.0.s8 %v4420
  %v4422 = vlaneseq
  %v4423 = vshrl.u32 %v4422, 7
  %v4424 = vsub.s32 %v4421, %v4423
  %v4425 = vrot.slane %v4394, %v4424
  %v4427 = vunpack.c.l.s4 269488144
  %v4428 = vunpack.c.0.s8 %v4427
  %v4429 = vlaneseq
  %v4430 = vshrl.u32 %v4429, 7
  %v4431 = vsub.s32 %v4428, %v4430
  %v4432 = vrot.slane %v4395, %v4431
  %v4438 = vmul.f32 %v4343, %v4404
  %v4439 = vmul.f32 %v4344, %v4411
  %v4440 = vmul.f32 %v4345, %v4418
  %v4441 = vmul.f32 %v4346, %v4425
  %v4442 = vmul.f32 %v4347, %v4432
  %v4443 = vld [vmem:[%s15] sm:$0x1]
  %v4445 = vlaneseq
  %v4446 = vshrl.u32 %v4445, 7
  %v4447 = vsub.s32 0, %v4446
  %v4448 = vrot.slane %v4443, %v4447
  %v4449 = vcombine.high %v4448, %v4448
  %v4451 = vunpack.c.l.s4 1983009808
  %v4452 = vunpack.c.0.s8 %v4451
  %v4453 = vlaneseq
  %v4454 = vshrl.u32 %v4453, 7
  %v4455 = vsub.s32 %v4452, %v4454
  %v4456 = vrot.slane %v4448, %v4455
  %v4458 = vunpack.c.l.s4 1983009808
  %v4459 = vunpack.c.0.s8 %v4458
  %v4460 = vlaneseq
  %v4461 = vshrl.u32 %v4460, 7
  %v4462 = vsub.s32 %v4459, %v4461
  %v4463 = vrot.slane %v4449, %v4462
  %v4464 = vcombine.high %v4456, %v4456
  %v4465 = vcombine.high %v4463, %v4463
  %v4470 = vmul.f32 %v4438, %v4456
  %v4471 = vmul.f32 %v4439, %v4464
  %v4472 = vmul.f32 %v4440, %v4463
  %v4473 = vmul.f32 %v4441, %v4465
  %v4474 = vmul.f32 %v4442, %v4456
  %v4475 = vld [vmem:[%s16] sm:$0x1]
  %v4477 = vlaneseq
  %v4478 = vshrl.u32 %v4477, 7
  %v4479 = vsub.s32 0, %v4478
  %v4480 = vrot.slane %v4475, %v4479
  %v4481 = vcombine.high %v4480, %v4480
  %v4483 = vunpack.c.l.s4 1983009808
  %v4484 = vunpack.c.0.s8 %v4483
  %v4485 = vlaneseq
  %v4486 = vshrl.u32 %v4485, 7
  %v4487 = vsub.s32 %v4484, %v4486
  %v4488 = vrot.slane %v4480, %v4487
  %v4490 = vunpack.c.l.s4 1983009808
  %v4491 = vunpack.c.0.s8 %v4490
  %v4492 = vlaneseq
  %v4493 = vshrl.u32 %v4492, 7
  %v4494 = vsub.s32 %v4491, %v4493
  %v4495 = vrot.slane %v4481, %v4494
  %v4496 = vcombine.high %v4488, %v4488
  %v4497 = vcombine.high %v4495, %v4495
  %v4502 = vadd.f32 %v4470, %v4488
  %v4503 = vadd.f32 %v4471, %v4496
  %v4504 = vadd.f32 %v4472, %v4495
  %v4505 = vadd.f32 %v4473, %v4497
  %v4506 = vadd.f32 %v4474, %v4488
  %4507 = vst.msk [vmem:[%s17] sm:$0x3] %vm3827, %v4502
  %4508 = vst.msk [vmem:[%s17 + $0x2] sm:$0x3] %vm3827, %v4503
  %4509 = vst.msk [vmem:[%s17 + $0x4] sm:$0x3] %vm3827, %v4504
  %4510 = vst.msk [vmem:[%s17 + $0x6] sm:$0x3] %vm3827, %v4505
  %4511 = vst.msk [vmem:[%s17 + $0x8] sm:$0x3] %vm3827, %v4506
  // Predicated region
  $region70: #{vit_forward.5} parent=0 // pred_check
    _
  $region71: #{vit_forward.5} parent=0 // pred_check_branch
    %4513 = sbr.rel (0) target = $region73
  $region72: #{vit_forward.5} parent=0 // pred_region
    _
  $region73: #{vit_forward.5} parent=0 // pred_fallthru
    _
  // Predicated region
  $region74: #{vit_forward.5} parent=0 // pred_check
    _
  $region75: #{vit_forward.5} parent=0 // pred_check_branch
    %4515 = sbr.rel (0) target = $region77
  $region76: #{vit_forward.5} parent=0 // pred_region
    _
  $region77: #{vit_forward.5} parent=0 // pred_fallthru
    _

</llo_original>
